<compile_context>
chip_gen: v5e
topology: v5e:2x2
jax: 0.10.0
libtpu: 0.0.40
codegen_flags: <defaults>
</compile_context>

<pallas_src>
import functools

import jax
import jax.numpy as jnp
from jax import lax
from jax.experimental import pallas as pl
from jax.experimental.pallas import tpu as pltpu


def _mgd_stage_kernel(s_ref, m_ref, t_ref, w1_ref, b1_ref, w2_ref, b2_ref,
                      out_ref, xin_ref, mid_ref, *, H, W, Cs, Ct):
    # Apply the random binary mask (broadcast over channels) and stage the
    # padded, masked input into VMEM scratch so the 9 conv taps below are
    # plain strided VMEM reads.
    xin_ref[...] = s_ref[...].astype(jnp.float32) * m_ref[...].astype(jnp.float32)

    w1 = w1_ref[...].astype(jnp.float32)          # (3, 3, Cs, Ct)
    b1 = b1_ref[...].astype(jnp.float32)          # (1, Ct)
    w2 = w2_ref[...].astype(jnp.float32)          # (3, 3, Ct, Ct)
    b2 = b2_ref[...].astype(jnp.float32)          # (1, Ct)

    # --- conv1 (3x3, pad=1) + bias + ReLU: 9 shifted matmuls on the MXU. ---
    acc1 = jnp.zeros((H * W, Ct), jnp.float32)
    for dy in range(3):
        for dx in range(3):
            patch = xin_ref[pl.ds(dy, H), pl.ds(dx, W), :].reshape(H * W, Cs)
            acc1 = acc1 + jnp.dot(patch, w1[dy, dx],
                                  preferred_element_type=jnp.float32)
    hidden = jnp.maximum(acc1 + b1, 0.0).reshape(H, W, Ct)

    # Stage the ReLU output into a zero-ringed VMEM scratch; the zero ring is
    # exactly Conv2d(padding=1)'s implicit zero padding of the intermediate.
    mid_ref[...] = jnp.zeros_like(mid_ref)
    mid_ref[pl.ds(1, H), pl.ds(1, W), :] = hidden

    # --- conv2 (3x3, pad=1) + bias. ---
    acc2 = jnp.zeros((H * W, Ct), jnp.float32)
    for dy in range(3):
        for dx in range(3):
            patch = mid_ref[pl.ds(dy, H), pl.ds(dx, W), :].reshape(H * W, Ct)
            acc2 = acc2 + jnp.dot(patch, w2[dy, dx],
                                  preferred_element_type=jnp.float32)
    new_fea = acc2 + b2                            # (H*W, Ct)

    # --- fused MSE(reduction='sum') partial for this image. ---
    t = t_ref[...].astype(jnp.float32).reshape(H * W, Ct)
    diff = new_fea - t
    partial = jnp.sum(diff * diff)
    # Lane-dense (8,128) output block (unmasked vst); wrapper reads [n, 0, 0].
    out_ref[...] = jnp.full((8, 128), partial, jnp.float32)


def mgd_stage_dis_loss(preds_s_nhwc, preds_t_nhwc, mask_nhw1, w1, b1, w2, b2):
    """get_dis_loss for one stage (inputs in NHWC, mask (N,H,W,1))."""
    N, H, W, Cs = preds_s_nhwc.shape
    Ct = preds_t_nhwc.shape[-1]

    # Layout plumbing in the wrapper: +1 zero ring so the kernel only does
    # shifted reads (no in-kernel pad op).
    s_pad = jnp.pad(preds_s_nhwc, ((0, 0), (1, 1), (1, 1), (0, 0)))
    m_pad = jnp.pad(mask_nhw1, ((0, 0), (1, 1), (1, 1), (0, 0)))
    b1_2d = b1.reshape(1, Ct).astype(jnp.float32)
    b2_2d = b2.reshape(1, Ct).astype(jnp.float32)

    kernel = functools.partial(_mgd_stage_kernel, H=H, W=W, Cs=Cs, Ct=Ct)

    flops = 2 * N * H * W * 9 * (Cs * Ct + Ct * Ct) + 5 * N * H * W * Ct
    bytes_accessed = 4 * (s_pad.size + m_pad.size + preds_t_nhwc.size
                          + w1.size + w2.size + b1.size + b2.size + N * 8 * 128)

    partials = pl.pallas_call(
        kernel,
        out_shape=jax.ShapeDtypeStruct((N, 8, 128), jnp.float32),
        grid_spec=pltpu.PrefetchScalarGridSpec(
            num_scalar_prefetch=0,
            grid=(N,),
            in_specs=[
                pl.BlockSpec((pl.Squeezed(), H + 2, W + 2, Cs),
                             lambda n: (n, 0, 0, 0)),
                pl.BlockSpec((pl.Squeezed(), H + 2, W + 2, 1),
                             lambda n: (n, 0, 0, 0)),
                pl.BlockSpec((pl.Squeezed(), H, W, Ct),
                             lambda n: (n, 0, 0, 0)),
                pl.BlockSpec((3, 3, Cs, Ct), lambda n: (0, 0, 0, 0)),
                pl.BlockSpec((1, Ct), lambda n: (0, 0)),
                pl.BlockSpec((3, 3, Ct, Ct), lambda n: (0, 0, 0, 0)),
                pl.BlockSpec((1, Ct), lambda n: (0, 0)),
            ],
            out_specs=pl.BlockSpec((pl.Squeezed(), 8, 128),
                                   lambda n: (n, 0, 0)),
            scratch_shapes=[
                pltpu.VMEM((H + 2, W + 2, Cs), jnp.float32),   # masked input
                pltpu.VMEM((H + 2, W + 2, Ct), jnp.float32),   # padded hidden
            ],
        ),
        compiler_params=pltpu.CompilerParams(
            dimension_semantics=("parallel",),   # independent images -> 2 TCs on v7x
        ),
        cost_estimate=pl.CostEstimate(
            flops=flops, transcendentals=0, bytes_accessed=bytes_accessed),
    )(s_pad, m_pad, preds_t_nhwc, w1, b1_2d, w2, b2_2d)

    # Tiny cross-image reduction (N values) done outside the kernel so the grid
    # axis stays parallel.
    return jnp.sum(partials[:, 0, 0]) / N


def mgd_loss_pallas(y_s, y_t, masks, params, alpha_mgd=2e-5, layer=None):
    """MGDLoss.forward: y_s / y_t / masks are per-stage lists (NHWC)."""
    assert len(y_s) == len(y_t) == len(masks)
    total = jnp.float32(0.0)
    for idx, (s, t, m) in enumerate(zip(y_s, y_t, masks)):
        if layer == 'outlayer':
            idx = -1
        w1, b1, w2, b2 = params[idx]
        total = total + mgd_stage_dis_loss(s, t, m, w1, b1, w2, b2) * alpha_mgd
    return total


# ------------------------- pure-JAX reference ------------------------------
def _conv3x3_ref(x, w, b):
    out = lax.conv_general_dilated(
        x, w, window_strides=(1, 1), padding=((1, 1), (1, 1)),
        dimension_numbers=('NHWC', 'HWIO', 'NHWC'),
        precision=jax.lax.Precision.HIGHEST)
    return out + b.reshape(1, 1, 1, -1)


def mgd_loss_reference(y_s, y_t, masks, params, alpha_mgd=2e-5, layer=None):
    total = jnp.float32(0.0)
    for idx, (s, t, m) in enumerate(zip(y_s, y_t, masks)):
        if layer == 'outlayer':
            idx = -1
        w1, b1, w2, b2 = params[idx]
        N = s.shape[0]
        masked = s * m
        h = jax.nn.relu(_conv3x3_ref(masked, w1, b1))
        new = _conv3x3_ref(h, w2, b2)
        total = total + (jnp.sum((new - t) ** 2) / N) * alpha_mgd
    return total


if __name__ == "__main__":
    key = jax.random.PRNGKey(0)
    alpha_mgd = 2e-5
    lambda_mgd = 0.65

    # Two distillation stages, YOLO-neck-like small shapes.
    channels_s = [4, 8]
    channels_t = [4, 8]
    spatial = [(16, 16), (8, 8)]
    N = 2

    # Per-stage generation weights (Conv3x3 -> ReLU -> Conv3x3), HWIO layout.
    params = []
    for i, (cs, ct) in enumerate(zip(channels_s, channels_t)):
        k = jax.random.fold_in(key, i)
        kw1, kb1, kw2, kb2 = jax.random.split(k, 4)
        s1 = 1.0 / (9 * cs) ** 0.5
        s2 = 1.0 / (9 * ct) ** 0.5
        w1 = jax.random.uniform(kw1, (3, 3, cs, ct), jnp.float32, -s1, s1)
        b1 = jax.random.uniform(kb1, (ct,), jnp.float32, -s1, s1)
        w2 = jax.random.uniform(kw2, (3, 3, ct, ct), jnp.float32, -s2, s2)
        b2 = jax.random.uniform(kb2, (ct,), jnp.float32, -s2, s2)
        params.append((w1, b1, w2, b2))

    # Student / teacher features (module interface is NCHW) + random masks.
    y_s_nhwc, y_t_nhwc, masks = [], [], []
    for i, (cs, ct) in enumerate(zip(channels_s, channels_t)):
        H, W = spatial[i]
        k = jax.random.fold_in(key, 100 + i)
        ks, kt, km = jax.random.split(k, 3)
        s_nchw = jax.random.normal(ks, (N, cs, H, W), jnp.float32)
        t_nchw = jax.random.normal(kt, (N, ct, H, W), jnp.float32)
        rnd = jax.random.uniform(km, (N, 1, H, W), jnp.float32)
        mat = jnp.where(rnd > 1.0 - lambda_mgd, 0.0, 1.0).astype(jnp.float32)
        # NCHW -> NHWC layout plumbing so channels land in the lane dim.
        y_s_nhwc.append(jnp.transpose(s_nchw, (0, 2, 3, 1)))
        y_t_nhwc.append(jnp.transpose(t_nchw, (0, 2, 3, 1)))
        masks.append(jnp.transpose(mat, (0, 2, 3, 1)))      # (N, H, W, 1)

    loss = mgd_loss_pallas(y_s_nhwc, y_t_nhwc, masks, params, alpha_mgd)
    loss = jax.block_until_ready(loss)

    ref = mgd_loss_reference(y_s_nhwc, y_t_nhwc, masks, params, alpha_mgd)
    ref = jax.block_until_ready(ref)

    # Loose tolerance covers MXU bf16-pass precision vs HIGHEST-precision XLA
    # conv; real bugs (padding/mask/bias/ReLU) are orders of magnitude larger.
    assert jnp.allclose(loss, ref, rtol=2e-2, atol=1e-8), (loss, ref)
    print("KERNEL_OK")
</pallas_src>

<mosaic_0001>
module attributes {stable_mosaic.version = 11 : i64} {
  func.func @_mgd_stage_kernel(%arg0: i32, %arg1: memref<1x18x18x4xf32, #tpu.memory_space<vmem>>, %arg2: memref<1x18x18x1xf32, #tpu.memory_space<vmem>>, %arg3: memref<1x16x16x4xf32, #tpu.memory_space<vmem>>, %arg4: memref<3x3x4x4xf32, #tpu.memory_space<vmem>>, %arg5: memref<1x4xf32, #tpu.memory_space<vmem>>, %arg6: memref<3x3x4x4xf32, #tpu.memory_space<vmem>>, %arg7: memref<1x4xf32, #tpu.memory_space<vmem>>, %arg8: memref<1x8x128xf32, #tpu.memory_space<vmem>>, %arg9: memref<18x18x4xf32, #tpu.memory_space<vmem>>, %arg10: memref<18x18x4xf32, #tpu.memory_space<vmem>>) attributes {dimension_semantics = [#tpu.dimension_semantics<parallel>], iteration_bounds = array<i64: 2>, scalar_prefetch = 0 : i64, scratch_operands = 2 : i64, tpu.core_type = #tpu.core_type<tc>, window_params = [{transform_indices = @transform_0, window_bounds = array<i64: 1, 18, 18, 4>}, {transform_indices = @transform_1, window_bounds = array<i64: 1, 18, 18, 1>}, {transform_indices = @transform_2, window_bounds = array<i64: 1, 16, 16, 4>}, {pipeline_mode = #tpu.pipeline_mode<synchronous>, transform_indices = @transform_3, window_bounds = array<i64: 3, 3, 4, 4>}, {pipeline_mode = #tpu.pipeline_mode<synchronous>, transform_indices = @transform_4, window_bounds = array<i64: 1, 4>}, {pipeline_mode = #tpu.pipeline_mode<synchronous>, transform_indices = @transform_5, window_bounds = array<i64: 3, 3, 4, 4>}, {pipeline_mode = #tpu.pipeline_mode<synchronous>, transform_indices = @transform_6, window_bounds = array<i64: 1, 4>}, {transform_indices = @transform_7, window_bounds = array<i64: 1, 8, 128>}]} {
    %c0 = arith.constant 0 : index
    %c0_0 = arith.constant 0 : index
    %c0_1 = arith.constant 0 : index
    %c0_2 = arith.constant 0 : index
    %0 = vector.load %arg1[%c0, %c0_0, %c0_1, %c0_2] : memref<1x18x18x4xf32, #tpu.memory_space<vmem>>, vector<1x18x18x4xf32>
    %1 = vector.shape_cast %0 : vector<1x18x18x4xf32> to vector<18x18x4xf32>
    %c0_3 = arith.constant 0 : index
    %c0_4 = arith.constant 0 : index
    %c0_5 = arith.constant 0 : index
    %c0_6 = arith.constant 0 : index
    %2 = vector.load %arg2[%c0_3, %c0_4, %c0_5, %c0_6] : memref<1x18x18x1xf32, #tpu.memory_space<vmem>>, vector<1x18x18x1xf32>
    %3 = vector.shape_cast %2 : vector<1x18x18x1xf32> to vector<18x18x1xf32>
    %4 = vector.broadcast %3 : vector<18x18x1xf32> to vector<18x18x4xf32>
    %5 = arith.mulf %1, %4 : vector<18x18x4xf32>
    %c0_7 = arith.constant 0 : index
    %c0_8 = arith.constant 0 : index
    %c0_9 = arith.constant 0 : index
    %6 = vector.load %arg9[%c0_7, %c0_8, %c0_9] : memref<18x18x4xf32, #tpu.memory_space<vmem>>, vector<18x18x4xf32>
    tpu.vector_store %arg9[%c0_7, %c0_8, %c0_9], %5 {strides = array<i32>} : memref<18x18x4xf32, #tpu.memory_space<vmem>>, vector<18x18x4xf32>,
    %c0_10 = arith.constant 0 : index
    %c0_11 = arith.constant 0 : index
    %c0_12 = arith.constant 0 : index
    %c0_13 = arith.constant 0 : index
    %7 = vector.load %arg4[%c0_10, %c0_11, %c0_12, %c0_13] : memref<3x3x4x4xf32, #tpu.memory_space<vmem>>, vector<3x3x4x4xf32>
    %c0_14 = arith.constant 0 : index
    %c0_15 = arith.constant 0 : index
    %8 = vector.load %arg5[%c0_14, %c0_15] : memref<1x4xf32, #tpu.memory_space<vmem>>, vector<1x4xf32>
    %c0_16 = arith.constant 0 : index
    %c0_17 = arith.constant 0 : index
    %c0_18 = arith.constant 0 : index
    %c0_19 = arith.constant 0 : index
    %9 = vector.load %arg6[%c0_16, %c0_17, %c0_18, %c0_19] : memref<3x3x4x4xf32, #tpu.memory_space<vmem>>, vector<3x3x4x4xf32>
    %c0_20 = arith.constant 0 : index
    %c0_21 = arith.constant 0 : index
    %10 = vector.load %arg7[%c0_20, %c0_21] : memref<1x4xf32, #tpu.memory_space<vmem>>, vector<1x4xf32>
    %cst = arith.constant 0.000000e+00 : f32
    %11 = vector.broadcast %cst : f32 to vector<256x4xf32>
    %c0_22 = arith.constant 0 : index
    %c0_23 = arith.constant 0 : index
    %c0_24 = arith.constant 0 : index
    %12 = vector.load %arg9[%c0_22, %c0_23, %c0_24] : memref<18x18x4xf32, #tpu.memory_space<vmem>>, vector<16x16x4xf32>
    %13 = vector.shape_cast %12 : vector<16x16x4xf32> to vector<256x4xf32>
    %14 = vector.extract_strided_slice %7 {offsets = [0, 0, 0, 0], sizes = [1, 1, 4, 4], strides = [1, 1, 1, 1]} : vector<3x3x4x4xf32> to vector<1x1x4x4xf32>
    %15 = vector.shape_cast %14 : vector<1x1x4x4xf32> to vector<4x4xf32>
    %cst_25 = arith.constant dense<0.000000e+00> : vector<256x4xf32>
    %16 = tpu.matmul %13, %15, %cst_25 {dimension_numbers = #tpu.dot_dimension_numbers<[1], [0], [0], [1], [0, 0, 1, 1], [], []>} : vector<256x4xf32>, vector<4x4xf32>, vector<256x4xf32> -> vector<256x4xf32>
    %17 = arith.addf %11, %16 : vector<256x4xf32>
    %c0_26 = arith.constant 0 : index
    %c1 = arith.constant 1 : index
    %c0_27 = arith.constant 0 : index
    %18 = vector.load %arg9[%c0_26, %c1, %c0_27] : memref<18x18x4xf32, #tpu.memory_space<vmem>>, vector<16x16x4xf32>
    %19 = vector.shape_cast %18 : vector<16x16x4xf32> to vector<256x4xf32>
    %20 = vector.extract_strided_slice %7 {offsets = [0, 1, 0, 0], sizes = [1, 1, 4, 4], strides = [1, 1, 1, 1]} : vector<3x3x4x4xf32> to vector<1x1x4x4xf32>
    %21 = vector.shape_cast %20 : vector<1x1x4x4xf32> to vector<4x4xf32>
    %cst_28 = arith.constant dense<0.000000e+00> : vector<256x4xf32>
    %22 = tpu.matmul %19, %21, %cst_28 {dimension_numbers = #tpu.dot_dimension_numbers<[1], [0], [0], [1], [0, 0, 1, 1], [], []>} : vector<256x4xf32>, vector<4x4xf32>, vector<256x4xf32> -> vector<256x4xf32>
    %23 = arith.addf %17, %22 : vector<256x4xf32>
    %c0_29 = arith.constant 0 : index
    %c2 = arith.constant 2 : index
    %c0_30 = arith.constant 0 : index
    %24 = vector.load %arg9[%c0_29, %c2, %c0_30] : memref<18x18x4xf32, #tpu.memory_space<vmem>>, vector<16x16x4xf32>
    %25 = vector.shape_cast %24 : vector<16x16x4xf32> to vector<256x4xf32>
    %26 = vector.extract_strided_slice %7 {offsets = [0, 2, 0, 0], sizes = [1, 1, 4, 4], strides = [1, 1, 1, 1]} : vector<3x3x4x4xf32> to vector<1x1x4x4xf32>
    %27 = vector.shape_cast %26 : vector<1x1x4x4xf32> to vector<4x4xf32>
    %cst_31 = arith.constant dense<0.000000e+00> : vector<256x4xf32>
    %28 = tpu.matmul %25, %27, %cst_31 {dimension_numbers = #tpu.dot_dimension_numbers<[1], [0], [0], [1], [0, 0, 1, 1], [], []>} : vector<256x4xf32>, vector<4x4xf32>, vector<256x4xf32> -> vector<256x4xf32>
    %29 = arith.addf %23, %28 : vector<256x4xf32>
    %c1_32 = arith.constant 1 : index
    %c0_33 = arith.constant 0 : index
    %c0_34 = arith.constant 0 : index
    %30 = vector.load %arg9[%c1_32, %c0_33, %c0_34] : memref<18x18x4xf32, #tpu.memory_space<vmem>>, vector<16x16x4xf32>
    %31 = vector.shape_cast %30 : vector<16x16x4xf32> to vector<256x4xf32>
    %32 = vector.extract_strided_slice %7 {offsets = [1, 0, 0, 0], sizes = [1, 1, 4, 4], strides = [1, 1, 1, 1]} : vector<3x3x4x4xf32> to vector<1x1x4x4xf32>
    %33 = vector.shape_cast %32 : vector<1x1x4x4xf32> to vector<4x4xf32>
    %cst_35 = arith.constant dense<0.000000e+00> : vector<256x4xf32>
    %34 = tpu.matmul %31, %33, %cst_35 {dimension_numbers = #tpu.dot_dimension_numbers<[1], [0], [0], [1], [0, 0, 1, 1], [], []>} : vector<256x4xf32>, vector<4x4xf32>, vector<256x4xf32> -> vector<256x4xf32>
    %35 = arith.addf %29, %34 : vector<256x4xf32>
    %c1_36 = arith.constant 1 : index
    %c1_37 = arith.constant 1 : index
    %c0_38 = arith.constant 0 : index
    %36 = vector.load %arg9[%c1_36, %c1_37, %c0_38] : memref<18x18x4xf32, #tpu.memory_space<vmem>>, vector<16x16x4xf32>
    %37 = vector.shape_cast %36 : vector<16x16x4xf32> to vector<256x4xf32>
    %38 = vector.extract_strided_slice %7 {offsets = [1, 1, 0, 0], sizes = [1, 1, 4, 4], strides = [1, 1, 1, 1]} : vector<3x3x4x4xf32> to vector<1x1x4x4xf32>
    %39 = vector.shape_cast %38 : vector<1x1x4x4xf32> to vector<4x4xf32>
    %cst_39 = arith.constant dense<0.000000e+00> : vector<256x4xf32>
    %40 = tpu.matmul %37, %39, %cst_39 {dimension_numbers = #tpu.dot_dimension_numbers<[1], [0], [0], [1], [0, 0, 1, 1], [], []>} : vector<256x4xf32>, vector<4x4xf32>, vector<256x4xf32> -> vector<256x4xf32>
    %41 = arith.addf %35, %40 : vector<256x4xf32>
    %c1_40 = arith.constant 1 : index
    %c2_41 = arith.constant 2 : index
    %c0_42 = arith.constant 0 : index
    %42 = vector.load %arg9[%c1_40, %c2_41, %c0_42] : memref<18x18x4xf32, #tpu.memory_space<vmem>>, vector<16x16x4xf32>
    %43 = vector.shape_cast %42 : vector<16x16x4xf32> to vector<256x4xf32>
    %44 = vector.extract_strided_slice %7 {offsets = [1, 2, 0, 0], sizes = [1, 1, 4, 4], strides = [1, 1, 1, 1]} : vector<3x3x4x4xf32> to vector<1x1x4x4xf32>
    %45 = vector.shape_cast %44 : vector<1x1x4x4xf32> to vector<4x4xf32>
    %cst_43 = arith.constant dense<0.000000e+00> : vector<256x4xf32>
    %46 = tpu.matmul %43, %45, %cst_43 {dimension_numbers = #tpu.dot_dimension_numbers<[1], [0], [0], [1], [0, 0, 1, 1], [], []>} : vector<256x4xf32>, vector<4x4xf32>, vector<256x4xf32> -> vector<256x4xf32>
    %47 = arith.addf %41, %46 : vector<256x4xf32>
    %c2_44 = arith.constant 2 : index
    %c0_45 = arith.constant 0 : index
    %c0_46 = arith.constant 0 : index
    %48 = vector.load %arg9[%c2_44, %c0_45, %c0_46] : memref<18x18x4xf32, #tpu.memory_space<vmem>>, vector<16x16x4xf32>
    %49 = vector.shape_cast %48 : vector<16x16x4xf32> to vector<256x4xf32>
    %50 = vector.extract_strided_slice %7 {offsets = [2, 0, 0, 0], sizes = [1, 1, 4, 4], strides = [1, 1, 1, 1]} : vector<3x3x4x4xf32> to vector<1x1x4x4xf32>
    %51 = vector.shape_cast %50 : vector<1x1x4x4xf32> to vector<4x4xf32>
    %cst_47 = arith.constant dense<0.000000e+00> : vector<256x4xf32>
    %52 = tpu.matmul %49, %51, %cst_47 {dimension_numbers = #tpu.dot_dimension_numbers<[1], [0], [0], [1], [0, 0, 1, 1], [], []>} : vector<256x4xf32>, vector<4x4xf32>, vector<256x4xf32> -> vector<256x4xf32>
    %53 = arith.addf %47, %52 : vector<256x4xf32>
    %c2_48 = arith.constant 2 : index
    %c1_49 = arith.constant 1 : index
    %c0_50 = arith.constant 0 : index
    %54 = vector.load %arg9[%c2_48, %c1_49, %c0_50] : memref<18x18x4xf32, #tpu.memory_space<vmem>>, vector<16x16x4xf32>
    %55 = vector.shape_cast %54 : vector<16x16x4xf32> to vector<256x4xf32>
    %56 = vector.extract_strided_slice %7 {offsets = [2, 1, 0, 0], sizes = [1, 1, 4, 4], strides = [1, 1, 1, 1]} : vector<3x3x4x4xf32> to vector<1x1x4x4xf32>
    %57 = vector.shape_cast %56 : vector<1x1x4x4xf32> to vector<4x4xf32>
    %cst_51 = arith.constant dense<0.000000e+00> : vector<256x4xf32>
    %58 = tpu.matmul %55, %57, %cst_51 {dimension_numbers = #tpu.dot_dimension_numbers<[1], [0], [0], [1], [0, 0, 1, 1], [], []>} : vector<256x4xf32>, vector<4x4xf32>, vector<256x4xf32> -> vector<256x4xf32>
    %59 = arith.addf %53, %58 : vector<256x4xf32>
    %c2_52 = arith.constant 2 : index
    %c2_53 = arith.constant 2 : index
    %c0_54 = arith.constant 0 : index
    %60 = vector.load %arg9[%c2_52, %c2_53, %c0_54] : memref<18x18x4xf32, #tpu.memory_space<vmem>>, vector<16x16x4xf32>
    %61 = vector.shape_cast %60 : vector<16x16x4xf32> to vector<256x4xf32>
    %62 = vector.extract_strided_slice %7 {offsets = [2, 2, 0, 0], sizes = [1, 1, 4, 4], strides = [1, 1, 1, 1]} : vector<3x3x4x4xf32> to vector<1x1x4x4xf32>
    %63 = vector.shape_cast %62 : vector<1x1x4x4xf32> to vector<4x4xf32>
    %cst_55 = arith.constant dense<0.000000e+00> : vector<256x4xf32>
    %64 = tpu.matmul %61, %63, %cst_55 {dimension_numbers = #tpu.dot_dimension_numbers<[1], [0], [0], [1], [0, 0, 1, 1], [], []>} : vector<256x4xf32>, vector<4x4xf32>, vector<256x4xf32> -> vector<256x4xf32>
    %65 = arith.addf %59, %64 : vector<256x4xf32>
    %66 = vector.broadcast %8 : vector<1x4xf32> to vector<256x4xf32>
    %67 = arith.addf %65, %66 : vector<256x4xf32>
    %cst_56 = arith.constant 0.000000e+00 : f32
    %68 = vector.broadcast %cst_56 : f32 to vector<256x4xf32>
    %69 = arith.maximumf %67, %68 : vector<256x4xf32>
    %70 = vector.shape_cast %69 : vector<256x4xf32> to vector<16x16x4xf32>
    %cst_57 = arith.constant 0.000000e+00 : f32
    %71 = vector.broadcast %cst_57 : f32 to vector<18x18x4xf32>
    %c0_58 = arith.constant 0 : index
    %c0_59 = arith.constant 0 : index
    %c0_60 = arith.constant 0 : index
    %72 = vector.load %arg10[%c0_58, %c0_59, %c0_60] : memref<18x18x4xf32, #tpu.memory_space<vmem>>, vector<18x18x4xf32>
    tpu.vector_store %arg10[%c0_58, %c0_59, %c0_60], %71 {strides = array<i32>} : memref<18x18x4xf32, #tpu.memory_space<vmem>>, vector<18x18x4xf32>,
    %c1_61 = arith.constant 1 : index
    %c1_62 = arith.constant 1 : index
    %c0_63 = arith.constant 0 : index
    %73 = vector.load %arg10[%c1_61, %c1_62, %c0_63] : memref<18x18x4xf32, #tpu.memory_space<vmem>>, vector<16x16x4xf32>
    tpu.vector_store %arg10[%c1_61, %c1_62, %c0_63], %70 {strides = array<i32>} : memref<18x18x4xf32, #tpu.memory_space<vmem>>, vector<16x16x4xf32>,
    %cst_64 = arith.constant 0.000000e+00 : f32
    %74 = vector.broadcast %cst_64 : f32 to vector<256x4xf32>
    %c0_65 = arith.constant 0 : index
    %c0_66 = arith.constant 0 : index
    %c0_67 = arith.constant 0 : index
    %75 = vector.load %arg10[%c0_65, %c0_66, %c0_67] : memref<18x18x4xf32, #tpu.memory_space<vmem>>, vector<16x16x4xf32>
    %76 = vector.shape_cast %75 : vector<16x16x4xf32> to vector<256x4xf32>
    %77 = vector.extract_strided_slice %9 {offsets = [0, 0, 0, 0], sizes = [1, 1, 4, 4], strides = [1, 1, 1, 1]} : vector<3x3x4x4xf32> to vector<1x1x4x4xf32>
    %78 = vector.shape_cast %77 : vector<1x1x4x4xf32> to vector<4x4xf32>
    %cst_68 = arith.constant dense<0.000000e+00> : vector<256x4xf32>
    %79 = tpu.matmul %76, %78, %cst_68 {dimension_numbers = #tpu.dot_dimension_numbers<[1], [0], [0], [1], [0, 0, 1, 1], [], []>} : vector<256x4xf32>, vector<4x4xf32>, vector<256x4xf32> -> vector<256x4xf32>
    %80 = arith.addf %74, %79 : vector<256x4xf32>
    %c0_69 = arith.constant 0 : index
    %c1_70 = arith.constant 1 : index
    %c0_71 = arith.constant 0 : index
    %81 = vector.load %arg10[%c0_69, %c1_70, %c0_71] : memref<18x18x4xf32, #tpu.memory_space<vmem>>, vector<16x16x4xf32>
    %82 = vector.shape_cast %81 : vector<16x16x4xf32> to vector<256x4xf32>
    %83 = vector.extract_strided_slice %9 {offsets = [0, 1, 0, 0], sizes = [1, 1, 4, 4], strides = [1, 1, 1, 1]} : vector<3x3x4x4xf32> to vector<1x1x4x4xf32>
    %84 = vector.shape_cast %83 : vector<1x1x4x4xf32> to vector<4x4xf32>
    %cst_72 = arith.constant dense<0.000000e+00> : vector<256x4xf32>
    %85 = tpu.matmul %82, %84, %cst_72 {dimension_numbers = #tpu.dot_dimension_numbers<[1], [0], [0], [1], [0, 0, 1, 1], [], []>} : vector<256x4xf32>, vector<4x4xf32>, vector<256x4xf32> -> vector<256x4xf32>
    %86 = arith.addf %80, %85 : vector<256x4xf32>
    %c0_73 = arith.constant 0 : index
    %c2_74 = arith.constant 2 : index
    %c0_75 = arith.constant 0 : index
    %87 = vector.load %arg10[%c0_73, %c2_74, %c0_75] : memref<18x18x4xf32, #tpu.memory_space<vmem>>, vector<16x16x4xf32>
    %88 = vector.shape_cast %87 : vector<16x16x4xf32> to vector<256x4xf32>
    %89 = vector.extract_strided_slice %9 {offsets = [0, 2, 0, 0], sizes = [1, 1, 4, 4], strides = [1, 1, 1, 1]} : vector<3x3x4x4xf32> to vector<1x1x4x4xf32>
    %90 = vector.shape_cast %89 : vector<1x1x4x4xf32> to vector<4x4xf32>
    %cst_76 = arith.constant dense<0.000000e+00> : vector<256x4xf32>
    %91 = tpu.matmul %88, %90, %cst_76 {dimension_numbers = #tpu.dot_dimension_numbers<[1], [0], [0], [1], [0, 0, 1, 1], [], []>} : vector<256x4xf32>, vector<4x4xf32>, vector<256x4xf32> -> vector<256x4xf32>
    %92 = arith.addf %86, %91 : vector<256x4xf32>
    %c1_77 = arith.constant 1 : index
    %c0_78 = arith.constant 0 : index
    %c0_79 = arith.constant 0 : index
    %93 = vector.load %arg10[%c1_77, %c0_78, %c0_79] : memref<18x18x4xf32, #tpu.memory_space<vmem>>, vector<16x16x4xf32>
    %94 = vector.shape_cast %93 : vector<16x16x4xf32> to vector<256x4xf32>
    %95 = vector.extract_strided_slice %9 {offsets = [1, 0, 0, 0], sizes = [1, 1, 4, 4], strides = [1, 1, 1, 1]} : vector<3x3x4x4xf32> to vector<1x1x4x4xf32>
    %96 = vector.shape_cast %95 : vector<1x1x4x4xf32> to vector<4x4xf32>
    %cst_80 = arith.constant dense<0.000000e+00> : vector<256x4xf32>
    %97 = tpu.matmul %94, %96, %cst_80 {dimension_numbers = #tpu.dot_dimension_numbers<[1], [0], [0], [1], [0, 0, 1, 1], [], []>} : vector<256x4xf32>, vector<4x4xf32>, vector<256x4xf32> -> vector<256x4xf32>
    %98 = arith.addf %92, %97 : vector<256x4xf32>
    %c1_81 = arith.constant 1 : index
    %c1_82 = arith.constant 1 : index
    %c0_83 = arith.constant 0 : index
    %99 = vector.load %arg10[%c1_81, %c1_82, %c0_83] : memref<18x18x4xf32, #tpu.memory_space<vmem>>, vector<16x16x4xf32>
    %100 = vector.shape_cast %99 : vector<16x16x4xf32> to vector<256x4xf32>
    %101 = vector.extract_strided_slice %9 {offsets = [1, 1, 0, 0], sizes = [1, 1, 4, 4], strides = [1, 1, 1, 1]} : vector<3x3x4x4xf32> to vector<1x1x4x4xf32>
    %102 = vector.shape_cast %101 : vector<1x1x4x4xf32> to vector<4x4xf32>
    %cst_84 = arith.constant dense<0.000000e+00> : vector<256x4xf32>
    %103 = tpu.matmul %100, %102, %cst_84 {dimension_numbers = #tpu.dot_dimension_numbers<[1], [0], [0], [1], [0, 0, 1, 1], [], []>} : vector<256x4xf32>, vector<4x4xf32>, vector<256x4xf32> -> vector<256x4xf32>
    %104 = arith.addf %98, %103 : vector<256x4xf32>
    %c1_85 = arith.constant 1 : index
    %c2_86 = arith.constant 2 : index
    %c0_87 = arith.constant 0 : index
    %105 = vector.load %arg10[%c1_85, %c2_86, %c0_87] : memref<18x18x4xf32, #tpu.memory_space<vmem>>, vector<16x16x4xf32>
    %106 = vector.shape_cast %105 : vector<16x16x4xf32> to vector<256x4xf32>
    %107 = vector.extract_strided_slice %9 {offsets = [1, 2, 0, 0], sizes = [1, 1, 4, 4], strides = [1, 1, 1, 1]} : vector<3x3x4x4xf32> to vector<1x1x4x4xf32>
    %108 = vector.shape_cast %107 : vector<1x1x4x4xf32> to vector<4x4xf32>
    %cst_88 = arith.constant dense<0.000000e+00> : vector<256x4xf32>
    %109 = tpu.matmul %106, %108, %cst_88 {dimension_numbers = #tpu.dot_dimension_numbers<[1], [0], [0], [1], [0, 0, 1, 1], [], []>} : vector<256x4xf32>, vector<4x4xf32>, vector<256x4xf32> -> vector<256x4xf32>
    %110 = arith.addf %104, %109 : vector<256x4xf32>
    %c2_89 = arith.constant 2 : index
    %c0_90 = arith.constant 0 : index
    %c0_91 = arith.constant 0 : index
    %111 = vector.load %arg10[%c2_89, %c0_90, %c0_91] : memref<18x18x4xf32, #tpu.memory_space<vmem>>, vector<16x16x4xf32>
    %112 = vector.shape_cast %111 : vector<16x16x4xf32> to vector<256x4xf32>
    %113 = vector.extract_strided_slice %9 {offsets = [2, 0, 0, 0], sizes = [1, 1, 4, 4], strides = [1, 1, 1, 1]} : vector<3x3x4x4xf32> to vector<1x1x4x4xf32>
    %114 = vector.shape_cast %113 : vector<1x1x4x4xf32> to vector<4x4xf32>
    %cst_92 = arith.constant dense<0.000000e+00> : vector<256x4xf32>
    %115 = tpu.matmul %112, %114, %cst_92 {dimension_numbers = #tpu.dot_dimension_numbers<[1], [0], [0], [1], [0, 0, 1, 1], [], []>} : vector<256x4xf32>, vector<4x4xf32>, vector<256x4xf32> -> vector<256x4xf32>
    %116 = arith.addf %110, %115 : vector<256x4xf32>
    %c2_93 = arith.constant 2 : index
    %c1_94 = arith.constant 1 : index
    %c0_95 = arith.constant 0 : index
    %117 = vector.load %arg10[%c2_93, %c1_94, %c0_95] : memref<18x18x4xf32, #tpu.memory_space<vmem>>, vector<16x16x4xf32>
    %118 = vector.shape_cast %117 : vector<16x16x4xf32> to vector<256x4xf32>
    %119 = vector.extract_strided_slice %9 {offsets = [2, 1, 0, 0], sizes = [1, 1, 4, 4], strides = [1, 1, 1, 1]} : vector<3x3x4x4xf32> to vector<1x1x4x4xf32>
    %120 = vector.shape_cast %119 : vector<1x1x4x4xf32> to vector<4x4xf32>
    %cst_96 = arith.constant dense<0.000000e+00> : vector<256x4xf32>
    %121 = tpu.matmul %118, %120, %cst_96 {dimension_numbers = #tpu.dot_dimension_numbers<[1], [0], [0], [1], [0, 0, 1, 1], [], []>} : vector<256x4xf32>, vector<4x4xf32>, vector<256x4xf32> -> vector<256x4xf32>
    %122 = arith.addf %116, %121 : vector<256x4xf32>
    %c2_97 = arith.constant 2 : index
    %c2_98 = arith.constant 2 : index
    %c0_99 = arith.constant 0 : index
    %123 = vector.load %arg10[%c2_97, %c2_98, %c0_99] : memref<18x18x4xf32, #tpu.memory_space<vmem>>, vector<16x16x4xf32>
    %124 = vector.shape_cast %123 : vector<16x16x4xf32> to vector<256x4xf32>
    %125 = vector.extract_strided_slice %9 {offsets = [2, 2, 0, 0], sizes = [1, 1, 4, 4], strides = [1, 1, 1, 1]} : vector<3x3x4x4xf32> to vector<1x1x4x4xf32>
    %126 = vector.shape_cast %125 : vector<1x1x4x4xf32> to vector<4x4xf32>
    %cst_100 = arith.constant dense<0.000000e+00> : vector<256x4xf32>
    %127 = tpu.matmul %124, %126, %cst_100 {dimension_numbers = #tpu.dot_dimension_numbers<[1], [0], [0], [1], [0, 0, 1, 1], [], []>} : vector<256x4xf32>, vector<4x4xf32>, vector<256x4xf32> -> vector<256x4xf32>
    %128 = arith.addf %122, %127 : vector<256x4xf32>
    %129 = vector.broadcast %10 : vector<1x4xf32> to vector<256x4xf32>
    %130 = arith.addf %128, %129 : vector<256x4xf32>
    %c0_101 = arith.constant 0 : index
    %c0_102 = arith.constant 0 : index
    %c0_103 = arith.constant 0 : index
    %c0_104 = arith.constant 0 : index
    %131 = vector.load %arg3[%c0_101, %c0_102, %c0_103, %c0_104] : memref<1x16x16x4xf32, #tpu.memory_space<vmem>>, vector<1x16x16x4xf32>
    %132 = vector.shape_cast %131 : vector<1x16x16x4xf32> to vector<16x16x4xf32>
    %133 = vector.shape_cast %132 : vector<16x16x4xf32> to vector<256x4xf32>
    %134 = arith.subf %130, %133 : vector<256x4xf32>
    %135 = arith.mulf %134, %134 : vector<256x4xf32>
    %136 = vector.shape_cast %135 : vector<256x4xf32> to vector<1x256x4xf32>
    %cst_105 = arith.constant dense<0.000000e+00> : vector<1xf32>
    %137 = vector.multi_reduction <add>, %136, %cst_105 [1, 2] : vector<1x256x4xf32> to vector<1xf32>
    %138 = vector.shape_cast %137 : vector<1xf32> to vector<1x1x1xf32>
    %139 = vector.extract %138[0, 0, 0] : f32 from vector<1x1x1xf32>
    %140 = vector.broadcast %139 : f32 to vector<8x128xf32>
    %c0_106 = arith.constant 0 : index
    %c0_107 = arith.constant 0 : index
    %c0_108 = arith.constant 0 : index
    %141 = vector.load %arg8[%c0_106, %c0_107, %c0_108] : memref<1x8x128xf32, #tpu.memory_space<vmem>>, vector<1x8x128xf32>
    %142 = vector.shape_cast %141 : vector<1x8x128xf32> to vector<8x128xf32>
    %143 = vector.shape_cast %140 : vector<8x128xf32> to vector<1x8x128xf32>
    tpu.vector_store %arg8[%c0_106, %c0_107, %c0_108], %143 {strides = array<i32>} : memref<1x8x128xf32, #tpu.memory_space<vmem>>, vector<1x8x128xf32>,
    return
  }
  func.func @transform_0(%arg0: i32) -> (i32, i32, i32, i32) {
    %c0_i32 = arith.constant 0 : i32
    %c0_i32_0 = arith.constant 0 : i32
    %c0_i32_1 = arith.constant 0 : i32
    %c0_i32_2 = arith.constant 0 : i32
    return %arg0, %c0_i32, %c0_i32_0, %c0_i32_1 : i32, i32, i32, i32
  }
  func.func @transform_1(%arg0: i32) -> (i32, i32, i32, i32) {
    %c0_i32 = arith.constant 0 : i32
    %c0_i32_0 = arith.constant 0 : i32
    %c0_i32_1 = arith.constant 0 : i32
    %c0_i32_2 = arith.constant 0 : i32
    return %arg0, %c0_i32, %c0_i32_0, %c0_i32_1 : i32, i32, i32, i32
  }
  func.func @transform_2(%arg0: i32) -> (i32, i32, i32, i32) {
    %c0_i32 = arith.constant 0 : i32
    %c0_i32_0 = arith.constant 0 : i32
    %c0_i32_1 = arith.constant 0 : i32
    %c0_i32_2 = arith.constant 0 : i32
    return %arg0, %c0_i32, %c0_i32_0, %c0_i32_1 : i32, i32, i32, i32
  }
  func.func @transform_3(%arg0: i32) -> (i32, i32, i32, i32) {
    %c0_i32 = arith.constant 0 : i32
    %c0_i32_0 = arith.constant 0 : i32
    %c0_i32_1 = arith.constant 0 : i32
    %c0_i32_2 = arith.constant 0 : i32
    %c0_i32_3 = arith.constant 0 : i32
    return %c0_i32, %c0_i32_0, %c0_i32_1, %c0_i32_2 : i32, i32, i32, i32
  }
  func.func @transform_4(%arg0: i32) -> (i32, i32) {
    %c0_i32 = arith.constant 0 : i32
    %c0_i32_0 = arith.constant 0 : i32
    %c0_i32_1 = arith.constant 0 : i32
    return %c0_i32, %c0_i32_0 : i32, i32
  }
  func.func @transform_5(%arg0: i32) -> (i32, i32, i32, i32) {
    %c0_i32 = arith.constant 0 : i32
    %c0_i32_0 = arith.constant 0 : i32
    %c0_i32_1 = arith.constant 0 : i32
    %c0_i32_2 = arith.constant 0 : i32
    %c0_i32_3 = arith.constant 0 : i32
    return %c0_i32, %c0_i32_0, %c0_i32_1, %c0_i32_2 : i32, i32, i32, i32
  }
  func.func @transform_6(%arg0: i32) -> (i32, i32) {
    %c0_i32 = arith.constant 0 : i32
    %c0_i32_0 = arith.constant 0 : i32
    %c0_i32_1 = arith.constant 0 : i32
    return %c0_i32, %c0_i32_0 : i32, i32
  }
  func.func @transform_7(%arg0: i32) -> (i32, i32, i32) {
    %c0_i32 = arith.constant 0 : i32
    %c0_i32_0 = arith.constant 0 : i32
    %c0_i32_1 = arith.constant 0 : i32
    return %arg0, %c0_i32, %c0_i32_0 : i32, i32, i32
  }
}

</mosaic_0001>

<llo_original>
// kernel: tpu_custom_call.1
$region0: #{tpu_custom_call.1}
  #allocation0 [shape = 'u32[]', space=smem, size = 0x4, offset = 0x4, fixed_abs, tag = 'smem constant byte address 0x4 - core index']
  #allocation1 [shape = 'u32[72,128]{1,0:T(1,128)}', space=vmem, size = 0x9000, scoped, tag = 'internal scratch']
  #allocation2 [shape = 'f32[18,18,4]{2,1,0:T(8,128)}', space=vmem, size = 0x36000, scoped, tag = 'scratch operand']
  #allocation3 [shape = 'f32[18,18,4]{2,1,0:T(8,128)}', space=vmem, size = 0x36000, scoped, tag = 'scratch operand']
  %s0 = inlined_call_operand.vmem [shape: f32[2,18,18,4], index: 0, kind: input, shape index: {}]
  %s1 = inlined_call_operand.vmem [shape: f32[2,18,18,1], index: 1, kind: input, shape index: {}]
  %s2 = inlined_call_operand.vmem [shape: f32[2,16,16,4], index: 2, kind: input, shape index: {}]
  %s3 = inlined_call_operand.vmem [shape: f32[3,3,4,4], index: 3, kind: input, shape index: {}]
  %s4 = inlined_call_operand.vmem [shape: f32[1,4], index: 4, kind: input, shape index: {}]
  %s5 = inlined_call_operand.vmem [shape: f32[3,3,4,4], index: 5, kind: input, shape index: {}]
  %s6 = inlined_call_operand.vmem [shape: f32[1,4], index: 6, kind: input, shape index: {}]
  %s7 = inlined_call_operand.hbm [shape: f32[2,8,128], index: 7, kind: output, shape index: {}]
  %s8 = sld [smem:[#allocation0]]
  $region61: #{tpu_custom_call.1} parent=0
    _
  %s10 = ssub.s32 1, %s8
  %s11 = scalar_select 0, %s10, %s8
  $region1: #{tpu_custom_call.1} parent=0
    #allocation4 [shape = 'u8[8192]{0}', space=vmem, size = 0x2000, scoped, tag = 'output window, operand 0']
    #allocation5 [shape = 's32[2]{0}', space=sflag, size = 0x8, scoped, tag = 'scoped memory for tpu_custom_call.1']
    %12 = vsyncpa [#allocation5], 0
    %s13 = scalar_lea.sflag [#allocation5], 1
    %14 = vsyncpa %s13, 0
    loop: start=0, step=1, limit=4
    $region2: #{tpu_custom_call.1} parent=1 // loop_pre_header
      _
    $region3: #{tpu_custom_call.1} parent=1 // loop_header
      %s16 = sphi 0, %s20
      %p17 = scmp.ge.s32.totalorder %s16, 4
      %s26 = sphi 0, %s28
      %s29 = sphi 0, %s26
      %s30 = sphi 0, %s29
      %s46 = sphi 0, %s30
      %s52 = sphi 0, %s54
      %s55 = sphi 0, %s52
      %s56 = sphi 0, %s55
      %s72 = sphi 0, %s56
      %s78 = sphi 0, %s80
      %s81 = sphi 0, %s78
      %s82 = sphi 0, %s81
      %s98 = sphi 0, %s82
      %s102 = sphi 0, %s102
      %s104 = sphi 0, %s102
      %s105 = sphi 0, %s104
      %s119 = sphi 0, %s105
      %s123 = sphi 0, %s123
      %s125 = sphi 0, %s123
      %s126 = sphi 0, %s125
      %s140 = sphi 0, %s126
      %s144 = sphi 0, %s144
      %s146 = sphi 0, %s144
      %s147 = sphi 0, %s146
      %s161 = sphi 0, %s147
      %s165 = sphi 0, %s165
      %s167 = sphi 0, %s165
      %s168 = sphi 0, %s167
      %s182 = sphi 0, %s168
      %s188 = sphi 0, %s190
      %s191 = sphi 0, %s188
      %s192 = sphi 0, %s191
      %s208 = sphi 0, %s192
    $region4: #{tpu_custom_call.1} parent=1 // loop_header_branch
      %19 = sbr.rel (%p17) target = $region8
    $region5: #{tpu_custom_call.1} parent=1 // loop_body
      %s21 = ssub.s32 %s16, 1
      %s22 = ssub.s32 %s16, 2
      %s23 = sadd.s32 %s16, 1
      %s24 = ssub.s32 %s16, %s23
      %p25 = scmp.eq.s32.totalorder %s24, 0
      %s27 = sadd.s32 %s26, 1
      %s28 = scalar_select %p25, %s26, %s27
      %p31 = pneg %p25
      %p32 = scmp.eq.s32.totalorder %s16, 1
      %p33 = por %p31, %p32
      %p34 = scmp.ne.s32.totalorder %s26, %s29
      %p35 = scmp.eq.s32.totalorder %s16, 0
      %p36 = por %p34, %p35
      %p37 = scmp.ne.s32.totalorder %s26, %s29
      %p38 = scmp.eq.s32.totalorder %s21, 1
      %p39 = por %p37, %p38
      %p40 = scmp.ne.s32.totalorder %s29, %s30
      %p41 = scmp.eq.s32.totalorder %s21, 0
      %p42 = por %p40, %p41
      %p43 = scmp.ne.s32.totalorder %s29, %s30
      %p44 = scmp.eq.s32.totalorder %s22, 1
      %p45 = por %p43, %p44
      %p47 = scmp.ne.s32.totalorder %s30, %s46
      %p48 = scmp.eq.s32.totalorder %s22, 0
      %p49 = por %p47, %p48
      %s50 = ssub.s32 %s16, %s23
      %p51 = scmp.eq.s32.totalorder %s50, 0
      %s53 = sadd.s32 %s52, 1
      %s54 = scalar_select %p51, %s52, %s53
      %p57 = pneg %p51
      %p58 = scmp.eq.s32.totalorder %s16, 1
      %p59 = por %p57, %p58
      %p60 = scmp.ne.s32.totalorder %s52, %s55
      %p61 = scmp.eq.s32.totalorder %s16, 0
      %p62 = por %p60, %p61
      %p63 = scmp.ne.s32.totalorder %s52, %s55
      %p64 = scmp.eq.s32.totalorder %s21, 1
      %p65 = por %p63, %p64
      %p66 = scmp.ne.s32.totalorder %s55, %s56
      %p67 = scmp.eq.s32.totalorder %s21, 0
      %p68 = por %p66, %p67
      %p69 = scmp.ne.s32.totalorder %s55, %s56
      %p70 = scmp.eq.s32.totalorder %s22, 1
      %p71 = por %p69, %p70
      %p73 = scmp.ne.s32.totalorder %s56, %s72
      %p74 = scmp.eq.s32.totalorder %s22, 0
      %p75 = por %p73, %p74
      %s76 = ssub.s32 %s16, %s23
      %p77 = scmp.eq.s32.totalorder %s76, 0
      %s79 = sadd.s32 %s78, 1
      %s80 = scalar_select %p77, %s78, %s79
      %p83 = pneg %p77
      %p84 = scmp.eq.s32.totalorder %s16, 1
      %p85 = por %p83, %p84
      %p86 = scmp.ne.s32.totalorder %s78, %s81
      %p87 = scmp.eq.s32.totalorder %s16, 0
      %p88 = por %p86, %p87
      %p89 = scmp.ne.s32.totalorder %s78, %s81
      %p90 = scmp.eq.s32.totalorder %s21, 1
      %p91 = por %p89, %p90
      %p92 = scmp.ne.s32.totalorder %s81, %s82
      %p93 = scmp.eq.s32.totalorder %s21, 0
      %p94 = por %p92, %p93
      %p95 = scmp.ne.s32.totalorder %s81, %s82
      %p96 = scmp.eq.s32.totalorder %s22, 1
      %p97 = por %p95, %p96
      %p99 = scmp.ne.s32.totalorder %s82, %s98
      %p100 = scmp.eq.s32.totalorder %s22, 0
      %p101 = por %p99, %p100
      %s103 = sadd.s32 %s102, 1
      %p106 = scmp.eq.s32.totalorder %s16, 1
      %p107 = scmp.ne.s32.totalorder %s102, %s104
      %p108 = scmp.eq.s32.totalorder %s16, 0
      %p109 = por %p107, %p108
      %p110 = scmp.ne.s32.totalorder %s102, %s104
      %p111 = scmp.eq.s32.totalorder %s21, 1
      %p112 = por %p110, %p111
      %p113 = scmp.ne.s32.totalorder %s104, %s105
      %p114 = scmp.eq.s32.totalorder %s21, 0
      %p115 = por %p113, %p114
      %p116 = scmp.ne.s32.totalorder %s104, %s105
      %p117 = scmp.eq.s32.totalorder %s22, 1
      %p118 = por %p116, %p117
      %p120 = scmp.ne.s32.totalorder %s105, %s119
      %p121 = scmp.eq.s32.totalorder %s22, 0
      %p122 = por %p120, %p121
      %s124 = sadd.s32 %s123, 1
      %p127 = scmp.eq.s32.totalorder %s16, 1
      %p128 = scmp.ne.s32.totalorder %s123, %s125
      %p129 = scmp.eq.s32.totalorder %s16, 0
      %p130 = por %p128, %p129
      %p131 = scmp.ne.s32.totalorder %s123, %s125
      %p132 = scmp.eq.s32.totalorder %s21, 1
      %p133 = por %p131, %p132
      %p134 = scmp.ne.s32.totalorder %s125, %s126
      %p135 = scmp.eq.s32.totalorder %s21, 0
      %p136 = por %p134, %p135
      %p137 = scmp.ne.s32.totalorder %s125, %s126
      %p138 = scmp.eq.s32.totalorder %s22, 1
      %p139 = por %p137, %p138
      %p141 = scmp.ne.s32.totalorder %s126, %s140
      %p142 = scmp.eq.s32.totalorder %s22, 0
      %p143 = por %p141, %p142
      %s145 = sadd.s32 %s144, 1
      %p148 = scmp.eq.s32.totalorder %s16, 1
      %p149 = scmp.ne.s32.totalorder %s144, %s146
      %p150 = scmp.eq.s32.totalorder %s16, 0
      %p151 = por %p149, %p150
      %p152 = scmp.ne.s32.totalorder %s144, %s146
      %p153 = scmp.eq.s32.totalorder %s21, 1
      %p154 = por %p152, %p153
      %p155 = scmp.ne.s32.totalorder %s146, %s147
      %p156 = scmp.eq.s32.totalorder %s21, 0
      %p157 = por %p155, %p156
      %p158 = scmp.ne.s32.totalorder %s146, %s147
      %p159 = scmp.eq.s32.totalorder %s22, 1
      %p160 = por %p158, %p159
      %p162 = scmp.ne.s32.totalorder %s147, %s161
      %p163 = scmp.eq.s32.totalorder %s22, 0
      %p164 = por %p162, %p163
      %s166 = sadd.s32 %s165, 1
      %p169 = scmp.eq.s32.totalorder %s16, 1
      %p170 = scmp.ne.s32.totalorder %s165, %s167
      %p171 = scmp.eq.s32.totalorder %s16, 0
      %p172 = por %p170, %p171
      %p173 = scmp.ne.s32.totalorder %s165, %s167
      %p174 = scmp.eq.s32.totalorder %s21, 1
      %p175 = por %p173, %p174
      %p176 = scmp.ne.s32.totalorder %s167, %s168
      %p177 = scmp.eq.s32.totalorder %s21, 0
      %p178 = por %p176, %p177
      %p179 = scmp.ne.s32.totalorder %s167, %s168
      %p180 = scmp.eq.s32.totalorder %s22, 1
      %p181 = por %p179, %p180
      %p183 = scmp.ne.s32.totalorder %s168, %s182
      %p184 = scmp.eq.s32.totalorder %s22, 0
      %p185 = por %p183, %p184
      %s186 = ssub.s32 %s16, %s23
      %p187 = scmp.eq.s32.totalorder %s186, 0
      %s189 = sadd.s32 %s188, 1
      %s190 = scalar_select %p187, %s188, %s189
      %p193 = pneg %p187
      %p194 = scmp.eq.s32.totalorder %s16, 1
      %p195 = por %p193, %p194
      %p196 = scmp.ne.s32.totalorder %s188, %s191
      %p197 = scmp.eq.s32.totalorder %s16, 0
      %p198 = por %p196, %p197
      %p199 = scmp.ne.s32.totalorder %s188, %s191
      %p200 = scmp.eq.s32.totalorder %s21, 1
      %p201 = por %p199, %p200
      %p202 = scmp.ne.s32.totalorder %s191, %s192
      %p203 = scmp.eq.s32.totalorder %s21, 0
      %p204 = por %p202, %p203
      %p205 = scmp.ne.s32.totalorder %s191, %s192
      %p206 = scmp.eq.s32.totalorder %s22, 1
      %p207 = por %p205, %p206
      %p209 = scmp.ne.s32.totalorder %s192, %s208
      %p210 = scmp.eq.s32.totalorder %s22, 0
      %p211 = por %p209, %p210
      %p212 = scmp.le.s32.totalorder 1, %s16
      %p213 = scmp.lt.s32.totalorder %s16, 3
      %p214 = pnand %p212, %p213
      %p215 = pneg %p214
      // Predicated region
      $region9: #{tpu_custom_call.1} parent=5 // pred_check
        _
      $region10: #{tpu_custom_call.1} parent=5 // pred_check_branch
        %217 = sbr.rel (%p214) target = $region12
      $region11: #{tpu_custom_call.1} parent=5 // pred_region
        %s218 = ssub.s32 %s16, 1
        // Predicated region
        $region13: #{tpu_custom_call.1} parent=11 // pred_check
          %p219 = pneg %p115
        $region14: #{tpu_custom_call.1} parent=11 // pred_check_branch
          %221 = sbr.rel (%p219) target = $region16
        $region15: #{tpu_custom_call.1} parent=11 // pred_region
          _
        $region16: #{tpu_custom_call.1} parent=11 // pred_fallthru
          _
        // Predicated region
        $region17: #{tpu_custom_call.1} parent=11 // pred_check
          %p222 = pneg %p136
        $region18: #{tpu_custom_call.1} parent=11 // pred_check_branch
          %224 = sbr.rel (%p222) target = $region20
        $region19: #{tpu_custom_call.1} parent=11 // pred_region
          _
        $region20: #{tpu_custom_call.1} parent=11 // pred_fallthru
          _
        // Predicated region
        $region21: #{tpu_custom_call.1} parent=11 // pred_check
          %p225 = pneg %p157
        $region22: #{tpu_custom_call.1} parent=11 // pred_check_branch
          %227 = sbr.rel (%p225) target = $region24
        $region23: #{tpu_custom_call.1} parent=11 // pred_region
          _
        $region24: #{tpu_custom_call.1} parent=11 // pred_fallthru
          _
        // Predicated region
        $region25: #{tpu_custom_call.1} parent=11 // pred_check
          %p228 = pneg %p178
        $region26: #{tpu_custom_call.1} parent=11 // pred_check_branch
          %230 = sbr.rel (%p228) target = $region28
        $region27: #{tpu_custom_call.1} parent=11 // pred_region
          _
        $region28: #{tpu_custom_call.1} parent=11 // pred_fallthru
          _
      $region12: #{tpu_custom_call.1} parent=5 // pred_fallthru
        _
      %p231 = scmp.lt.s32.totalorder %s16, 2
      // Predicated region
      $region29: #{tpu_custom_call.1} parent=5 // pred_check
        %p232 = pneg %p231
      $region30: #{tpu_custom_call.1} parent=5 // pred_check_branch
        %234 = sbr.rel (%p232) target = $region32
      $region31: #{tpu_custom_call.1} parent=5 // pred_region
        // Predicated region
        $region33: #{tpu_custom_call.1} parent=31 // pred_check
          %p235 = pneg %p36
        $region34: #{tpu_custom_call.1} parent=31 // pred_check_branch
          %237 = sbr.rel (%p235) target = $region36
        $region35: #{tpu_custom_call.1} parent=31 // pred_region
          %p238 = scmp.lt.s32.totalorder %s16, 1
          %s239 = scalar_select %p238, %s16, 1
          %s240 = smul.addr %s239, 54
          %s241 = smul.addr %s240, 8
          %s242 = scalar_lea.vmem %s0, %s241
        $region36: #{tpu_custom_call.1} parent=31 // pred_fallthru
          _
        // Predicated region
        $region37: #{tpu_custom_call.1} parent=31 // pred_check
          %p243 = pneg %p62
        $region38: #{tpu_custom_call.1} parent=31 // pred_check_branch
          %245 = sbr.rel (%p243) target = $region40
        $region39: #{tpu_custom_call.1} parent=31 // pred_region
          %p246 = scmp.lt.s32.totalorder %s16, 1
          %s247 = scalar_select %p246, %s16, 1
          %s248 = smul.addr %s247, 54
          %s249 = smul.addr %s248, 8
          %s250 = scalar_lea.vmem %s1, %s249
        $region40: #{tpu_custom_call.1} parent=31 // pred_fallthru
          _
        // Predicated region
        $region41: #{tpu_custom_call.1} parent=31 // pred_check
          %p251 = pneg %p88
        $region42: #{tpu_custom_call.1} parent=31 // pred_check_branch
          %253 = sbr.rel (%p251) target = $region44
        $region43: #{tpu_custom_call.1} parent=31 // pred_region
          %p254 = scmp.lt.s32.totalorder %s16, 1
          %s255 = scalar_select %p254, %s16, 1
          %s256 = smul.addr %s255, 32
          %s257 = smul.addr %s256, 8
          %s258 = scalar_lea.vmem %s2, %s257
        $region44: #{tpu_custom_call.1} parent=31 // pred_fallthru
          _
      $region32: #{tpu_custom_call.1} parent=5 // pred_fallthru
        _
      %p259 = scmp.le.s32.totalorder 1, %s16
      %p260 = scmp.lt.s32.totalorder %s16, 3
      %p261 = pnand %p259, %p260
      %p262 = pneg %p261
      // Predicated region
      $region45: #{tpu_custom_call.1} parent=5 // pred_check
        _
      $region46: #{tpu_custom_call.1} parent=5 // pred_check_branch
        %264 = sbr.rel (%p261) target = $region48
      $region47: #{tpu_custom_call.1} parent=5 // pred_region
        %s265 = ssub.s32 %s16, 1
        %p266 = scmp.lt.s32.totalorder %s21, 1
        %s267 = scalar_select %p266, %s21, 1
        %s268 = smul.addr %s267, 54
        %s269 = smul.addr %s268, 8
        %s270 = scalar_lea.vmem %s0, %s269
        %p271 = pneg %p42
        %p272 = pneg %p39
        %p273 = scmp.lt.s32.totalorder %s21, 1
        %s274 = scalar_select %p273, %s21, 1
        %s275 = smul.addr %s274, 54
        %s276 = smul.addr %s275, 8
        %s277 = scalar_lea.vmem %s1, %s276
        %p278 = pneg %p68
        %p279 = pneg %p65
        %p280 = scmp.lt.s32.totalorder %s21, 1
        %s281 = scalar_select %p280, %s21, 1
        %s282 = smul.addr %s281, 32
        %s283 = smul.addr %s282, 8
        %s284 = scalar_lea.vmem %s2, %s283
        %p285 = pneg %p94
        %p286 = pneg %p91
        %p287 = pneg %p115
        %p288 = pneg %p112
        %p289 = pneg %p136
        %p290 = pneg %p133
        %p291 = pneg %p157
        %p292 = pneg %p154
        %p293 = pneg %p178
        %p294 = pneg %p175
        %p295 = pneg %p204
        %p296 = pneg %p201
        %s297 = sand.u32 %s191, 1
        %s298 = scalar_lea.sflag [#allocation5], %s297
        %s299 = sand.u32 %s191, 1
        %s300 = smul.addr %s299, 8
        %s301 = scalar_lea.vmem [#allocation4], %s300
        %p302 = scmp.lt.s32.totalorder %s21, 1
        %s303 = scalar_select %p302, %s21, 1
        %s304 = smul.addr %s303, 54
        %s305 = smul.addr %s304, 8
        %s306 = scalar_lea.vmem %s0, %s305
        %p307 = scmp.lt.s32.totalorder %s21, 1
        %s308 = scalar_select %p307, %s21, 1
        %s309 = smul.addr %s308, 54
        %s310 = smul.addr %s309, 8
        %s311 = scalar_lea.vmem %s1, %s310
        %p312 = scmp.lt.s32.totalorder %s21, 1
        %s313 = scalar_select %p312, %s21, 1
        %s314 = smul.addr %s313, 32
        %s315 = smul.addr %s314, 8
        %s316 = scalar_lea.vmem %s2, %s315
        %v317 = vld [vmem:[%s306] sm:$0xff]
        %v318 = vld [vmem:[%s306 + $0x8] sm:$0xff]
        %v319 = vld [vmem:[%s306 + $0x10] sm:$0x3]
        %v320 = vld [vmem:[%s306 + $0x18] sm:$0xff]
        %v321 = vld [vmem:[%s306 + $0x20] sm:$0xff]
        %v322 = vld [vmem:[%s306 + $0x28] sm:$0x3]
        %v323 = vld [vmem:[%s306 + $0x30] sm:$0xff]
        %v324 = vld [vmem:[%s306 + $0x38] sm:$0xff]
        %v325 = vld [vmem:[%s306 + $0x40] sm:$0x3]
        %v326 = vld [vmem:[%s306 + $0x48] sm:$0xff]
        %v327 = vld [vmem:[%s306 + $0x50] sm:$0xff]
        %v328 = vld [vmem:[%s306 + $0x58] sm:$0x3]
        %v329 = vld [vmem:[%s306 + $0x60] sm:$0xff]
        %v330 = vld [vmem:[%s306 + $0x68] sm:$0xff]
        %v331 = vld [vmem:[%s306 + $0x70] sm:$0x3]
        %v332 = vld [vmem:[%s306 + $0x78] sm:$0xff]
        %v333 = vld [vmem:[%s306 + $0x80] sm:$0xff]
        %v334 = vld [vmem:[%s306 + $0x88] sm:$0x3]
        %v335 = vld [vmem:[%s306 + $0x90] sm:$0xff]
        %v336 = vld [vmem:[%s306 + $0x98] sm:$0xff]
        %v337 = vld [vmem:[%s306 + $0xa0] sm:$0x3]
        %v338 = vld [vmem:[%s306 + $0xa8] sm:$0xff]
        %v339 = vld [vmem:[%s306 + $0xb0] sm:$0xff]
        %v340 = vld [vmem:[%s306 + $0xb8] sm:$0x3]
        %v341 = vld [vmem:[%s306 + $0xc0] sm:$0xff]
        %v342 = vld [vmem:[%s306 + $0xc8] sm:$0xff]
        %v343 = vld [vmem:[%s306 + $0xd0] sm:$0x3]
        %v344 = vld [vmem:[%s306 + $0xd8] sm:$0xff]
        %v345 = vld [vmem:[%s306 + $0xe0] sm:$0xff]
        %v346 = vld [vmem:[%s306 + $0xe8] sm:$0x3]
        %v347 = vld [vmem:[%s306 + $0xf0] sm:$0xff]
        %v348 = vld [vmem:[%s306 + $0xf8] sm:$0xff]
        %v349 = vld [vmem:[%s306 + $0x100] sm:$0x3]
        %v350 = vld [vmem:[%s306 + $0x108] sm:$0xff]
        %v351 = vld [vmem:[%s306 + $0x110] sm:$0xff]
        %v352 = vld [vmem:[%s306 + $0x118] sm:$0x3]
        %v353 = vld [vmem:[%s306 + $0x120] sm:$0xff]
        %v354 = vld [vmem:[%s306 + $0x128] sm:$0xff]
        %v355 = vld [vmem:[%s306 + $0x130] sm:$0x3]
        %v356 = vld [vmem:[%s306 + $0x138] sm:$0xff]
        %v357 = vld [vmem:[%s306 + $0x140] sm:$0xff]
        %v358 = vld [vmem:[%s306 + $0x148] sm:$0x3]
        %v359 = vld [vmem:[%s306 + $0x150] sm:$0xff]
        %v360 = vld [vmem:[%s306 + $0x158] sm:$0xff]
        %v361 = vld [vmem:[%s306 + $0x160] sm:$0x3]
        %v362 = vld [vmem:[%s306 + $0x168] sm:$0xff]
        %v363 = vld [vmem:[%s306 + $0x170] sm:$0xff]
        %v364 = vld [vmem:[%s306 + $0x178] sm:$0x3]
        %v365 = vld [vmem:[%s306 + $0x180] sm:$0xff]
        %v366 = vld [vmem:[%s306 + $0x188] sm:$0xff]
        %v367 = vld [vmem:[%s306 + $0x190] sm:$0x3]
        %v368 = vld [vmem:[%s306 + $0x198] sm:$0xff]
        %v369 = vld [vmem:[%s306 + $0x1a0] sm:$0xff]
        %v370 = vld [vmem:[%s306 + $0x1a8] sm:$0x3]
        %v371 = vld [vmem:[%s311] sm:$0xff]
        %v372 = vld [vmem:[%s311 + $0x8] sm:$0xff]
        %v373 = vld [vmem:[%s311 + $0x10] sm:$0x3]
        %v374 = vld [vmem:[%s311 + $0x18] sm:$0xff]
        %v375 = vld [vmem:[%s311 + $0x20] sm:$0xff]
        %v376 = vld [vmem:[%s311 + $0x28] sm:$0x3]
        %v377 = vld [vmem:[%s311 + $0x30] sm:$0xff]
        %v378 = vld [vmem:[%s311 + $0x38] sm:$0xff]
        %v379 = vld [vmem:[%s311 + $0x40] sm:$0x3]
        %v380 = vld [vmem:[%s311 + $0x48] sm:$0xff]
        %v381 = vld [vmem:[%s311 + $0x50] sm:$0xff]
        %v382 = vld [vmem:[%s311 + $0x58] sm:$0x3]
        %v383 = vld [vmem:[%s311 + $0x60] sm:$0xff]
        %v384 = vld [vmem:[%s311 + $0x68] sm:$0xff]
        %v385 = vld [vmem:[%s311 + $0x70] sm:$0x3]
        %v386 = vld [vmem:[%s311 + $0x78] sm:$0xff]
        %v387 = vld [vmem:[%s311 + $0x80] sm:$0xff]
        %v388 = vld [vmem:[%s311 + $0x88] sm:$0x3]
        %v389 = vld [vmem:[%s311 + $0x90] sm:$0xff]
        %v390 = vld [vmem:[%s311 + $0x98] sm:$0xff]
        %v391 = vld [vmem:[%s311 + $0xa0] sm:$0x3]
        %v392 = vld [vmem:[%s311 + $0xa8] sm:$0xff]
        %v393 = vld [vmem:[%s311 + $0xb0] sm:$0xff]
        %v394 = vld [vmem:[%s311 + $0xb8] sm:$0x3]
        %v395 = vld [vmem:[%s311 + $0xc0] sm:$0xff]
        %v396 = vld [vmem:[%s311 + $0xc8] sm:$0xff]
        %v397 = vld [vmem:[%s311 + $0xd0] sm:$0x3]
        %v398 = vld [vmem:[%s311 + $0xd8] sm:$0xff]
        %v399 = vld [vmem:[%s311 + $0xe0] sm:$0xff]
        %v400 = vld [vmem:[%s311 + $0xe8] sm:$0x3]
        %v401 = vld [vmem:[%s311 + $0xf0] sm:$0xff]
        %v402 = vld [vmem:[%s311 + $0xf8] sm:$0xff]
        %v403 = vld [vmem:[%s311 + $0x100] sm:$0x3]
        %v404 = vld [vmem:[%s311 + $0x108] sm:$0xff]
        %v405 = vld [vmem:[%s311 + $0x110] sm:$0xff]
        %v406 = vld [vmem:[%s311 + $0x118] sm:$0x3]
        %v407 = vld [vmem:[%s311 + $0x120] sm:$0xff]
        %v408 = vld [vmem:[%s311 + $0x128] sm:$0xff]
        %v409 = vld [vmem:[%s311 + $0x130] sm:$0x3]
        %v410 = vld [vmem:[%s311 + $0x138] sm:$0xff]
        %v411 = vld [vmem:[%s311 + $0x140] sm:$0xff]
        %v412 = vld [vmem:[%s311 + $0x148] sm:$0x3]
        %v413 = vld [vmem:[%s311 + $0x150] sm:$0xff]
        %v414 = vld [vmem:[%s311 + $0x158] sm:$0xff]
        %v415 = vld [vmem:[%s311 + $0x160] sm:$0x3]
        %v416 = vld [vmem:[%s311 + $0x168] sm:$0xff]
        %v417 = vld [vmem:[%s311 + $0x170] sm:$0xff]
        %v418 = vld [vmem:[%s311 + $0x178] sm:$0x3]
        %v419 = vld [vmem:[%s311 + $0x180] sm:$0xff]
        %v420 = vld [vmem:[%s311 + $0x188] sm:$0xff]
        %v421 = vld [vmem:[%s311 + $0x190] sm:$0x3]
        %v422 = vld [vmem:[%s311 + $0x198] sm:$0xff]
        %v423 = vld [vmem:[%s311 + $0x1a0] sm:$0xff]
        %v424 = vld [vmem:[%s311 + $0x1a8] sm:$0x3]
        %426 = vset.pattern.permute.xlu0 0
        %427 = vperm.xlu0 %426, %v371
        %v428 = vpop.permute.xlu0 %427
        %431 = vset.pattern.permute.xlu0 0
        %432 = vperm.xlu0 %431, %v372
        %v433 = vpop.permute.xlu0 %432
        %436 = vset.pattern.permute.xlu0 0
        %437 = vperm.xlu0 %436, %v373
        %v438 = vpop.permute.xlu0 %437
        %441 = vset.pattern.permute.xlu0 0
        %442 = vperm.xlu0 %441, %v374
        %v443 = vpop.permute.xlu0 %442
        %446 = vset.pattern.permute.xlu0 0
        %447 = vperm.xlu0 %446, %v375
        %v448 = vpop.permute.xlu0 %447
        %451 = vset.pattern.permute.xlu0 0
        %452 = vperm.xlu0 %451, %v376
        %v453 = vpop.permute.xlu0 %452
        %456 = vset.pattern.permute.xlu0 0
        %457 = vperm.xlu0 %456, %v377
        %v458 = vpop.permute.xlu0 %457
        %461 = vset.pattern.permute.xlu0 0
        %462 = vperm.xlu0 %461, %v378
        %v463 = vpop.permute.xlu0 %462
        %466 = vset.pattern.permute.xlu0 0
        %467 = vperm.xlu0 %466, %v379
        %v468 = vpop.permute.xlu0 %467
        %471 = vset.pattern.permute.xlu0 0
        %472 = vperm.xlu0 %471, %v380
        %v473 = vpop.permute.xlu0 %472
        %476 = vset.pattern.permute.xlu0 0
        %477 = vperm.xlu0 %476, %v381
        %v478 = vpop.permute.xlu0 %477
        %481 = vset.pattern.permute.xlu0 0
        %482 = vperm.xlu0 %481, %v382
        %v483 = vpop.permute.xlu0 %482
        %486 = vset.pattern.permute.xlu0 0
        %487 = vperm.xlu0 %486, %v383
        %v488 = vpop.permute.xlu0 %487
        %491 = vset.pattern.permute.xlu0 0
        %492 = vperm.xlu0 %491, %v384
        %v493 = vpop.permute.xlu0 %492
        %496 = vset.pattern.permute.xlu0 0
        %497 = vperm.xlu0 %496, %v385
        %v498 = vpop.permute.xlu0 %497
        %501 = vset.pattern.permute.xlu0 0
        %502 = vperm.xlu0 %501, %v386
        %v503 = vpop.permute.xlu0 %502
        %506 = vset.pattern.permute.xlu0 0
        %507 = vperm.xlu0 %506, %v387
        %v508 = vpop.permute.xlu0 %507
        %511 = vset.pattern.permute.xlu0 0
        %512 = vperm.xlu0 %511, %v388
        %v513 = vpop.permute.xlu0 %512
        %516 = vset.pattern.permute.xlu0 0
        %517 = vperm.xlu0 %516, %v389
        %v518 = vpop.permute.xlu0 %517
        %521 = vset.pattern.permute.xlu0 0
        %522 = vperm.xlu0 %521, %v390
        %v523 = vpop.permute.xlu0 %522
        %526 = vset.pattern.permute.xlu0 0
        %527 = vperm.xlu0 %526, %v391
        %v528 = vpop.permute.xlu0 %527
        %531 = vset.pattern.permute.xlu0 0
        %532 = vperm.xlu0 %531, %v392
        %v533 = vpop.permute.xlu0 %532
        %536 = vset.pattern.permute.xlu0 0
        %537 = vperm.xlu0 %536, %v393
        %v538 = vpop.permute.xlu0 %537
        %541 = vset.pattern.permute.xlu0 0
        %542 = vperm.xlu0 %541, %v394
        %v543 = vpop.permute.xlu0 %542
        %546 = vset.pattern.permute.xlu0 0
        %547 = vperm.xlu0 %546, %v395
        %v548 = vpop.permute.xlu0 %547
        %551 = vset.pattern.permute.xlu0 0
        %552 = vperm.xlu0 %551, %v396
        %v553 = vpop.permute.xlu0 %552
        %556 = vset.pattern.permute.xlu0 0
        %557 = vperm.xlu0 %556, %v397
        %v558 = vpop.permute.xlu0 %557
        %561 = vset.pattern.permute.xlu0 0
        %562 = vperm.xlu0 %561, %v398
        %v563 = vpop.permute.xlu0 %562
        %566 = vset.pattern.permute.xlu0 0
        %567 = vperm.xlu0 %566, %v399
        %v568 = vpop.permute.xlu0 %567
        %571 = vset.pattern.permute.xlu0 0
        %572 = vperm.xlu0 %571, %v400
        %v573 = vpop.permute.xlu0 %572
        %576 = vset.pattern.permute.xlu0 0
        %577 = vperm.xlu0 %576, %v401
        %v578 = vpop.permute.xlu0 %577
        %581 = vset.pattern.permute.xlu0 0
        %582 = vperm.xlu0 %581, %v402
        %v583 = vpop.permute.xlu0 %582
        %586 = vset.pattern.permute.xlu0 0
        %587 = vperm.xlu0 %586, %v403
        %v588 = vpop.permute.xlu0 %587
        %591 = vset.pattern.permute.xlu0 0
        %592 = vperm.xlu0 %591, %v404
        %v593 = vpop.permute.xlu0 %592
        %596 = vset.pattern.permute.xlu0 0
        %597 = vperm.xlu0 %596, %v405
        %v598 = vpop.permute.xlu0 %597
        %601 = vset.pattern.permute.xlu0 0
        %602 = vperm.xlu0 %601, %v406
        %v603 = vpop.permute.xlu0 %602
        %606 = vset.pattern.permute.xlu0 0
        %607 = vperm.xlu0 %606, %v407
        %v608 = vpop.permute.xlu0 %607
        %611 = vset.pattern.permute.xlu0 0
        %612 = vperm.xlu0 %611, %v408
        %v613 = vpop.permute.xlu0 %612
        %616 = vset.pattern.permute.xlu0 0
        %617 = vperm.xlu0 %616, %v409
        %v618 = vpop.permute.xlu0 %617
        %621 = vset.pattern.permute.xlu0 0
        %622 = vperm.xlu0 %621, %v410
        %v623 = vpop.permute.xlu0 %622
        %626 = vset.pattern.permute.xlu0 0
        %627 = vperm.xlu0 %626, %v411
        %v628 = vpop.permute.xlu0 %627
        %631 = vset.pattern.permute.xlu0 0
        %632 = vperm.xlu0 %631, %v412
        %v633 = vpop.permute.xlu0 %632
        %636 = vset.pattern.permute.xlu0 0
        %637 = vperm.xlu0 %636, %v413
        %v638 = vpop.permute.xlu0 %637
        %641 = vset.pattern.permute.xlu0 0
        %642 = vperm.xlu0 %641, %v414
        %v643 = vpop.permute.xlu0 %642
        %646 = vset.pattern.permute.xlu0 0
        %647 = vperm.xlu0 %646, %v415
        %v648 = vpop.permute.xlu0 %647
        %651 = vset.pattern.permute.xlu0 0
        %652 = vperm.xlu0 %651, %v416
        %v653 = vpop.permute.xlu0 %652
        %656 = vset.pattern.permute.xlu0 0
        %657 = vperm.xlu0 %656, %v417
        %v658 = vpop.permute.xlu0 %657
        %661 = vset.pattern.permute.xlu0 0
        %662 = vperm.xlu0 %661, %v418
        %v663 = vpop.permute.xlu0 %662
        %666 = vset.pattern.permute.xlu0 0
        %667 = vperm.xlu0 %666, %v419
        %v668 = vpop.permute.xlu0 %667
        %671 = vset.pattern.permute.xlu0 0
        %672 = vperm.xlu0 %671, %v420
        %v673 = vpop.permute.xlu0 %672
        %676 = vset.pattern.permute.xlu0 0
        %677 = vperm.xlu0 %676, %v421
        %v678 = vpop.permute.xlu0 %677
        %681 = vset.pattern.permute.xlu0 0
        %682 = vperm.xlu0 %681, %v422
        %v683 = vpop.permute.xlu0 %682
        %686 = vset.pattern.permute.xlu0 0
        %687 = vperm.xlu0 %686, %v423
        %v688 = vpop.permute.xlu0 %687
        %691 = vset.pattern.permute.xlu0 0
        %692 = vperm.xlu0 %691, %v424
        %v693 = vpop.permute.xlu0 %692
        %v695 = vmul.f32 %v317, %v428
        %v696 = vmul.f32 %v318, %v433
        %v697 = vmul.f32 %v319, %v438
        %v698 = vmul.f32 %v320, %v443
        %v699 = vmul.f32 %v321, %v448
        %v700 = vmul.f32 %v322, %v453
        %v701 = vmul.f32 %v323, %v458
        %v702 = vmul.f32 %v324, %v463
        %v703 = vmul.f32 %v325, %v468
        %v704 = vmul.f32 %v326, %v473
        %v705 = vmul.f32 %v327, %v478
        %v706 = vmul.f32 %v328, %v483
        %v707 = vmul.f32 %v329, %v488
        %v708 = vmul.f32 %v330, %v493
        %v709 = vmul.f32 %v331, %v498
        %v710 = vmul.f32 %v332, %v503
        %v711 = vmul.f32 %v333, %v508
        %v712 = vmul.f32 %v334, %v513
        %v713 = vmul.f32 %v335, %v518
        %v714 = vmul.f32 %v336, %v523
        %v715 = vmul.f32 %v337, %v528
        %v716 = vmul.f32 %v338, %v533
        %v717 = vmul.f32 %v339, %v538
        %v718 = vmul.f32 %v340, %v543
        %v719 = vmul.f32 %v341, %v548
        %v720 = vmul.f32 %v342, %v553
        %v721 = vmul.f32 %v343, %v558
        %v722 = vmul.f32 %v344, %v563
        %v723 = vmul.f32 %v345, %v568
        %v724 = vmul.f32 %v346, %v573
        %v725 = vmul.f32 %v347, %v578
        %v726 = vmul.f32 %v348, %v583
        %v727 = vmul.f32 %v349, %v588
        %v728 = vmul.f32 %v350, %v593
        %v729 = vmul.f32 %v351, %v598
        %v730 = vmul.f32 %v352, %v603
        %v731 = vmul.f32 %v353, %v608
        %v732 = vmul.f32 %v354, %v613
        %v733 = vmul.f32 %v355, %v618
        %v734 = vmul.f32 %v356, %v623
        %v735 = vmul.f32 %v357, %v628
        %v736 = vmul.f32 %v358, %v633
        %v737 = vmul.f32 %v359, %v638
        %v738 = vmul.f32 %v360, %v643
        %v739 = vmul.f32 %v361, %v648
        %v740 = vmul.f32 %v362, %v653
        %v741 = vmul.f32 %v363, %v658
        %v742 = vmul.f32 %v364, %v663
        %v743 = vmul.f32 %v365, %v668
        %v744 = vmul.f32 %v366, %v673
        %v745 = vmul.f32 %v367, %v678
        %v746 = vmul.f32 %v368, %v683
        %v747 = vmul.f32 %v369, %v688
        %v748 = vmul.f32 %v370, %v693
        %vm749 = vcmask 31744
        %750 = vst.msk [vmem:[#allocation2] sm:$0xff] %vm749, %v695
        %751 = vst.msk [vmem:[#allocation2 + $0x8] sm:$0xff] %vm749, %v696
        %vm752 = vcmask 25600
        %753 = vst.msk [vmem:[#allocation2 + $0x10] sm:$0x3] %vm752, %v697
        %754 = vst.msk [vmem:[#allocation2 + $0x18] sm:$0xff] %vm749, %v698
        %755 = vst.msk [vmem:[#allocation2 + $0x20] sm:$0xff] %vm749, %v699
        %756 = vst.msk [vmem:[#allocation2 + $0x28] sm:$0x3] %vm752, %v700
        %757 = vst.msk [vmem:[#allocation2 + $0x30] sm:$0xff] %vm749, %v701
        %758 = vst.msk [vmem:[#allocation2 + $0x38] sm:$0xff] %vm749, %v702
        %759 = vst.msk [vmem:[#allocation2 + $0x40] sm:$0x3] %vm752, %v703
        %760 = vst.msk [vmem:[#allocation2 + $0x48] sm:$0xff] %vm749, %v704
        %761 = vst.msk [vmem:[#allocation2 + $0x50] sm:$0xff] %vm749, %v705
        %762 = vst.msk [vmem:[#allocation2 + $0x58] sm:$0x3] %vm752, %v706
        %763 = vst.msk [vmem:[#allocation2 + $0x60] sm:$0xff] %vm749, %v707
        %764 = vst.msk [vmem:[#allocation2 + $0x68] sm:$0xff] %vm749, %v708
        %765 = vst.msk [vmem:[#allocation2 + $0x70] sm:$0x3] %vm752, %v709
        %766 = vst.msk [vmem:[#allocation2 + $0x78] sm:$0xff] %vm749, %v710
        %767 = vst.msk [vmem:[#allocation2 + $0x80] sm:$0xff] %vm749, %v711
        %768 = vst.msk [vmem:[#allocation2 + $0x88] sm:$0x3] %vm752, %v712
        %769 = vst.msk [vmem:[#allocation2 + $0x90] sm:$0xff] %vm749, %v713
        %770 = vst.msk [vmem:[#allocation2 + $0x98] sm:$0xff] %vm749, %v714
        %771 = vst.msk [vmem:[#allocation2 + $0xa0] sm:$0x3] %vm752, %v715
        %772 = vst.msk [vmem:[#allocation2 + $0xa8] sm:$0xff] %vm749, %v716
        %773 = vst.msk [vmem:[#allocation2 + $0xb0] sm:$0xff] %vm749, %v717
        %774 = vst.msk [vmem:[#allocation2 + $0xb8] sm:$0x3] %vm752, %v718
        %775 = vst.msk [vmem:[#allocation2 + $0xc0] sm:$0xff] %vm749, %v719
        %776 = vst.msk [vmem:[#allocation2 + $0xc8] sm:$0xff] %vm749, %v720
        %777 = vst.msk [vmem:[#allocation2 + $0xd0] sm:$0x3] %vm752, %v721
        %778 = vst.msk [vmem:[#allocation2 + $0xd8] sm:$0xff] %vm749, %v722
        %779 = vst.msk [vmem:[#allocation2 + $0xe0] sm:$0xff] %vm749, %v723
        %780 = vst.msk [vmem:[#allocation2 + $0xe8] sm:$0x3] %vm752, %v724
        %781 = vst.msk [vmem:[#allocation2 + $0xf0] sm:$0xff] %vm749, %v725
        %782 = vst.msk [vmem:[#allocation2 + $0xf8] sm:$0xff] %vm749, %v726
        %783 = vst.msk [vmem:[#allocation2 + $0x100] sm:$0x3] %vm752, %v727
        %784 = vst.msk [vmem:[#allocation2 + $0x108] sm:$0xff] %vm749, %v728
        %785 = vst.msk [vmem:[#allocation2 + $0x110] sm:$0xff] %vm749, %v729
        %786 = vst.msk [vmem:[#allocation2 + $0x118] sm:$0x3] %vm752, %v730
        %787 = vst.msk [vmem:[#allocation2 + $0x120] sm:$0xff] %vm749, %v731
        %788 = vst.msk [vmem:[#allocation2 + $0x128] sm:$0xff] %vm749, %v732
        %789 = vst.msk [vmem:[#allocation2 + $0x130] sm:$0x3] %vm752, %v733
        %790 = vst.msk [vmem:[#allocation2 + $0x138] sm:$0xff] %vm749, %v734
        %791 = vst.msk [vmem:[#allocation2 + $0x140] sm:$0xff] %vm749, %v735
        %792 = vst.msk [vmem:[#allocation2 + $0x148] sm:$0x3] %vm752, %v736
        %793 = vst.msk [vmem:[#allocation2 + $0x150] sm:$0xff] %vm749, %v737
        %794 = vst.msk [vmem:[#allocation2 + $0x158] sm:$0xff] %vm749, %v738
        %795 = vst.msk [vmem:[#allocation2 + $0x160] sm:$0x3] %vm752, %v739
        %796 = vst.msk [vmem:[#allocation2 + $0x168] sm:$0xff] %vm749, %v740
        %797 = vst.msk [vmem:[#allocation2 + $0x170] sm:$0xff] %vm749, %v741
        %798 = vst.msk [vmem:[#allocation2 + $0x178] sm:$0x3] %vm752, %v742
        %799 = vst.msk [vmem:[#allocation2 + $0x180] sm:$0xff] %vm749, %v743
        %800 = vst.msk [vmem:[#allocation2 + $0x188] sm:$0xff] %vm749, %v744
        %801 = vst.msk [vmem:[#allocation2 + $0x190] sm:$0x3] %vm752, %v745
        %802 = vst.msk [vmem:[#allocation2 + $0x198] sm:$0xff] %vm749, %v746
        %803 = vst.msk [vmem:[#allocation2 + $0x1a0] sm:$0xff] %vm749, %v747
        %804 = vst.msk [vmem:[#allocation2 + $0x1a8] sm:$0x3] %vm752, %v748
        %v805 = vld [vmem:[%s3] sm:$0xf]
        %v806 = vld [vmem:[%s3 + $0x4] sm:$0xf]
        %v807 = vld [vmem:[%s3 + $0x8] sm:$0xf]
        %v808 = vld [vmem:[%s3 + $0xc] sm:$0xf]
        %v809 = vld [vmem:[%s3 + $0x10] sm:$0xf]
        %v810 = vld [vmem:[%s3 + $0x14] sm:$0xf]
        %v811 = vld [vmem:[%s3 + $0x18] sm:$0xf]
        %v812 = vld [vmem:[%s3 + $0x1c] sm:$0xf]
        %v813 = vld [vmem:[%s3 + $0x20] sm:$0xf]
        %v814 = vld [vmem:[%s4] sm:$0x1]
        %v815 = vld [vmem:[%s5] sm:$0xf]
        %v816 = vld [vmem:[%s5 + $0x4] sm:$0xf]
        %v817 = vld [vmem:[%s5 + $0x8] sm:$0xf]
        %v818 = vld [vmem:[%s5 + $0xc] sm:$0xf]
        %v819 = vld [vmem:[%s5 + $0x10] sm:$0xf]
        %v820 = vld [vmem:[%s5 + $0x14] sm:$0xf]
        %v821 = vld [vmem:[%s5 + $0x18] sm:$0xf]
        %v822 = vld [vmem:[%s5 + $0x1c] sm:$0xf]
        %v823 = vld [vmem:[%s5 + $0x20] sm:$0xf]
        %v824 = vld [vmem:[%s6] sm:$0x1]
        %v825 = vld [vmem:[#allocation2] sm:$0xff]
        %v826 = vld [vmem:[#allocation2 + $0x8] sm:$0xff]
        %v827 = vld [vmem:[#allocation2 + $0x18] sm:$0xff]
        %v828 = vld [vmem:[#allocation2 + $0x20] sm:$0xff]
        %v829 = vld [vmem:[#allocation2 + $0x30] sm:$0xff]
        %v830 = vld [vmem:[#allocation2 + $0x38] sm:$0xff]
        %v831 = vld [vmem:[#allocation2 + $0x48] sm:$0xff]
        %v832 = vld [vmem:[#allocation2 + $0x50] sm:$0xff]
        %v833 = vld [vmem:[#allocation2 + $0x60] sm:$0xff]
        %v834 = vld [vmem:[#allocation2 + $0x68] sm:$0xff]
        %v835 = vld [vmem:[#allocation2 + $0x78] sm:$0xff]
        %v836 = vld [vmem:[#allocation2 + $0x80] sm:$0xff]
        %v837 = vld [vmem:[#allocation2 + $0x90] sm:$0xff]
        %v838 = vld [vmem:[#allocation2 + $0x98] sm:$0xff]
        %v839 = vld [vmem:[#allocation2 + $0xa8] sm:$0xff]
        %v840 = vld [vmem:[#allocation2 + $0xb0] sm:$0xff]
        %v841 = vld [vmem:[#allocation2 + $0xc0] sm:$0xff]
        %v842 = vld [vmem:[#allocation2 + $0xc8] sm:$0xff]
        %v843 = vld [vmem:[#allocation2 + $0xd8] sm:$0xff]
        %v844 = vld [vmem:[#allocation2 + $0xe0] sm:$0xff]
        %v845 = vld [vmem:[#allocation2 + $0xf0] sm:$0xff]
        %v846 = vld [vmem:[#allocation2 + $0xf8] sm:$0xff]
        %v847 = vld [vmem:[#allocation2 + $0x108] sm:$0xff]
        %v848 = vld [vmem:[#allocation2 + $0x110] sm:$0xff]
        %v849 = vld [vmem:[#allocation2 + $0x120] sm:$0xff]
        %v850 = vld [vmem:[#allocation2 + $0x128] sm:$0xff]
        %v851 = vld [vmem:[#allocation2 + $0x138] sm:$0xff]
        %v852 = vld [vmem:[#allocation2 + $0x140] sm:$0xff]
        %v853 = vld [vmem:[#allocation2 + $0x150] sm:$0xff]
        %v854 = vld [vmem:[#allocation2 + $0x158] sm:$0xff]
        %v855 = vld [vmem:[#allocation2 + $0x168] sm:$0xff]
        %v856 = vld [vmem:[#allocation2 + $0x170] sm:$0xff]
        %v857 = vld [vmem:[#allocation2 + $0x1] sm:$0xff]
        %v858 = vld [vmem:[#allocation2 + $0x9] sm:$0xff]
        %v859 = vld [vmem:[#allocation2 + $0x19] sm:$0xff]
        %v860 = vld [vmem:[#allocation2 + $0x21] sm:$0xff]
        %v861 = vld [vmem:[#allocation2 + $0x31] sm:$0xff]
        %v862 = vld [vmem:[#allocation2 + $0x39] sm:$0xff]
        %v863 = vld [vmem:[#allocation2 + $0x49] sm:$0xff]
        %v864 = vld [vmem:[#allocation2 + $0x51] sm:$0xff]
        %v865 = vld [vmem:[#allocation2 + $0x61] sm:$0xff]
        %v866 = vld [vmem:[#allocation2 + $0x69] sm:$0xff]
        %v867 = vld [vmem:[#allocation2 + $0x79] sm:$0xff]
        %v868 = vld [vmem:[#allocation2 + $0x81] sm:$0xff]
        %v869 = vld [vmem:[#allocation2 + $0x91] sm:$0xff]
        %v870 = vld [vmem:[#allocation2 + $0x99] sm:$0xff]
        %v871 = vld [vmem:[#allocation2 + $0xa9] sm:$0xff]
        %v872 = vld [vmem:[#allocation2 + $0xb1] sm:$0xff]
        %v873 = vld [vmem:[#allocation2 + $0xc1] sm:$0xff]
        %v874 = vld [vmem:[#allocation2 + $0xc9] sm:$0xff]
        %v875 = vld [vmem:[#allocation2 + $0xd9] sm:$0xff]
        %v876 = vld [vmem:[#allocation2 + $0xe1] sm:$0xff]
        %v877 = vld [vmem:[#allocation2 + $0xf1] sm:$0xff]
        %v878 = vld [vmem:[#allocation2 + $0xf9] sm:$0xff]
        %v879 = vld [vmem:[#allocation2 + $0x109] sm:$0xff]
        %v880 = vld [vmem:[#allocation2 + $0x111] sm:$0xff]
        %v881 = vld [vmem:[#allocation2 + $0x121] sm:$0xff]
        %v882 = vld [vmem:[#allocation2 + $0x129] sm:$0xff]
        %v883 = vld [vmem:[#allocation2 + $0x139] sm:$0xff]
        %v884 = vld [vmem:[#allocation2 + $0x141] sm:$0xff]
        %v885 = vld [vmem:[#allocation2 + $0x151] sm:$0xff]
        %v886 = vld [vmem:[#allocation2 + $0x159] sm:$0xff]
        %v887 = vld [vmem:[#allocation2 + $0x169] sm:$0xff]
        %v888 = vld [vmem:[#allocation2 + $0x171] sm:$0xff]
        %v890 = vsel %vm749, %v857, 0
        %v893 = vsel %vm749, %v858, 0
        %v896 = vsel %vm749, %v859, 0
        %v899 = vsel %vm749, %v860, 0
        %v902 = vsel %vm749, %v861, 0
        %v905 = vsel %vm749, %v862, 0
        %v908 = vsel %vm749, %v863, 0
        %v911 = vsel %vm749, %v864, 0
        %v914 = vsel %vm749, %v865, 0
        %v917 = vsel %vm749, %v866, 0
        %v920 = vsel %vm749, %v867, 0
        %v923 = vsel %vm749, %v868, 0
        %v926 = vsel %vm749, %v869, 0
        %v929 = vsel %vm749, %v870, 0
        %v932 = vsel %vm749, %v871, 0
        %v935 = vsel %vm749, %v872, 0
        %v938 = vsel %vm749, %v873, 0
        %v941 = vsel %vm749, %v874, 0
        %v944 = vsel %vm749, %v875, 0
        %v947 = vsel %vm749, %v876, 0
        %v950 = vsel %vm749, %v877, 0
        %v953 = vsel %vm749, %v878, 0
        %v956 = vsel %vm749, %v879, 0
        %v959 = vsel %vm749, %v880, 0
        %v962 = vsel %vm749, %v881, 0
        %v965 = vsel %vm749, %v882, 0
        %v968 = vsel %vm749, %v883, 0
        %v971 = vsel %vm749, %v884, 0
        %v974 = vsel %vm749, %v885, 0
        %v977 = vsel %vm749, %v886, 0
        %v980 = vsel %vm749, %v887, 0
        %v983 = vsel %vm749, %v888, 0
        %vm985 = vcmask 1043456
        %v987 = vsel %vm985, %v806, 0
        %989 = vmatpush.msra.mxu0 0.0
        %990 = vmatpush.msra.mxu0 0.0
        %991 = vmatpush.msra.mxu0 0.0
        %992 = vmatpush.msra.mxu0 0.0
        %993 = vmatpush.msra.mxu0 0.0
        %994 = vmatpush.msra.mxu0 0.0
        %995 = vmatpush.msra.mxu0 0.0
        %996 = vmatpush.msra.mxu0 0.0
        %997 = vmatpush.msra.mxu0 0.0
        %998 = vmatpush.msra.mxu0 0.0
        %999 = vmatpush.msra.mxu0 0.0
        %1000 = vmatpush.msra.mxu0 0.0
        %1001 = vmatpush.msra.mxu0 0.0
        %1002 = vmatpush.msra.mxu0 0.0
        %1003 = vmatpush.msra.mxu0 0.0
        %1004 = vmatpush.msra.mxu0 %v987
        %1005 = vmatmul.f32.gmra.mxu0 %v890
        %v1006 = vpop.f32.mrf.mxu0
        %v1007 = vadd.f32 0.0, %v1006
        %1008 = vmatmul.f32.gmra.mxu0 %v893
        %v1009 = vpop.f32.mrf.mxu0
        %v1010 = vadd.f32 0.0, %v1009
        %1011 = vmatmul.f32.gmra.mxu0 %v896
        %v1012 = vpop.f32.mrf.mxu0
        %v1013 = vadd.f32 0.0, %v1012
        %1014 = vmatmul.f32.gmra.mxu0 %v899
        %v1015 = vpop.f32.mrf.mxu0
        %v1016 = vadd.f32 0.0, %v1015
        %1017 = vmatmul.f32.gmra.mxu0 %v902
        %v1018 = vpop.f32.mrf.mxu0
        %v1019 = vadd.f32 0.0, %v1018
        %1020 = vmatmul.f32.gmra.mxu0 %v905
        %v1021 = vpop.f32.mrf.mxu0
        %v1022 = vadd.f32 0.0, %v1021
        %1023 = vmatmul.f32.gmra.mxu0 %v908
        %v1024 = vpop.f32.mrf.mxu0
        %v1025 = vadd.f32 0.0, %v1024
        %1026 = vmatmul.f32.gmra.mxu0 %v911
        %v1027 = vpop.f32.mrf.mxu0
        %v1028 = vadd.f32 0.0, %v1027
        %1029 = vmatmul.f32.gmra.mxu0 %v914
        %v1030 = vpop.f32.mrf.mxu0
        %v1031 = vadd.f32 0.0, %v1030
        %1032 = vmatmul.f32.gmra.mxu0 %v917
        %v1033 = vpop.f32.mrf.mxu0
        %v1034 = vadd.f32 0.0, %v1033
        %1035 = vmatmul.f32.gmra.mxu0 %v920
        %v1036 = vpop.f32.mrf.mxu0
        %v1037 = vadd.f32 0.0, %v1036
        %1038 = vmatmul.f32.gmra.mxu0 %v923
        %v1039 = vpop.f32.mrf.mxu0
        %v1040 = vadd.f32 0.0, %v1039
        %1041 = vmatmul.f32.gmra.mxu0 %v926
        %v1042 = vpop.f32.mrf.mxu0
        %v1043 = vadd.f32 0.0, %v1042
        %1044 = vmatmul.f32.gmra.mxu0 %v929
        %v1045 = vpop.f32.mrf.mxu0
        %v1046 = vadd.f32 0.0, %v1045
        %1047 = vmatmul.f32.gmra.mxu0 %v932
        %v1048 = vpop.f32.mrf.mxu0
        %v1049 = vadd.f32 0.0, %v1048
        %1050 = vmatmul.f32.gmra.mxu0 %v935
        %v1051 = vpop.f32.mrf.mxu0
        %v1052 = vadd.f32 0.0, %v1051
        %1053 = vmatmul.f32.gmra.mxu0 %v938
        %v1054 = vpop.f32.mrf.mxu0
        %v1055 = vadd.f32 0.0, %v1054
        %1056 = vmatmul.f32.gmra.mxu0 %v941
        %v1057 = vpop.f32.mrf.mxu0
        %v1058 = vadd.f32 0.0, %v1057
        %1059 = vmatmul.f32.gmra.mxu0 %v944
        %v1060 = vpop.f32.mrf.mxu0
        %v1061 = vadd.f32 0.0, %v1060
        %1062 = vmatmul.f32.gmra.mxu0 %v947
        %v1063 = vpop.f32.mrf.mxu0
        %v1064 = vadd.f32 0.0, %v1063
        %1065 = vmatmul.f32.gmra.mxu0 %v950
        %v1066 = vpop.f32.mrf.mxu0
        %v1067 = vadd.f32 0.0, %v1066
        %1068 = vmatmul.f32.gmra.mxu0 %v953
        %v1069 = vpop.f32.mrf.mxu0
        %v1070 = vadd.f32 0.0, %v1069
        %1071 = vmatmul.f32.gmra.mxu0 %v956
        %v1072 = vpop.f32.mrf.mxu0
        %v1073 = vadd.f32 0.0, %v1072
        %1074 = vmatmul.f32.gmra.mxu0 %v959
        %v1075 = vpop.f32.mrf.mxu0
        %v1076 = vadd.f32 0.0, %v1075
        %1077 = vmatmul.f32.gmra.mxu0 %v962
        %v1078 = vpop.f32.mrf.mxu0
        %v1079 = vadd.f32 0.0, %v1078
        %1080 = vmatmul.f32.gmra.mxu0 %v965
        %v1081 = vpop.f32.mrf.mxu0
        %v1082 = vadd.f32 0.0, %v1081
        %1083 = vmatmul.f32.gmra.mxu0 %v968
        %v1084 = vpop.f32.mrf.mxu0
        %v1085 = vadd.f32 0.0, %v1084
        %1086 = vmatmul.f32.gmra.mxu0 %v971
        %v1087 = vpop.f32.mrf.mxu0
        %v1088 = vadd.f32 0.0, %v1087
        %1089 = vmatmul.f32.gmra.mxu0 %v974
        %v1090 = vpop.f32.mrf.mxu0
        %v1091 = vadd.f32 0.0, %v1090
        %1092 = vmatmul.f32.gmra.mxu0 %v977
        %v1093 = vpop.f32.mrf.mxu0
        %v1094 = vadd.f32 0.0, %v1093
        %1095 = vmatmul.f32.gmra.mxu0 %v980
        %v1096 = vpop.f32.mrf.mxu0
        %v1097 = vadd.f32 0.0, %v1096
        %1098 = vmatmul.f32.gmra.mxu0 %v983
        %v1099 = vpop.f32.mrf.mxu0
        %v1100 = vadd.f32 0.0, %v1099
        %1101 = vdwg.mxu0
        %v1103 = vsel %vm749, %v825, 0
        %v1106 = vsel %vm749, %v826, 0
        %v1109 = vsel %vm749, %v827, 0
        %v1112 = vsel %vm749, %v828, 0
        %v1115 = vsel %vm749, %v829, 0
        %v1118 = vsel %vm749, %v830, 0
        %v1121 = vsel %vm749, %v831, 0
        %v1124 = vsel %vm749, %v832, 0
        %v1127 = vsel %vm749, %v833, 0
        %v1130 = vsel %vm749, %v834, 0
        %v1133 = vsel %vm749, %v835, 0
        %v1136 = vsel %vm749, %v836, 0
        %v1139 = vsel %vm749, %v837, 0
        %v1142 = vsel %vm749, %v838, 0
        %v1145 = vsel %vm749, %v839, 0
        %v1148 = vsel %vm749, %v840, 0
        %v1151 = vsel %vm749, %v841, 0
        %v1154 = vsel %vm749, %v842, 0
        %v1157 = vsel %vm749, %v843, 0
        %v1160 = vsel %vm749, %v844, 0
        %v1163 = vsel %vm749, %v845, 0
        %v1166 = vsel %vm749, %v846, 0
        %v1169 = vsel %vm749, %v847, 0
        %v1172 = vsel %vm749, %v848, 0
        %v1175 = vsel %vm749, %v849, 0
        %v1178 = vsel %vm749, %v850, 0
        %v1181 = vsel %vm749, %v851, 0
        %v1184 = vsel %vm749, %v852, 0
        %v1187 = vsel %vm749, %v853, 0
        %v1190 = vsel %vm749, %v854, 0
        %v1193 = vsel %vm749, %v855, 0
        %v1196 = vsel %vm749, %v856, 0
        %v1199 = vsel %vm985, %v805, 0
        %1201 = vmatpush.msra.mxu0 0.0
        %1202 = vmatpush.msra.mxu0 0.0
        %1203 = vmatpush.msra.mxu0 0.0
        %1204 = vmatpush.msra.mxu0 0.0
        %1205 = vmatpush.msra.mxu0 0.0
        %1206 = vmatpush.msra.mxu0 0.0
        %1207 = vmatpush.msra.mxu0 0.0
        %1208 = vmatpush.msra.mxu0 0.0
        %1209 = vmatpush.msra.mxu0 0.0
        %1210 = vmatpush.msra.mxu0 0.0
        %1211 = vmatpush.msra.mxu0 0.0
        %1212 = vmatpush.msra.mxu0 0.0
        %1213 = vmatpush.msra.mxu0 0.0
        %1214 = vmatpush.msra.mxu0 0.0
        %1215 = vmatpush.msra.mxu0 0.0
        %1216 = vmatpush.msra.mxu0 %v1199
        %1217 = vmatmul.f32.gmra.mxu0 %v1103
        %v1218 = vpop.f32.mrf.mxu0
        %v1219 = vadd.f32 %v1007, %v1218
        %1220 = vmatmul.f32.gmra.mxu0 %v1106
        %v1221 = vpop.f32.mrf.mxu0
        %v1222 = vadd.f32 %v1010, %v1221
        %1223 = vmatmul.f32.gmra.mxu0 %v1109
        %v1224 = vpop.f32.mrf.mxu0
        %v1225 = vadd.f32 %v1013, %v1224
        %1226 = vmatmul.f32.gmra.mxu0 %v1112
        %v1227 = vpop.f32.mrf.mxu0
        %v1228 = vadd.f32 %v1016, %v1227
        %1229 = vmatmul.f32.gmra.mxu0 %v1115
        %v1230 = vpop.f32.mrf.mxu0
        %v1231 = vadd.f32 %v1019, %v1230
        %1232 = vmatmul.f32.gmra.mxu0 %v1118
        %v1233 = vpop.f32.mrf.mxu0
        %v1234 = vadd.f32 %v1022, %v1233
        %1235 = vmatmul.f32.gmra.mxu0 %v1121
        %v1236 = vpop.f32.mrf.mxu0
        %v1237 = vadd.f32 %v1025, %v1236
        %1238 = vmatmul.f32.gmra.mxu0 %v1124
        %v1239 = vpop.f32.mrf.mxu0
        %v1240 = vadd.f32 %v1028, %v1239
        %1241 = vmatmul.f32.gmra.mxu0 %v1127
        %v1242 = vpop.f32.mrf.mxu0
        %v1243 = vadd.f32 %v1031, %v1242
        %1244 = vmatmul.f32.gmra.mxu0 %v1130
        %v1245 = vpop.f32.mrf.mxu0
        %v1246 = vadd.f32 %v1034, %v1245
        %1247 = vmatmul.f32.gmra.mxu0 %v1133
        %v1248 = vpop.f32.mrf.mxu0
        %v1249 = vadd.f32 %v1037, %v1248
        %1250 = vmatmul.f32.gmra.mxu0 %v1136
        %v1251 = vpop.f32.mrf.mxu0
        %v1252 = vadd.f32 %v1040, %v1251
        %1253 = vmatmul.f32.gmra.mxu0 %v1139
        %v1254 = vpop.f32.mrf.mxu0
        %v1255 = vadd.f32 %v1043, %v1254
        %1256 = vmatmul.f32.gmra.mxu0 %v1142
        %v1257 = vpop.f32.mrf.mxu0
        %v1258 = vadd.f32 %v1046, %v1257
        %1259 = vmatmul.f32.gmra.mxu0 %v1145
        %v1260 = vpop.f32.mrf.mxu0
        %v1261 = vadd.f32 %v1049, %v1260
        %1262 = vmatmul.f32.gmra.mxu0 %v1148
        %v1263 = vpop.f32.mrf.mxu0
        %v1264 = vadd.f32 %v1052, %v1263
        %1265 = vmatmul.f32.gmra.mxu0 %v1151
        %v1266 = vpop.f32.mrf.mxu0
        %v1267 = vadd.f32 %v1055, %v1266
        %1268 = vmatmul.f32.gmra.mxu0 %v1154
        %v1269 = vpop.f32.mrf.mxu0
        %v1270 = vadd.f32 %v1058, %v1269
        %1271 = vmatmul.f32.gmra.mxu0 %v1157
        %v1272 = vpop.f32.mrf.mxu0
        %v1273 = vadd.f32 %v1061, %v1272
        %1274 = vmatmul.f32.gmra.mxu0 %v1160
        %v1275 = vpop.f32.mrf.mxu0
        %v1276 = vadd.f32 %v1064, %v1275
        %1277 = vmatmul.f32.gmra.mxu0 %v1163
        %v1278 = vpop.f32.mrf.mxu0
        %v1279 = vadd.f32 %v1067, %v1278
        %1280 = vmatmul.f32.gmra.mxu0 %v1166
        %v1281 = vpop.f32.mrf.mxu0
        %v1282 = vadd.f32 %v1070, %v1281
        %1283 = vmatmul.f32.gmra.mxu0 %v1169
        %v1284 = vpop.f32.mrf.mxu0
        %v1285 = vadd.f32 %v1073, %v1284
        %1286 = vmatmul.f32.gmra.mxu0 %v1172
        %v1287 = vpop.f32.mrf.mxu0
        %v1288 = vadd.f32 %v1076, %v1287
        %1289 = vmatmul.f32.gmra.mxu0 %v1175
        %v1290 = vpop.f32.mrf.mxu0
        %v1291 = vadd.f32 %v1079, %v1290
        %1292 = vmatmul.f32.gmra.mxu0 %v1178
        %v1293 = vpop.f32.mrf.mxu0
        %v1294 = vadd.f32 %v1082, %v1293
        %1295 = vmatmul.f32.gmra.mxu0 %v1181
        %v1296 = vpop.f32.mrf.mxu0
        %v1297 = vadd.f32 %v1085, %v1296
        %1298 = vmatmul.f32.gmra.mxu0 %v1184
        %v1299 = vpop.f32.mrf.mxu0
        %v1300 = vadd.f32 %v1088, %v1299
        %1301 = vmatmul.f32.gmra.mxu0 %v1187
        %v1302 = vpop.f32.mrf.mxu0
        %v1303 = vadd.f32 %v1091, %v1302
        %1304 = vmatmul.f32.gmra.mxu0 %v1190
        %v1305 = vpop.f32.mrf.mxu0
        %v1306 = vadd.f32 %v1094, %v1305
        %1307 = vmatmul.f32.gmra.mxu0 %v1193
        %v1308 = vpop.f32.mrf.mxu0
        %v1309 = vadd.f32 %v1097, %v1308
        %1310 = vmatmul.f32.gmra.mxu0 %v1196
        %v1311 = vpop.f32.mrf.mxu0
        %v1312 = vadd.f32 %v1100, %v1311
        %1313 = vdwg.mxu0
        %v1314 = vld [vmem:[#allocation2 + $0x2] sm:$0xff]
        %v1315 = vld [vmem:[#allocation2 + $0xa] sm:$0xff]
        %v1316 = vld [vmem:[#allocation2 + $0x1a] sm:$0xff]
        %v1317 = vld [vmem:[#allocation2 + $0x22] sm:$0xff]
        %v1318 = vld [vmem:[#allocation2 + $0x32] sm:$0xff]
        %v1319 = vld [vmem:[#allocation2 + $0x3a] sm:$0xff]
        %v1320 = vld [vmem:[#allocation2 + $0x4a] sm:$0xff]
        %v1321 = vld [vmem:[#allocation2 + $0x52] sm:$0xff]
        %v1322 = vld [vmem:[#allocation2 + $0x62] sm:$0xff]
        %v1323 = vld [vmem:[#allocation2 + $0x6a] sm:$0xff]
        %v1324 = vld [vmem:[#allocation2 + $0x7a] sm:$0xff]
        %v1325 = vld [vmem:[#allocation2 + $0x82] sm:$0xff]
        %v1326 = vld [vmem:[#allocation2 + $0x92] sm:$0xff]
        %v1327 = vld [vmem:[#allocation2 + $0x9a] sm:$0xff]
        %v1328 = vld [vmem:[#allocation2 + $0xaa] sm:$0xff]
        %v1329 = vld [vmem:[#allocation2 + $0xb2] sm:$0xff]
        %v1330 = vld [vmem:[#allocation2 + $0xc2] sm:$0xff]
        %v1331 = vld [vmem:[#allocation2 + $0xca] sm:$0xff]
        %v1332 = vld [vmem:[#allocation2 + $0xda] sm:$0xff]
        %v1333 = vld [vmem:[#allocation2 + $0xe2] sm:$0xff]
        %v1334 = vld [vmem:[#allocation2 + $0xf2] sm:$0xff]
        %v1335 = vld [vmem:[#allocation2 + $0xfa] sm:$0xff]
        %v1336 = vld [vmem:[#allocation2 + $0x10a] sm:$0xff]
        %v1337 = vld [vmem:[#allocation2 + $0x112] sm:$0xff]
        %v1338 = vld [vmem:[#allocation2 + $0x122] sm:$0xff]
        %v1339 = vld [vmem:[#allocation2 + $0x12a] sm:$0xff]
        %v1340 = vld [vmem:[#allocation2 + $0x13a] sm:$0xff]
        %v1341 = vld [vmem:[#allocation2 + $0x142] sm:$0xff]
        %v1342 = vld [vmem:[#allocation2 + $0x152] sm:$0xff]
        %v1343 = vld [vmem:[#allocation2 + $0x15a] sm:$0xff]
        %v1344 = vld [vmem:[#allocation2 + $0x16a] sm:$0xff]
        %v1345 = vld [vmem:[#allocation2 + $0x172] sm:$0xff]
        %v1347 = vsel %vm749, %v1314, 0
        %v1350 = vsel %vm749, %v1315, 0
        %v1353 = vsel %vm749, %v1316, 0
        %v1356 = vsel %vm749, %v1317, 0
        %v1359 = vsel %vm749, %v1318, 0
        %v1362 = vsel %vm749, %v1319, 0
        %v1365 = vsel %vm749, %v1320, 0
        %v1368 = vsel %vm749, %v1321, 0
        %v1371 = vsel %vm749, %v1322, 0
        %v1374 = vsel %vm749, %v1323, 0
        %v1377 = vsel %vm749, %v1324, 0
        %v1380 = vsel %vm749, %v1325, 0
        %v1383 = vsel %vm749, %v1326, 0
        %v1386 = vsel %vm749, %v1327, 0
        %v1389 = vsel %vm749, %v1328, 0
        %v1392 = vsel %vm749, %v1329, 0
        %v1395 = vsel %vm749, %v1330, 0
        %v1398 = vsel %vm749, %v1331, 0
        %v1401 = vsel %vm749, %v1332, 0
        %v1404 = vsel %vm749, %v1333, 0
        %v1407 = vsel %vm749, %v1334, 0
        %v1410 = vsel %vm749, %v1335, 0
        %v1413 = vsel %vm749, %v1336, 0
        %v1416 = vsel %vm749, %v1337, 0
        %v1419 = vsel %vm749, %v1338, 0
        %v1422 = vsel %vm749, %v1339, 0
        %v1425 = vsel %vm749, %v1340, 0
        %v1428 = vsel %vm749, %v1341, 0
        %v1431 = vsel %vm749, %v1342, 0
        %v1434 = vsel %vm749, %v1343, 0
        %v1437 = vsel %vm749, %v1344, 0
        %v1440 = vsel %vm749, %v1345, 0
        %v1443 = vsel %vm985, %v807, 0
        %1445 = vmatpush.msra.mxu0 0.0
        %1446 = vmatpush.msra.mxu0 0.0
        %1447 = vmatpush.msra.mxu0 0.0
        %1448 = vmatpush.msra.mxu0 0.0
        %1449 = vmatpush.msra.mxu0 0.0
        %1450 = vmatpush.msra.mxu0 0.0
        %1451 = vmatpush.msra.mxu0 0.0
        %1452 = vmatpush.msra.mxu0 0.0
        %1453 = vmatpush.msra.mxu0 0.0
        %1454 = vmatpush.msra.mxu0 0.0
        %1455 = vmatpush.msra.mxu0 0.0
        %1456 = vmatpush.msra.mxu0 0.0
        %1457 = vmatpush.msra.mxu0 0.0
        %1458 = vmatpush.msra.mxu0 0.0
        %1459 = vmatpush.msra.mxu0 0.0
        %1460 = vmatpush.msra.mxu0 %v1443
        %1461 = vmatmul.f32.gmra.mxu0 %v1347
        %v1462 = vpop.f32.mrf.mxu0
        %v1463 = vadd.f32 0.0, %v1462
        %1464 = vmatmul.f32.gmra.mxu0 %v1350
        %v1465 = vpop.f32.mrf.mxu0
        %v1466 = vadd.f32 0.0, %v1465
        %1467 = vmatmul.f32.gmra.mxu0 %v1353
        %v1468 = vpop.f32.mrf.mxu0
        %v1469 = vadd.f32 0.0, %v1468
        %1470 = vmatmul.f32.gmra.mxu0 %v1356
        %v1471 = vpop.f32.mrf.mxu0
        %v1472 = vadd.f32 0.0, %v1471
        %1473 = vmatmul.f32.gmra.mxu0 %v1359
        %v1474 = vpop.f32.mrf.mxu0
        %v1475 = vadd.f32 0.0, %v1474
        %1476 = vmatmul.f32.gmra.mxu0 %v1362
        %v1477 = vpop.f32.mrf.mxu0
        %v1478 = vadd.f32 0.0, %v1477
        %1479 = vmatmul.f32.gmra.mxu0 %v1365
        %v1480 = vpop.f32.mrf.mxu0
        %v1481 = vadd.f32 0.0, %v1480
        %1482 = vmatmul.f32.gmra.mxu0 %v1368
        %v1483 = vpop.f32.mrf.mxu0
        %v1484 = vadd.f32 0.0, %v1483
        %1485 = vmatmul.f32.gmra.mxu0 %v1371
        %v1486 = vpop.f32.mrf.mxu0
        %v1487 = vadd.f32 0.0, %v1486
        %1488 = vmatmul.f32.gmra.mxu0 %v1374
        %v1489 = vpop.f32.mrf.mxu0
        %v1490 = vadd.f32 0.0, %v1489
        %1491 = vmatmul.f32.gmra.mxu0 %v1377
        %v1492 = vpop.f32.mrf.mxu0
        %v1493 = vadd.f32 0.0, %v1492
        %1494 = vmatmul.f32.gmra.mxu0 %v1380
        %v1495 = vpop.f32.mrf.mxu0
        %v1496 = vadd.f32 0.0, %v1495
        %1497 = vmatmul.f32.gmra.mxu0 %v1383
        %v1498 = vpop.f32.mrf.mxu0
        %v1499 = vadd.f32 0.0, %v1498
        %1500 = vmatmul.f32.gmra.mxu0 %v1386
        %v1501 = vpop.f32.mrf.mxu0
        %v1502 = vadd.f32 0.0, %v1501
        %1503 = vmatmul.f32.gmra.mxu0 %v1389
        %v1504 = vpop.f32.mrf.mxu0
        %v1505 = vadd.f32 0.0, %v1504
        %1506 = vmatmul.f32.gmra.mxu0 %v1392
        %v1507 = vpop.f32.mrf.mxu0
        %v1508 = vadd.f32 0.0, %v1507
        %1509 = vmatmul.f32.gmra.mxu0 %v1395
        %v1510 = vpop.f32.mrf.mxu0
        %v1511 = vadd.f32 0.0, %v1510
        %1512 = vmatmul.f32.gmra.mxu0 %v1398
        %v1513 = vpop.f32.mrf.mxu0
        %v1514 = vadd.f32 0.0, %v1513
        %1515 = vmatmul.f32.gmra.mxu0 %v1401
        %v1516 = vpop.f32.mrf.mxu0
        %v1517 = vadd.f32 0.0, %v1516
        %1518 = vmatmul.f32.gmra.mxu0 %v1404
        %v1519 = vpop.f32.mrf.mxu0
        %v1520 = vadd.f32 0.0, %v1519
        %1521 = vmatmul.f32.gmra.mxu0 %v1407
        %v1522 = vpop.f32.mrf.mxu0
        %v1523 = vadd.f32 0.0, %v1522
        %1524 = vmatmul.f32.gmra.mxu0 %v1410
        %v1525 = vpop.f32.mrf.mxu0
        %v1526 = vadd.f32 0.0, %v1525
        %1527 = vmatmul.f32.gmra.mxu0 %v1413
        %v1528 = vpop.f32.mrf.mxu0
        %v1529 = vadd.f32 0.0, %v1528
        %1530 = vmatmul.f32.gmra.mxu0 %v1416
        %v1531 = vpop.f32.mrf.mxu0
        %v1532 = vadd.f32 0.0, %v1531
        %1533 = vmatmul.f32.gmra.mxu0 %v1419
        %v1534 = vpop.f32.mrf.mxu0
        %v1535 = vadd.f32 0.0, %v1534
        %1536 = vmatmul.f32.gmra.mxu0 %v1422
        %v1537 = vpop.f32.mrf.mxu0
        %v1538 = vadd.f32 0.0, %v1537
        %1539 = vmatmul.f32.gmra.mxu0 %v1425
        %v1540 = vpop.f32.mrf.mxu0
        %v1541 = vadd.f32 0.0, %v1540
        %1542 = vmatmul.f32.gmra.mxu0 %v1428
        %v1543 = vpop.f32.mrf.mxu0
        %v1544 = vadd.f32 0.0, %v1543
        %1545 = vmatmul.f32.gmra.mxu0 %v1431
        %v1546 = vpop.f32.mrf.mxu0
        %v1547 = vadd.f32 0.0, %v1546
        %1548 = vmatmul.f32.gmra.mxu0 %v1434
        %v1549 = vpop.f32.mrf.mxu0
        %v1550 = vadd.f32 0.0, %v1549
        %1551 = vmatmul.f32.gmra.mxu0 %v1437
        %v1552 = vpop.f32.mrf.mxu0
        %v1553 = vadd.f32 0.0, %v1552
        %1554 = vmatmul.f32.gmra.mxu0 %v1440
        %v1555 = vpop.f32.mrf.mxu0
        %v1556 = vadd.f32 0.0, %v1555
        %1557 = vdwg.mxu0
        %v1558 = vadd.f32 %v1219, %v1463
        %v1559 = vadd.f32 %v1222, %v1466
        %v1560 = vadd.f32 %v1225, %v1469
        %v1561 = vadd.f32 %v1228, %v1472
        %v1562 = vadd.f32 %v1231, %v1475
        %v1563 = vadd.f32 %v1234, %v1478
        %v1564 = vadd.f32 %v1237, %v1481
        %v1565 = vadd.f32 %v1240, %v1484
        %v1566 = vadd.f32 %v1243, %v1487
        %v1567 = vadd.f32 %v1246, %v1490
        %v1568 = vadd.f32 %v1249, %v1493
        %v1569 = vadd.f32 %v1252, %v1496
        %v1570 = vadd.f32 %v1255, %v1499
        %v1571 = vadd.f32 %v1258, %v1502
        %v1572 = vadd.f32 %v1261, %v1505
        %v1573 = vadd.f32 %v1264, %v1508
        %v1574 = vadd.f32 %v1267, %v1511
        %v1575 = vadd.f32 %v1270, %v1514
        %v1576 = vadd.f32 %v1273, %v1517
        %v1577 = vadd.f32 %v1276, %v1520
        %v1578 = vadd.f32 %v1279, %v1523
        %v1579 = vadd.f32 %v1282, %v1526
        %v1580 = vadd.f32 %v1285, %v1529
        %v1581 = vadd.f32 %v1288, %v1532
        %v1582 = vadd.f32 %v1291, %v1535
        %v1583 = vadd.f32 %v1294, %v1538
        %v1584 = vadd.f32 %v1297, %v1541
        %v1585 = vadd.f32 %v1300, %v1544
        %v1586 = vadd.f32 %v1303, %v1547
        %v1587 = vadd.f32 %v1306, %v1550
        %v1588 = vadd.f32 %v1309, %v1553
        %v1589 = vadd.f32 %v1312, %v1556
        %s1590 = scalar_lea.vmem [#allocation2], 24
        %v1591 = vld [vmem:[%s1590] sm:$0xff]
        %v1592 = vld [vmem:[%s1590 + $0x8] sm:$0xff]
        %v1593 = vld [vmem:[%s1590 + $0x18] sm:$0xff]
        %v1594 = vld [vmem:[%s1590 + $0x20] sm:$0xff]
        %v1595 = vld [vmem:[%s1590 + $0x30] sm:$0xff]
        %v1596 = vld [vmem:[%s1590 + $0x38] sm:$0xff]
        %v1597 = vld [vmem:[%s1590 + $0x48] sm:$0xff]
        %v1598 = vld [vmem:[%s1590 + $0x50] sm:$0xff]
        %v1599 = vld [vmem:[%s1590 + $0x60] sm:$0xff]
        %v1600 = vld [vmem:[%s1590 + $0x68] sm:$0xff]
        %v1601 = vld [vmem:[%s1590 + $0x78] sm:$0xff]
        %v1602 = vld [vmem:[%s1590 + $0x80] sm:$0xff]
        %v1603 = vld [vmem:[%s1590 + $0x90] sm:$0xff]
        %v1604 = vld [vmem:[%s1590 + $0x98] sm:$0xff]
        %v1605 = vld [vmem:[%s1590 + $0xa8] sm:$0xff]
        %v1606 = vld [vmem:[%s1590 + $0xb0] sm:$0xff]
        %v1607 = vld [vmem:[%s1590 + $0xc0] sm:$0xff]
        %v1608 = vld [vmem:[%s1590 + $0xc8] sm:$0xff]
        %v1609 = vld [vmem:[%s1590 + $0xd8] sm:$0xff]
        %v1610 = vld [vmem:[%s1590 + $0xe0] sm:$0xff]
        %v1611 = vld [vmem:[%s1590 + $0xf0] sm:$0xff]
        %v1612 = vld [vmem:[%s1590 + $0xf8] sm:$0xff]
        %v1613 = vld [vmem:[%s1590 + $0x108] sm:$0xff]
        %v1614 = vld [vmem:[%s1590 + $0x110] sm:$0xff]
        %v1615 = vld [vmem:[%s1590 + $0x120] sm:$0xff]
        %v1616 = vld [vmem:[%s1590 + $0x128] sm:$0xff]
        %v1617 = vld [vmem:[%s1590 + $0x138] sm:$0xff]
        %v1618 = vld [vmem:[%s1590 + $0x140] sm:$0xff]
        %v1619 = vld [vmem:[%s1590 + $0x150] sm:$0xff]
        %v1620 = vld [vmem:[%s1590 + $0x158] sm:$0xff]
        %v1621 = vld [vmem:[%s1590 + $0x168] sm:$0xff]
        %v1622 = vld [vmem:[%s1590 + $0x170] sm:$0xff]
        %v1624 = vsel %vm749, %v1591, 0
        %v1627 = vsel %vm749, %v1592, 0
        %v1630 = vsel %vm749, %v1593, 0
        %v1633 = vsel %vm749, %v1594, 0
        %v1636 = vsel %vm749, %v1595, 0
        %v1639 = vsel %vm749, %v1596, 0
        %v1642 = vsel %vm749, %v1597, 0
        %v1645 = vsel %vm749, %v1598, 0
        %v1648 = vsel %vm749, %v1599, 0
        %v1651 = vsel %vm749, %v1600, 0
        %v1654 = vsel %vm749, %v1601, 0
        %v1657 = vsel %vm749, %v1602, 0
        %v1660 = vsel %vm749, %v1603, 0
        %v1663 = vsel %vm749, %v1604, 0
        %v1666 = vsel %vm749, %v1605, 0
        %v1669 = vsel %vm749, %v1606, 0
        %v1672 = vsel %vm749, %v1607, 0
        %v1675 = vsel %vm749, %v1608, 0
        %v1678 = vsel %vm749, %v1609, 0
        %v1681 = vsel %vm749, %v1610, 0
        %v1684 = vsel %vm749, %v1611, 0
        %v1687 = vsel %vm749, %v1612, 0
        %v1690 = vsel %vm749, %v1613, 0
        %v1693 = vsel %vm749, %v1614, 0
        %v1696 = vsel %vm749, %v1615, 0
        %v1699 = vsel %vm749, %v1616, 0
        %v1702 = vsel %vm749, %v1617, 0
        %v1705 = vsel %vm749, %v1618, 0
        %v1708 = vsel %vm749, %v1619, 0
        %v1711 = vsel %vm749, %v1620, 0
        %v1714 = vsel %vm749, %v1621, 0
        %v1717 = vsel %vm749, %v1622, 0
        %v1720 = vsel %vm985, %v808, 0
        %1722 = vmatpush.msra.mxu0 0.0
        %1723 = vmatpush.msra.mxu0 0.0
        %1724 = vmatpush.msra.mxu0 0.0
        %1725 = vmatpush.msra.mxu0 0.0
        %1726 = vmatpush.msra.mxu0 0.0
        %1727 = vmatpush.msra.mxu0 0.0
        %1728 = vmatpush.msra.mxu0 0.0
        %1729 = vmatpush.msra.mxu0 0.0
        %1730 = vmatpush.msra.mxu0 0.0
        %1731 = vmatpush.msra.mxu0 0.0
        %1732 = vmatpush.msra.mxu0 0.0
        %1733 = vmatpush.msra.mxu0 0.0
        %1734 = vmatpush.msra.mxu0 0.0
        %1735 = vmatpush.msra.mxu0 0.0
        %1736 = vmatpush.msra.mxu0 0.0
        %1737 = vmatpush.msra.mxu0 %v1720
        %1738 = vmatmul.f32.gmra.mxu0 %v1624
        %v1739 = vpop.f32.mrf.mxu0
        %v1740 = vadd.f32 0.0, %v1739
        %1741 = vmatmul.f32.gmra.mxu0 %v1627
        %v1742 = vpop.f32.mrf.mxu0
        %v1743 = vadd.f32 0.0, %v1742
        %1744 = vmatmul.f32.gmra.mxu0 %v1630
        %v1745 = vpop.f32.mrf.mxu0
        %v1746 = vadd.f32 0.0, %v1745
        %1747 = vmatmul.f32.gmra.mxu0 %v1633
        %v1748 = vpop.f32.mrf.mxu0
        %v1749 = vadd.f32 0.0, %v1748
        %1750 = vmatmul.f32.gmra.mxu0 %v1636
        %v1751 = vpop.f32.mrf.mxu0
        %v1752 = vadd.f32 0.0, %v1751
        %1753 = vmatmul.f32.gmra.mxu0 %v1639
        %v1754 = vpop.f32.mrf.mxu0
        %v1755 = vadd.f32 0.0, %v1754
        %1756 = vmatmul.f32.gmra.mxu0 %v1642
        %v1757 = vpop.f32.mrf.mxu0
        %v1758 = vadd.f32 0.0, %v1757
        %1759 = vmatmul.f32.gmra.mxu0 %v1645
        %v1760 = vpop.f32.mrf.mxu0
        %v1761 = vadd.f32 0.0, %v1760
        %1762 = vmatmul.f32.gmra.mxu0 %v1648
        %v1763 = vpop.f32.mrf.mxu0
        %v1764 = vadd.f32 0.0, %v1763
        %1765 = vmatmul.f32.gmra.mxu0 %v1651
        %v1766 = vpop.f32.mrf.mxu0
        %v1767 = vadd.f32 0.0, %v1766
        %1768 = vmatmul.f32.gmra.mxu0 %v1654
        %v1769 = vpop.f32.mrf.mxu0
        %v1770 = vadd.f32 0.0, %v1769
        %1771 = vmatmul.f32.gmra.mxu0 %v1657
        %v1772 = vpop.f32.mrf.mxu0
        %v1773 = vadd.f32 0.0, %v1772
        %1774 = vmatmul.f32.gmra.mxu0 %v1660
        %v1775 = vpop.f32.mrf.mxu0
        %v1776 = vadd.f32 0.0, %v1775
        %1777 = vmatmul.f32.gmra.mxu0 %v1663
        %v1778 = vpop.f32.mrf.mxu0
        %v1779 = vadd.f32 0.0, %v1778
        %1780 = vmatmul.f32.gmra.mxu0 %v1666
        %v1781 = vpop.f32.mrf.mxu0
        %v1782 = vadd.f32 0.0, %v1781
        %1783 = vmatmul.f32.gmra.mxu0 %v1669
        %v1784 = vpop.f32.mrf.mxu0
        %v1785 = vadd.f32 0.0, %v1784
        %1786 = vmatmul.f32.gmra.mxu0 %v1672
        %v1787 = vpop.f32.mrf.mxu0
        %v1788 = vadd.f32 0.0, %v1787
        %1789 = vmatmul.f32.gmra.mxu0 %v1675
        %v1790 = vpop.f32.mrf.mxu0
        %v1791 = vadd.f32 0.0, %v1790
        %1792 = vmatmul.f32.gmra.mxu0 %v1678
        %v1793 = vpop.f32.mrf.mxu0
        %v1794 = vadd.f32 0.0, %v1793
        %1795 = vmatmul.f32.gmra.mxu0 %v1681
        %v1796 = vpop.f32.mrf.mxu0
        %v1797 = vadd.f32 0.0, %v1796
        %1798 = vmatmul.f32.gmra.mxu0 %v1684
        %v1799 = vpop.f32.mrf.mxu0
        %v1800 = vadd.f32 0.0, %v1799
        %1801 = vmatmul.f32.gmra.mxu0 %v1687
        %v1802 = vpop.f32.mrf.mxu0
        %v1803 = vadd.f32 0.0, %v1802
        %1804 = vmatmul.f32.gmra.mxu0 %v1690
        %v1805 = vpop.f32.mrf.mxu0
        %v1806 = vadd.f32 0.0, %v1805
        %1807 = vmatmul.f32.gmra.mxu0 %v1693
        %v1808 = vpop.f32.mrf.mxu0
        %v1809 = vadd.f32 0.0, %v1808
        %1810 = vmatmul.f32.gmra.mxu0 %v1696
        %v1811 = vpop.f32.mrf.mxu0
        %v1812 = vadd.f32 0.0, %v1811
        %1813 = vmatmul.f32.gmra.mxu0 %v1699
        %v1814 = vpop.f32.mrf.mxu0
        %v1815 = vadd.f32 0.0, %v1814
        %1816 = vmatmul.f32.gmra.mxu0 %v1702
        %v1817 = vpop.f32.mrf.mxu0
        %v1818 = vadd.f32 0.0, %v1817
        %1819 = vmatmul.f32.gmra.mxu0 %v1705
        %v1820 = vpop.f32.mrf.mxu0
        %v1821 = vadd.f32 0.0, %v1820
        %1822 = vmatmul.f32.gmra.mxu0 %v1708
        %v1823 = vpop.f32.mrf.mxu0
        %v1824 = vadd.f32 0.0, %v1823
        %1825 = vmatmul.f32.gmra.mxu0 %v1711
        %v1826 = vpop.f32.mrf.mxu0
        %v1827 = vadd.f32 0.0, %v1826
        %1828 = vmatmul.f32.gmra.mxu0 %v1714
        %v1829 = vpop.f32.mrf.mxu0
        %v1830 = vadd.f32 0.0, %v1829
        %1831 = vmatmul.f32.gmra.mxu0 %v1717
        %v1832 = vpop.f32.mrf.mxu0
        %v1833 = vadd.f32 0.0, %v1832
        %1834 = vdwg.mxu0
        %v1835 = vadd.f32 %v1558, %v1740
        %v1836 = vadd.f32 %v1559, %v1743
        %v1837 = vadd.f32 %v1560, %v1746
        %v1838 = vadd.f32 %v1561, %v1749
        %v1839 = vadd.f32 %v1562, %v1752
        %v1840 = vadd.f32 %v1563, %v1755
        %v1841 = vadd.f32 %v1564, %v1758
        %v1842 = vadd.f32 %v1565, %v1761
        %v1843 = vadd.f32 %v1566, %v1764
        %v1844 = vadd.f32 %v1567, %v1767
        %v1845 = vadd.f32 %v1568, %v1770
        %v1846 = vadd.f32 %v1569, %v1773
        %v1847 = vadd.f32 %v1570, %v1776
        %v1848 = vadd.f32 %v1571, %v1779
        %v1849 = vadd.f32 %v1572, %v1782
        %v1850 = vadd.f32 %v1573, %v1785
        %v1851 = vadd.f32 %v1574, %v1788
        %v1852 = vadd.f32 %v1575, %v1791
        %v1853 = vadd.f32 %v1576, %v1794
        %v1854 = vadd.f32 %v1577, %v1797
        %v1855 = vadd.f32 %v1578, %v1800
        %v1856 = vadd.f32 %v1579, %v1803
        %v1857 = vadd.f32 %v1580, %v1806
        %v1858 = vadd.f32 %v1581, %v1809
        %v1859 = vadd.f32 %v1582, %v1812
        %v1860 = vadd.f32 %v1583, %v1815
        %v1861 = vadd.f32 %v1584, %v1818
        %v1862 = vadd.f32 %v1585, %v1821
        %v1863 = vadd.f32 %v1586, %v1824
        %v1864 = vadd.f32 %v1587, %v1827
        %v1865 = vadd.f32 %v1588, %v1830
        %v1866 = vadd.f32 %v1589, %v1833
        %v1867 = vld [vmem:[%s1590 + $0x1] sm:$0xff]
        %v1868 = vld [vmem:[%s1590 + $0x9] sm:$0xff]
        %v1869 = vld [vmem:[%s1590 + $0x19] sm:$0xff]
        %v1870 = vld [vmem:[%s1590 + $0x21] sm:$0xff]
        %v1871 = vld [vmem:[%s1590 + $0x31] sm:$0xff]
        %v1872 = vld [vmem:[%s1590 + $0x39] sm:$0xff]
        %v1873 = vld [vmem:[%s1590 + $0x49] sm:$0xff]
        %v1874 = vld [vmem:[%s1590 + $0x51] sm:$0xff]
        %v1875 = vld [vmem:[%s1590 + $0x61] sm:$0xff]
        %v1876 = vld [vmem:[%s1590 + $0x69] sm:$0xff]
        %v1877 = vld [vmem:[%s1590 + $0x79] sm:$0xff]
        %v1878 = vld [vmem:[%s1590 + $0x81] sm:$0xff]
        %v1879 = vld [vmem:[%s1590 + $0x91] sm:$0xff]
        %v1880 = vld [vmem:[%s1590 + $0x99] sm:$0xff]
        %v1881 = vld [vmem:[%s1590 + $0xa9] sm:$0xff]
        %v1882 = vld [vmem:[%s1590 + $0xb1] sm:$0xff]
        %v1883 = vld [vmem:[%s1590 + $0xc1] sm:$0xff]
        %v1884 = vld [vmem:[%s1590 + $0xc9] sm:$0xff]
        %v1885 = vld [vmem:[%s1590 + $0xd9] sm:$0xff]
        %v1886 = vld [vmem:[%s1590 + $0xe1] sm:$0xff]
        %v1887 = vld [vmem:[%s1590 + $0xf1] sm:$0xff]
        %v1888 = vld [vmem:[%s1590 + $0xf9] sm:$0xff]
        %v1889 = vld [vmem:[%s1590 + $0x109] sm:$0xff]
        %v1890 = vld [vmem:[%s1590 + $0x111] sm:$0xff]
        %v1891 = vld [vmem:[%s1590 + $0x121] sm:$0xff]
        %v1892 = vld [vmem:[%s1590 + $0x129] sm:$0xff]
        %v1893 = vld [vmem:[%s1590 + $0x139] sm:$0xff]
        %v1894 = vld [vmem:[%s1590 + $0x141] sm:$0xff]
        %v1895 = vld [vmem:[%s1590 + $0x151] sm:$0xff]
        %v1896 = vld [vmem:[%s1590 + $0x159] sm:$0xff]
        %v1897 = vld [vmem:[%s1590 + $0x169] sm:$0xff]
        %v1898 = vld [vmem:[%s1590 + $0x171] sm:$0xff]
        %v1900 = vsel %vm749, %v1867, 0
        %v1903 = vsel %vm749, %v1868, 0
        %v1906 = vsel %vm749, %v1869, 0
        %v1909 = vsel %vm749, %v1870, 0
        %v1912 = vsel %vm749, %v1871, 0
        %v1915 = vsel %vm749, %v1872, 0
        %v1918 = vsel %vm749, %v1873, 0
        %v1921 = vsel %vm749, %v1874, 0
        %v1924 = vsel %vm749, %v1875, 0
        %v1927 = vsel %vm749, %v1876, 0
        %v1930 = vsel %vm749, %v1877, 0
        %v1933 = vsel %vm749, %v1878, 0
        %v1936 = vsel %vm749, %v1879, 0
        %v1939 = vsel %vm749, %v1880, 0
        %v1942 = vsel %vm749, %v1881, 0
        %v1945 = vsel %vm749, %v1882, 0
        %v1948 = vsel %vm749, %v1883, 0
        %v1951 = vsel %vm749, %v1884, 0
        %v1954 = vsel %vm749, %v1885, 0
        %v1957 = vsel %vm749, %v1886, 0
        %v1960 = vsel %vm749, %v1887, 0
        %v1963 = vsel %vm749, %v1888, 0
        %v1966 = vsel %vm749, %v1889, 0
        %v1969 = vsel %vm749, %v1890, 0
        %v1972 = vsel %vm749, %v1891, 0
        %v1975 = vsel %vm749, %v1892, 0
        %v1978 = vsel %vm749, %v1893, 0
        %v1981 = vsel %vm749, %v1894, 0
        %v1984 = vsel %vm749, %v1895, 0
        %v1987 = vsel %vm749, %v1896, 0
        %v1990 = vsel %vm749, %v1897, 0
        %v1993 = vsel %vm749, %v1898, 0
        %v1996 = vsel %vm985, %v809, 0
        %1998 = vmatpush.msra.mxu0 0.0
        %1999 = vmatpush.msra.mxu0 0.0
        %2000 = vmatpush.msra.mxu0 0.0
        %2001 = vmatpush.msra.mxu0 0.0
        %2002 = vmatpush.msra.mxu0 0.0
        %2003 = vmatpush.msra.mxu0 0.0
        %2004 = vmatpush.msra.mxu0 0.0
        %2005 = vmatpush.msra.mxu0 0.0
        %2006 = vmatpush.msra.mxu0 0.0
        %2007 = vmatpush.msra.mxu0 0.0
        %2008 = vmatpush.msra.mxu0 0.0
        %2009 = vmatpush.msra.mxu0 0.0
        %2010 = vmatpush.msra.mxu0 0.0
        %2011 = vmatpush.msra.mxu0 0.0
        %2012 = vmatpush.msra.mxu0 0.0
        %2013 = vmatpush.msra.mxu0 %v1996
        %2014 = vmatmul.f32.gmra.mxu0 %v1900
        %v2015 = vpop.f32.mrf.mxu0
        %v2016 = vadd.f32 0.0, %v2015
        %2017 = vmatmul.f32.gmra.mxu0 %v1903
        %v2018 = vpop.f32.mrf.mxu0
        %v2019 = vadd.f32 0.0, %v2018
        %2020 = vmatmul.f32.gmra.mxu0 %v1906
        %v2021 = vpop.f32.mrf.mxu0
        %v2022 = vadd.f32 0.0, %v2021
        %2023 = vmatmul.f32.gmra.mxu0 %v1909
        %v2024 = vpop.f32.mrf.mxu0
        %v2025 = vadd.f32 0.0, %v2024
        %2026 = vmatmul.f32.gmra.mxu0 %v1912
        %v2027 = vpop.f32.mrf.mxu0
        %v2028 = vadd.f32 0.0, %v2027
        %2029 = vmatmul.f32.gmra.mxu0 %v1915
        %v2030 = vpop.f32.mrf.mxu0
        %v2031 = vadd.f32 0.0, %v2030
        %2032 = vmatmul.f32.gmra.mxu0 %v1918
        %v2033 = vpop.f32.mrf.mxu0
        %v2034 = vadd.f32 0.0, %v2033
        %2035 = vmatmul.f32.gmra.mxu0 %v1921
        %v2036 = vpop.f32.mrf.mxu0
        %v2037 = vadd.f32 0.0, %v2036
        %2038 = vmatmul.f32.gmra.mxu0 %v1924
        %v2039 = vpop.f32.mrf.mxu0
        %v2040 = vadd.f32 0.0, %v2039
        %2041 = vmatmul.f32.gmra.mxu0 %v1927
        %v2042 = vpop.f32.mrf.mxu0
        %v2043 = vadd.f32 0.0, %v2042
        %2044 = vmatmul.f32.gmra.mxu0 %v1930
        %v2045 = vpop.f32.mrf.mxu0
        %v2046 = vadd.f32 0.0, %v2045
        %2047 = vmatmul.f32.gmra.mxu0 %v1933
        %v2048 = vpop.f32.mrf.mxu0
        %v2049 = vadd.f32 0.0, %v2048
        %2050 = vmatmul.f32.gmra.mxu0 %v1936
        %v2051 = vpop.f32.mrf.mxu0
        %v2052 = vadd.f32 0.0, %v2051
        %2053 = vmatmul.f32.gmra.mxu0 %v1939
        %v2054 = vpop.f32.mrf.mxu0
        %v2055 = vadd.f32 0.0, %v2054
        %2056 = vmatmul.f32.gmra.mxu0 %v1942
        %v2057 = vpop.f32.mrf.mxu0
        %v2058 = vadd.f32 0.0, %v2057
        %2059 = vmatmul.f32.gmra.mxu0 %v1945
        %v2060 = vpop.f32.mrf.mxu0
        %v2061 = vadd.f32 0.0, %v2060
        %2062 = vmatmul.f32.gmra.mxu0 %v1948
        %v2063 = vpop.f32.mrf.mxu0
        %v2064 = vadd.f32 0.0, %v2063
        %2065 = vmatmul.f32.gmra.mxu0 %v1951
        %v2066 = vpop.f32.mrf.mxu0
        %v2067 = vadd.f32 0.0, %v2066
        %2068 = vmatmul.f32.gmra.mxu0 %v1954
        %v2069 = vpop.f32.mrf.mxu0
        %v2070 = vadd.f32 0.0, %v2069
        %2071 = vmatmul.f32.gmra.mxu0 %v1957
        %v2072 = vpop.f32.mrf.mxu0
        %v2073 = vadd.f32 0.0, %v2072
        %2074 = vmatmul.f32.gmra.mxu0 %v1960
        %v2075 = vpop.f32.mrf.mxu0
        %v2076 = vadd.f32 0.0, %v2075
        %2077 = vmatmul.f32.gmra.mxu0 %v1963
        %v2078 = vpop.f32.mrf.mxu0
        %v2079 = vadd.f32 0.0, %v2078
        %2080 = vmatmul.f32.gmra.mxu0 %v1966
        %v2081 = vpop.f32.mrf.mxu0
        %v2082 = vadd.f32 0.0, %v2081
        %2083 = vmatmul.f32.gmra.mxu0 %v1969
        %v2084 = vpop.f32.mrf.mxu0
        %v2085 = vadd.f32 0.0, %v2084
        %2086 = vmatmul.f32.gmra.mxu0 %v1972
        %v2087 = vpop.f32.mrf.mxu0
        %v2088 = vadd.f32 0.0, %v2087
        %2089 = vmatmul.f32.gmra.mxu0 %v1975
        %v2090 = vpop.f32.mrf.mxu0
        %v2091 = vadd.f32 0.0, %v2090
        %2092 = vmatmul.f32.gmra.mxu0 %v1978
        %v2093 = vpop.f32.mrf.mxu0
        %v2094 = vadd.f32 0.0, %v2093
        %2095 = vmatmul.f32.gmra.mxu0 %v1981
        %v2096 = vpop.f32.mrf.mxu0
        %v2097 = vadd.f32 0.0, %v2096
        %2098 = vmatmul.f32.gmra.mxu0 %v1984
        %v2099 = vpop.f32.mrf.mxu0
        %v2100 = vadd.f32 0.0, %v2099
        %2101 = vmatmul.f32.gmra.mxu0 %v1987
        %v2102 = vpop.f32.mrf.mxu0
        %v2103 = vadd.f32 0.0, %v2102
        %2104 = vmatmul.f32.gmra.mxu0 %v1990
        %v2105 = vpop.f32.mrf.mxu0
        %v2106 = vadd.f32 0.0, %v2105
        %2107 = vmatmul.f32.gmra.mxu0 %v1993
        %v2108 = vpop.f32.mrf.mxu0
        %v2109 = vadd.f32 0.0, %v2108
        %2110 = vdwg.mxu0
        %v2111 = vadd.f32 %v1835, %v2016
        %v2112 = vadd.f32 %v1836, %v2019
        %v2113 = vadd.f32 %v1837, %v2022
        %v2114 = vadd.f32 %v1838, %v2025
        %v2115 = vadd.f32 %v1839, %v2028
        %v2116 = vadd.f32 %v1840, %v2031
        %v2117 = vadd.f32 %v1841, %v2034
        %v2118 = vadd.f32 %v1842, %v2037
        %v2119 = vadd.f32 %v1843, %v2040
        %v2120 = vadd.f32 %v1844, %v2043
        %v2121 = vadd.f32 %v1845, %v2046
        %v2122 = vadd.f32 %v1846, %v2049
        %v2123 = vadd.f32 %v1847, %v2052
        %v2124 = vadd.f32 %v1848, %v2055
        %v2125 = vadd.f32 %v1849, %v2058
        %v2126 = vadd.f32 %v1850, %v2061
        %v2127 = vadd.f32 %v1851, %v2064
        %v2128 = vadd.f32 %v1852, %v2067
        %v2129 = vadd.f32 %v1853, %v2070
        %v2130 = vadd.f32 %v1854, %v2073
        %v2131 = vadd.f32 %v1855, %v2076
        %v2132 = vadd.f32 %v1856, %v2079
        %v2133 = vadd.f32 %v1857, %v2082
        %v2134 = vadd.f32 %v1858, %v2085
        %v2135 = vadd.f32 %v1859, %v2088
        %v2136 = vadd.f32 %v1860, %v2091
        %v2137 = vadd.f32 %v1861, %v2094
        %v2138 = vadd.f32 %v1862, %v2097
        %v2139 = vadd.f32 %v1863, %v2100
        %v2140 = vadd.f32 %v1864, %v2103
        %v2141 = vadd.f32 %v1865, %v2106
        %v2142 = vadd.f32 %v1866, %v2109
        %v2143 = vld [vmem:[%s1590 + $0x2] sm:$0xff]
        %v2144 = vld [vmem:[%s1590 + $0xa] sm:$0xff]
        %v2145 = vld [vmem:[%s1590 + $0x1a] sm:$0xff]
        %v2146 = vld [vmem:[%s1590 + $0x22] sm:$0xff]
        %v2147 = vld [vmem:[%s1590 + $0x32] sm:$0xff]
        %v2148 = vld [vmem:[%s1590 + $0x3a] sm:$0xff]
        %v2149 = vld [vmem:[%s1590 + $0x4a] sm:$0xff]
        %v2150 = vld [vmem:[%s1590 + $0x52] sm:$0xff]
        %v2151 = vld [vmem:[%s1590 + $0x62] sm:$0xff]
        %v2152 = vld [vmem:[%s1590 + $0x6a] sm:$0xff]
        %v2153 = vld [vmem:[%s1590 + $0x7a] sm:$0xff]
        %v2154 = vld [vmem:[%s1590 + $0x82] sm:$0xff]
        %v2155 = vld [vmem:[%s1590 + $0x92] sm:$0xff]
        %v2156 = vld [vmem:[%s1590 + $0x9a] sm:$0xff]
        %v2157 = vld [vmem:[%s1590 + $0xaa] sm:$0xff]
        %v2158 = vld [vmem:[%s1590 + $0xb2] sm:$0xff]
        %v2159 = vld [vmem:[%s1590 + $0xc2] sm:$0xff]
        %v2160 = vld [vmem:[%s1590 + $0xca] sm:$0xff]
        %v2161 = vld [vmem:[%s1590 + $0xda] sm:$0xff]
        %v2162 = vld [vmem:[%s1590 + $0xe2] sm:$0xff]
        %v2163 = vld [vmem:[%s1590 + $0xf2] sm:$0xff]
        %v2164 = vld [vmem:[%s1590 + $0xfa] sm:$0xff]
        %v2165 = vld [vmem:[%s1590 + $0x10a] sm:$0xff]
        %v2166 = vld [vmem:[%s1590 + $0x112] sm:$0xff]
        %v2167 = vld [vmem:[%s1590 + $0x122] sm:$0xff]
        %v2168 = vld [vmem:[%s1590 + $0x12a] sm:$0xff]
        %v2169 = vld [vmem:[%s1590 + $0x13a] sm:$0xff]
        %v2170 = vld [vmem:[%s1590 + $0x142] sm:$0xff]
        %v2171 = vld [vmem:[%s1590 + $0x152] sm:$0xff]
        %v2172 = vld [vmem:[%s1590 + $0x15a] sm:$0xff]
        %v2173 = vld [vmem:[%s1590 + $0x16a] sm:$0xff]
        %v2174 = vld [vmem:[%s1590 + $0x172] sm:$0xff]
        %v2176 = vsel %vm749, %v2143, 0
        %v2179 = vsel %vm749, %v2144, 0
        %v2182 = vsel %vm749, %v2145, 0
        %v2185 = vsel %vm749, %v2146, 0
        %v2188 = vsel %vm749, %v2147, 0
        %v2191 = vsel %vm749, %v2148, 0
        %v2194 = vsel %vm749, %v2149, 0
        %v2197 = vsel %vm749, %v2150, 0
        %v2200 = vsel %vm749, %v2151, 0
        %v2203 = vsel %vm749, %v2152, 0
        %v2206 = vsel %vm749, %v2153, 0
        %v2209 = vsel %vm749, %v2154, 0
        %v2212 = vsel %vm749, %v2155, 0
        %v2215 = vsel %vm749, %v2156, 0
        %v2218 = vsel %vm749, %v2157, 0
        %v2221 = vsel %vm749, %v2158, 0
        %v2224 = vsel %vm749, %v2159, 0
        %v2227 = vsel %vm749, %v2160, 0
        %v2230 = vsel %vm749, %v2161, 0
        %v2233 = vsel %vm749, %v2162, 0
        %v2236 = vsel %vm749, %v2163, 0
        %v2239 = vsel %vm749, %v2164, 0
        %v2242 = vsel %vm749, %v2165, 0
        %v2245 = vsel %vm749, %v2166, 0
        %v2248 = vsel %vm749, %v2167, 0
        %v2251 = vsel %vm749, %v2168, 0
        %v2254 = vsel %vm749, %v2169, 0
        %v2257 = vsel %vm749, %v2170, 0
        %v2260 = vsel %vm749, %v2171, 0
        %v2263 = vsel %vm749, %v2172, 0
        %v2266 = vsel %vm749, %v2173, 0
        %v2269 = vsel %vm749, %v2174, 0
        %v2272 = vsel %vm985, %v810, 0
        %2274 = vmatpush.msra.mxu0 0.0
        %2275 = vmatpush.msra.mxu0 0.0
        %2276 = vmatpush.msra.mxu0 0.0
        %2277 = vmatpush.msra.mxu0 0.0
        %2278 = vmatpush.msra.mxu0 0.0
        %2279 = vmatpush.msra.mxu0 0.0
        %2280 = vmatpush.msra.mxu0 0.0
        %2281 = vmatpush.msra.mxu0 0.0
        %2282 = vmatpush.msra.mxu0 0.0
        %2283 = vmatpush.msra.mxu0 0.0
        %2284 = vmatpush.msra.mxu0 0.0
        %2285 = vmatpush.msra.mxu0 0.0
        %2286 = vmatpush.msra.mxu0 0.0
        %2287 = vmatpush.msra.mxu0 0.0
        %2288 = vmatpush.msra.mxu0 0.0
        %2289 = vmatpush.msra.mxu0 %v2272
        %2290 = vmatmul.f32.gmra.mxu0 %v2176
        %v2291 = vpop.f32.mrf.mxu0
        %v2292 = vadd.f32 0.0, %v2291
        %2293 = vmatmul.f32.gmra.mxu0 %v2179
        %v2294 = vpop.f32.mrf.mxu0
        %v2295 = vadd.f32 0.0, %v2294
        %2296 = vmatmul.f32.gmra.mxu0 %v2182
        %v2297 = vpop.f32.mrf.mxu0
        %v2298 = vadd.f32 0.0, %v2297
        %2299 = vmatmul.f32.gmra.mxu0 %v2185
        %v2300 = vpop.f32.mrf.mxu0
        %v2301 = vadd.f32 0.0, %v2300
        %2302 = vmatmul.f32.gmra.mxu0 %v2188
        %v2303 = vpop.f32.mrf.mxu0
        %v2304 = vadd.f32 0.0, %v2303
        %2305 = vmatmul.f32.gmra.mxu0 %v2191
        %v2306 = vpop.f32.mrf.mxu0
        %v2307 = vadd.f32 0.0, %v2306
        %2308 = vmatmul.f32.gmra.mxu0 %v2194
        %v2309 = vpop.f32.mrf.mxu0
        %v2310 = vadd.f32 0.0, %v2309
        %2311 = vmatmul.f32.gmra.mxu0 %v2197
        %v2312 = vpop.f32.mrf.mxu0
        %v2313 = vadd.f32 0.0, %v2312
        %2314 = vmatmul.f32.gmra.mxu0 %v2200
        %v2315 = vpop.f32.mrf.mxu0
        %v2316 = vadd.f32 0.0, %v2315
        %2317 = vmatmul.f32.gmra.mxu0 %v2203
        %v2318 = vpop.f32.mrf.mxu0
        %v2319 = vadd.f32 0.0, %v2318
        %2320 = vmatmul.f32.gmra.mxu0 %v2206
        %v2321 = vpop.f32.mrf.mxu0
        %v2322 = vadd.f32 0.0, %v2321
        %2323 = vmatmul.f32.gmra.mxu0 %v2209
        %v2324 = vpop.f32.mrf.mxu0
        %v2325 = vadd.f32 0.0, %v2324
        %2326 = vmatmul.f32.gmra.mxu0 %v2212
        %v2327 = vpop.f32.mrf.mxu0
        %v2328 = vadd.f32 0.0, %v2327
        %2329 = vmatmul.f32.gmra.mxu0 %v2215
        %v2330 = vpop.f32.mrf.mxu0
        %v2331 = vadd.f32 0.0, %v2330
        %2332 = vmatmul.f32.gmra.mxu0 %v2218
        %v2333 = vpop.f32.mrf.mxu0
        %v2334 = vadd.f32 0.0, %v2333
        %2335 = vmatmul.f32.gmra.mxu0 %v2221
        %v2336 = vpop.f32.mrf.mxu0
        %v2337 = vadd.f32 0.0, %v2336
        %2338 = vmatmul.f32.gmra.mxu0 %v2224
        %v2339 = vpop.f32.mrf.mxu0
        %v2340 = vadd.f32 0.0, %v2339
        %2341 = vmatmul.f32.gmra.mxu0 %v2227
        %v2342 = vpop.f32.mrf.mxu0
        %v2343 = vadd.f32 0.0, %v2342
        %2344 = vmatmul.f32.gmra.mxu0 %v2230
        %v2345 = vpop.f32.mrf.mxu0
        %v2346 = vadd.f32 0.0, %v2345
        %2347 = vmatmul.f32.gmra.mxu0 %v2233
        %v2348 = vpop.f32.mrf.mxu0
        %v2349 = vadd.f32 0.0, %v2348
        %2350 = vmatmul.f32.gmra.mxu0 %v2236
        %v2351 = vpop.f32.mrf.mxu0
        %v2352 = vadd.f32 0.0, %v2351
        %2353 = vmatmul.f32.gmra.mxu0 %v2239
        %v2354 = vpop.f32.mrf.mxu0
        %v2355 = vadd.f32 0.0, %v2354
        %2356 = vmatmul.f32.gmra.mxu0 %v2242
        %v2357 = vpop.f32.mrf.mxu0
        %v2358 = vadd.f32 0.0, %v2357
        %2359 = vmatmul.f32.gmra.mxu0 %v2245
        %v2360 = vpop.f32.mrf.mxu0
        %v2361 = vadd.f32 0.0, %v2360
        %2362 = vmatmul.f32.gmra.mxu0 %v2248
        %v2363 = vpop.f32.mrf.mxu0
        %v2364 = vadd.f32 0.0, %v2363
        %2365 = vmatmul.f32.gmra.mxu0 %v2251
        %v2366 = vpop.f32.mrf.mxu0
        %v2367 = vadd.f32 0.0, %v2366
        %2368 = vmatmul.f32.gmra.mxu0 %v2254
        %v2369 = vpop.f32.mrf.mxu0
        %v2370 = vadd.f32 0.0, %v2369
        %2371 = vmatmul.f32.gmra.mxu0 %v2257
        %v2372 = vpop.f32.mrf.mxu0
        %v2373 = vadd.f32 0.0, %v2372
        %2374 = vmatmul.f32.gmra.mxu0 %v2260
        %v2375 = vpop.f32.mrf.mxu0
        %v2376 = vadd.f32 0.0, %v2375
        %2377 = vmatmul.f32.gmra.mxu0 %v2263
        %v2378 = vpop.f32.mrf.mxu0
        %v2379 = vadd.f32 0.0, %v2378
        %2380 = vmatmul.f32.gmra.mxu0 %v2266
        %v2381 = vpop.f32.mrf.mxu0
        %v2382 = vadd.f32 0.0, %v2381
        %2383 = vmatmul.f32.gmra.mxu0 %v2269
        %v2384 = vpop.f32.mrf.mxu0
        %v2385 = vadd.f32 0.0, %v2384
        %2386 = vdwg.mxu0
        %v2387 = vadd.f32 %v2111, %v2292
        %v2388 = vadd.f32 %v2112, %v2295
        %v2389 = vadd.f32 %v2113, %v2298
        %v2390 = vadd.f32 %v2114, %v2301
        %v2391 = vadd.f32 %v2115, %v2304
        %v2392 = vadd.f32 %v2116, %v2307
        %v2393 = vadd.f32 %v2117, %v2310
        %v2394 = vadd.f32 %v2118, %v2313
        %v2395 = vadd.f32 %v2119, %v2316
        %v2396 = vadd.f32 %v2120, %v2319
        %v2397 = vadd.f32 %v2121, %v2322
        %v2398 = vadd.f32 %v2122, %v2325
        %v2399 = vadd.f32 %v2123, %v2328
        %v2400 = vadd.f32 %v2124, %v2331
        %v2401 = vadd.f32 %v2125, %v2334
        %v2402 = vadd.f32 %v2126, %v2337
        %v2403 = vadd.f32 %v2127, %v2340
        %v2404 = vadd.f32 %v2128, %v2343
        %v2405 = vadd.f32 %v2129, %v2346
        %v2406 = vadd.f32 %v2130, %v2349
        %v2407 = vadd.f32 %v2131, %v2352
        %v2408 = vadd.f32 %v2132, %v2355
        %v2409 = vadd.f32 %v2133, %v2358
        %v2410 = vadd.f32 %v2134, %v2361
        %v2411 = vadd.f32 %v2135, %v2364
        %v2412 = vadd.f32 %v2136, %v2367
        %v2413 = vadd.f32 %v2137, %v2370
        %v2414 = vadd.f32 %v2138, %v2373
        %v2415 = vadd.f32 %v2139, %v2376
        %v2416 = vadd.f32 %v2140, %v2379
        %v2417 = vadd.f32 %v2141, %v2382
        %v2418 = vadd.f32 %v2142, %v2385
        %s2419 = scalar_lea.vmem [#allocation2], 48
        %v2420 = vld [vmem:[%s2419] sm:$0xff]
        %v2421 = vld [vmem:[%s2419 + $0x8] sm:$0xff]
        %v2422 = vld [vmem:[%s2419 + $0x18] sm:$0xff]
        %v2423 = vld [vmem:[%s2419 + $0x20] sm:$0xff]
        %v2424 = vld [vmem:[%s2419 + $0x30] sm:$0xff]
        %v2425 = vld [vmem:[%s2419 + $0x38] sm:$0xff]
        %v2426 = vld [vmem:[%s2419 + $0x48] sm:$0xff]
        %v2427 = vld [vmem:[%s2419 + $0x50] sm:$0xff]
        %v2428 = vld [vmem:[%s2419 + $0x60] sm:$0xff]
        %v2429 = vld [vmem:[%s2419 + $0x68] sm:$0xff]
        %v2430 = vld [vmem:[%s2419 + $0x78] sm:$0xff]
        %v2431 = vld [vmem:[%s2419 + $0x80] sm:$0xff]
        %v2432 = vld [vmem:[%s2419 + $0x90] sm:$0xff]
        %v2433 = vld [vmem:[%s2419 + $0x98] sm:$0xff]
        %v2434 = vld [vmem:[%s2419 + $0xa8] sm:$0xff]
        %v2435 = vld [vmem:[%s2419 + $0xb0] sm:$0xff]
        %v2436 = vld [vmem:[%s2419 + $0xc0] sm:$0xff]
        %v2437 = vld [vmem:[%s2419 + $0xc8] sm:$0xff]
        %v2438 = vld [vmem:[%s2419 + $0xd8] sm:$0xff]
        %v2439 = vld [vmem:[%s2419 + $0xe0] sm:$0xff]
        %v2440 = vld [vmem:[%s2419 + $0xf0] sm:$0xff]
        %v2441 = vld [vmem:[%s2419 + $0xf8] sm:$0xff]
        %v2442 = vld [vmem:[%s2419 + $0x108] sm:$0xff]
        %v2443 = vld [vmem:[%s2419 + $0x110] sm:$0xff]
        %v2444 = vld [vmem:[%s2419 + $0x120] sm:$0xff]
        %v2445 = vld [vmem:[%s2419 + $0x128] sm:$0xff]
        %v2446 = vld [vmem:[%s2419 + $0x138] sm:$0xff]
        %v2447 = vld [vmem:[%s2419 + $0x140] sm:$0xff]
        %v2448 = vld [vmem:[%s2419 + $0x150] sm:$0xff]
        %v2449 = vld [vmem:[%s2419 + $0x158] sm:$0xff]
        %v2450 = vld [vmem:[%s2419 + $0x168] sm:$0xff]
        %v2451 = vld [vmem:[%s2419 + $0x170] sm:$0xff]
        %v2453 = vsel %vm749, %v2420, 0
        %v2456 = vsel %vm749, %v2421, 0
        %v2459 = vsel %vm749, %v2422, 0
        %v2462 = vsel %vm749, %v2423, 0
        %v2465 = vsel %vm749, %v2424, 0
        %v2468 = vsel %vm749, %v2425, 0
        %v2471 = vsel %vm749, %v2426, 0
        %v2474 = vsel %vm749, %v2427, 0
        %v2477 = vsel %vm749, %v2428, 0
        %v2480 = vsel %vm749, %v2429, 0
        %v2483 = vsel %vm749, %v2430, 0
        %v2486 = vsel %vm749, %v2431, 0
        %v2489 = vsel %vm749, %v2432, 0
        %v2492 = vsel %vm749, %v2433, 0
        %v2495 = vsel %vm749, %v2434, 0
        %v2498 = vsel %vm749, %v2435, 0
        %v2501 = vsel %vm749, %v2436, 0
        %v2504 = vsel %vm749, %v2437, 0
        %v2507 = vsel %vm749, %v2438, 0
        %v2510 = vsel %vm749, %v2439, 0
        %v2513 = vsel %vm749, %v2440, 0
        %v2516 = vsel %vm749, %v2441, 0
        %v2519 = vsel %vm749, %v2442, 0
        %v2522 = vsel %vm749, %v2443, 0
        %v2525 = vsel %vm749, %v2444, 0
        %v2528 = vsel %vm749, %v2445, 0
        %v2531 = vsel %vm749, %v2446, 0
        %v2534 = vsel %vm749, %v2447, 0
        %v2537 = vsel %vm749, %v2448, 0
        %v2540 = vsel %vm749, %v2449, 0
        %v2543 = vsel %vm749, %v2450, 0
        %v2546 = vsel %vm749, %v2451, 0
        %v2549 = vsel %vm985, %v811, 0
        %2551 = vmatpush.msra.mxu0 0.0
        %2552 = vmatpush.msra.mxu0 0.0
        %2553 = vmatpush.msra.mxu0 0.0
        %2554 = vmatpush.msra.mxu0 0.0
        %2555 = vmatpush.msra.mxu0 0.0
        %2556 = vmatpush.msra.mxu0 0.0
        %2557 = vmatpush.msra.mxu0 0.0
        %2558 = vmatpush.msra.mxu0 0.0
        %2559 = vmatpush.msra.mxu0 0.0
        %2560 = vmatpush.msra.mxu0 0.0
        %2561 = vmatpush.msra.mxu0 0.0
        %2562 = vmatpush.msra.mxu0 0.0
        %2563 = vmatpush.msra.mxu0 0.0
        %2564 = vmatpush.msra.mxu0 0.0
        %2565 = vmatpush.msra.mxu0 0.0
        %2566 = vmatpush.msra.mxu0 %v2549
        %2567 = vmatmul.f32.gmra.mxu0 %v2453
        %v2568 = vpop.f32.mrf.mxu0
        %v2569 = vadd.f32 0.0, %v2568
        %2570 = vmatmul.f32.gmra.mxu0 %v2456
        %v2571 = vpop.f32.mrf.mxu0
        %v2572 = vadd.f32 0.0, %v2571
        %2573 = vmatmul.f32.gmra.mxu0 %v2459
        %v2574 = vpop.f32.mrf.mxu0
        %v2575 = vadd.f32 0.0, %v2574
        %2576 = vmatmul.f32.gmra.mxu0 %v2462
        %v2577 = vpop.f32.mrf.mxu0
        %v2578 = vadd.f32 0.0, %v2577
        %2579 = vmatmul.f32.gmra.mxu0 %v2465
        %v2580 = vpop.f32.mrf.mxu0
        %v2581 = vadd.f32 0.0, %v2580
        %2582 = vmatmul.f32.gmra.mxu0 %v2468
        %v2583 = vpop.f32.mrf.mxu0
        %v2584 = vadd.f32 0.0, %v2583
        %2585 = vmatmul.f32.gmra.mxu0 %v2471
        %v2586 = vpop.f32.mrf.mxu0
        %v2587 = vadd.f32 0.0, %v2586
        %2588 = vmatmul.f32.gmra.mxu0 %v2474
        %v2589 = vpop.f32.mrf.mxu0
        %v2590 = vadd.f32 0.0, %v2589
        %2591 = vmatmul.f32.gmra.mxu0 %v2477
        %v2592 = vpop.f32.mrf.mxu0
        %v2593 = vadd.f32 0.0, %v2592
        %2594 = vmatmul.f32.gmra.mxu0 %v2480
        %v2595 = vpop.f32.mrf.mxu0
        %v2596 = vadd.f32 0.0, %v2595
        %2597 = vmatmul.f32.gmra.mxu0 %v2483
        %v2598 = vpop.f32.mrf.mxu0
        %v2599 = vadd.f32 0.0, %v2598
        %2600 = vmatmul.f32.gmra.mxu0 %v2486
        %v2601 = vpop.f32.mrf.mxu0
        %v2602 = vadd.f32 0.0, %v2601
        %2603 = vmatmul.f32.gmra.mxu0 %v2489
        %v2604 = vpop.f32.mrf.mxu0
        %v2605 = vadd.f32 0.0, %v2604
        %2606 = vmatmul.f32.gmra.mxu0 %v2492
        %v2607 = vpop.f32.mrf.mxu0
        %v2608 = vadd.f32 0.0, %v2607
        %2609 = vmatmul.f32.gmra.mxu0 %v2495
        %v2610 = vpop.f32.mrf.mxu0
        %v2611 = vadd.f32 0.0, %v2610
        %2612 = vmatmul.f32.gmra.mxu0 %v2498
        %v2613 = vpop.f32.mrf.mxu0
        %v2614 = vadd.f32 0.0, %v2613
        %2615 = vmatmul.f32.gmra.mxu0 %v2501
        %v2616 = vpop.f32.mrf.mxu0
        %v2617 = vadd.f32 0.0, %v2616
        %2618 = vmatmul.f32.gmra.mxu0 %v2504
        %v2619 = vpop.f32.mrf.mxu0
        %v2620 = vadd.f32 0.0, %v2619
        %2621 = vmatmul.f32.gmra.mxu0 %v2507
        %v2622 = vpop.f32.mrf.mxu0
        %v2623 = vadd.f32 0.0, %v2622
        %2624 = vmatmul.f32.gmra.mxu0 %v2510
        %v2625 = vpop.f32.mrf.mxu0
        %v2626 = vadd.f32 0.0, %v2625
        %2627 = vmatmul.f32.gmra.mxu0 %v2513
        %v2628 = vpop.f32.mrf.mxu0
        %v2629 = vadd.f32 0.0, %v2628
        %2630 = vmatmul.f32.gmra.mxu0 %v2516
        %v2631 = vpop.f32.mrf.mxu0
        %v2632 = vadd.f32 0.0, %v2631
        %2633 = vmatmul.f32.gmra.mxu0 %v2519
        %v2634 = vpop.f32.mrf.mxu0
        %v2635 = vadd.f32 0.0, %v2634
        %2636 = vmatmul.f32.gmra.mxu0 %v2522
        %v2637 = vpop.f32.mrf.mxu0
        %v2638 = vadd.f32 0.0, %v2637
        %2639 = vmatmul.f32.gmra.mxu0 %v2525
        %v2640 = vpop.f32.mrf.mxu0
        %v2641 = vadd.f32 0.0, %v2640
        %2642 = vmatmul.f32.gmra.mxu0 %v2528
        %v2643 = vpop.f32.mrf.mxu0
        %v2644 = vadd.f32 0.0, %v2643
        %2645 = vmatmul.f32.gmra.mxu0 %v2531
        %v2646 = vpop.f32.mrf.mxu0
        %v2647 = vadd.f32 0.0, %v2646
        %2648 = vmatmul.f32.gmra.mxu0 %v2534
        %v2649 = vpop.f32.mrf.mxu0
        %v2650 = vadd.f32 0.0, %v2649
        %2651 = vmatmul.f32.gmra.mxu0 %v2537
        %v2652 = vpop.f32.mrf.mxu0
        %v2653 = vadd.f32 0.0, %v2652
        %2654 = vmatmul.f32.gmra.mxu0 %v2540
        %v2655 = vpop.f32.mrf.mxu0
        %v2656 = vadd.f32 0.0, %v2655
        %2657 = vmatmul.f32.gmra.mxu0 %v2543
        %v2658 = vpop.f32.mrf.mxu0
        %v2659 = vadd.f32 0.0, %v2658
        %2660 = vmatmul.f32.gmra.mxu0 %v2546
        %v2661 = vpop.f32.mrf.mxu0
        %v2662 = vadd.f32 0.0, %v2661
        %2663 = vdwg.mxu0
        %v2664 = vadd.f32 %v2387, %v2569
        %v2665 = vadd.f32 %v2388, %v2572
        %v2666 = vadd.f32 %v2389, %v2575
        %v2667 = vadd.f32 %v2390, %v2578
        %v2668 = vadd.f32 %v2391, %v2581
        %v2669 = vadd.f32 %v2392, %v2584
        %v2670 = vadd.f32 %v2393, %v2587
        %v2671 = vadd.f32 %v2394, %v2590
        %v2672 = vadd.f32 %v2395, %v2593
        %v2673 = vadd.f32 %v2396, %v2596
        %v2674 = vadd.f32 %v2397, %v2599
        %v2675 = vadd.f32 %v2398, %v2602
        %v2676 = vadd.f32 %v2399, %v2605
        %v2677 = vadd.f32 %v2400, %v2608
        %v2678 = vadd.f32 %v2401, %v2611
        %v2679 = vadd.f32 %v2402, %v2614
        %v2680 = vadd.f32 %v2403, %v2617
        %v2681 = vadd.f32 %v2404, %v2620
        %v2682 = vadd.f32 %v2405, %v2623
        %v2683 = vadd.f32 %v2406, %v2626
        %v2684 = vadd.f32 %v2407, %v2629
        %v2685 = vadd.f32 %v2408, %v2632
        %v2686 = vadd.f32 %v2409, %v2635
        %v2687 = vadd.f32 %v2410, %v2638
        %v2688 = vadd.f32 %v2411, %v2641
        %v2689 = vadd.f32 %v2412, %v2644
        %v2690 = vadd.f32 %v2413, %v2647
        %v2691 = vadd.f32 %v2414, %v2650
        %v2692 = vadd.f32 %v2415, %v2653
        %v2693 = vadd.f32 %v2416, %v2656
        %v2694 = vadd.f32 %v2417, %v2659
        %v2695 = vadd.f32 %v2418, %v2662
        %v2696 = vld [vmem:[%s2419 + $0x1] sm:$0xff]
        %v2697 = vld [vmem:[%s2419 + $0x9] sm:$0xff]
        %v2698 = vld [vmem:[%s2419 + $0x19] sm:$0xff]
        %v2699 = vld [vmem:[%s2419 + $0x21] sm:$0xff]
        %v2700 = vld [vmem:[%s2419 + $0x31] sm:$0xff]
        %v2701 = vld [vmem:[%s2419 + $0x39] sm:$0xff]
        %v2702 = vld [vmem:[%s2419 + $0x49] sm:$0xff]
        %v2703 = vld [vmem:[%s2419 + $0x51] sm:$0xff]
        %v2704 = vld [vmem:[%s2419 + $0x61] sm:$0xff]
        %v2705 = vld [vmem:[%s2419 + $0x69] sm:$0xff]
        %v2706 = vld [vmem:[%s2419 + $0x79] sm:$0xff]
        %v2707 = vld [vmem:[%s2419 + $0x81] sm:$0xff]
        %v2708 = vld [vmem:[%s2419 + $0x91] sm:$0xff]
        %v2709 = vld [vmem:[%s2419 + $0x99] sm:$0xff]
        %v2710 = vld [vmem:[%s2419 + $0xa9] sm:$0xff]
        %v2711 = vld [vmem:[%s2419 + $0xb1] sm:$0xff]
        %v2712 = vld [vmem:[%s2419 + $0xc1] sm:$0xff]
        %v2713 = vld [vmem:[%s2419 + $0xc9] sm:$0xff]
        %v2714 = vld [vmem:[%s2419 + $0xd9] sm:$0xff]
        %v2715 = vld [vmem:[%s2419 + $0xe1] sm:$0xff]
        %v2716 = vld [vmem:[%s2419 + $0xf1] sm:$0xff]
        %v2717 = vld [vmem:[%s2419 + $0xf9] sm:$0xff]
        %v2718 = vld [vmem:[%s2419 + $0x109] sm:$0xff]
        %v2719 = vld [vmem:[%s2419 + $0x111] sm:$0xff]
        %v2720 = vld [vmem:[%s2419 + $0x121] sm:$0xff]
        %v2721 = vld [vmem:[%s2419 + $0x129] sm:$0xff]
        %v2722 = vld [vmem:[%s2419 + $0x139] sm:$0xff]
        %v2723 = vld [vmem:[%s2419 + $0x141] sm:$0xff]
        %v2724 = vld [vmem:[%s2419 + $0x151] sm:$0xff]
        %v2725 = vld [vmem:[%s2419 + $0x159] sm:$0xff]
        %v2726 = vld [vmem:[%s2419 + $0x169] sm:$0xff]
        %v2727 = vld [vmem:[%s2419 + $0x171] sm:$0xff]
        %v2729 = vsel %vm749, %v2696, 0
        %v2732 = vsel %vm749, %v2697, 0
        %v2735 = vsel %vm749, %v2698, 0
        %v2738 = vsel %vm749, %v2699, 0
        %v2741 = vsel %vm749, %v2700, 0
        %v2744 = vsel %vm749, %v2701, 0
        %v2747 = vsel %vm749, %v2702, 0
        %v2750 = vsel %vm749, %v2703, 0
        %v2753 = vsel %vm749, %v2704, 0
        %v2756 = vsel %vm749, %v2705, 0
        %v2759 = vsel %vm749, %v2706, 0
        %v2762 = vsel %vm749, %v2707, 0
        %v2765 = vsel %vm749, %v2708, 0
        %v2768 = vsel %vm749, %v2709, 0
        %v2771 = vsel %vm749, %v2710, 0
        %v2774 = vsel %vm749, %v2711, 0
        %v2777 = vsel %vm749, %v2712, 0
        %v2780 = vsel %vm749, %v2713, 0
        %v2783 = vsel %vm749, %v2714, 0
        %v2786 = vsel %vm749, %v2715, 0
        %v2789 = vsel %vm749, %v2716, 0
        %v2792 = vsel %vm749, %v2717, 0
        %v2795 = vsel %vm749, %v2718, 0
        %v2798 = vsel %vm749, %v2719, 0
        %v2801 = vsel %vm749, %v2720, 0
        %v2804 = vsel %vm749, %v2721, 0
        %v2807 = vsel %vm749, %v2722, 0
        %v2810 = vsel %vm749, %v2723, 0
        %v2813 = vsel %vm749, %v2724, 0
        %v2816 = vsel %vm749, %v2725, 0
        %v2819 = vsel %vm749, %v2726, 0
        %v2822 = vsel %vm749, %v2727, 0
        %v2825 = vsel %vm985, %v812, 0
        %2827 = vmatpush.msra.mxu0 0.0
        %2828 = vmatpush.msra.mxu0 0.0
        %2829 = vmatpush.msra.mxu0 0.0
        %2830 = vmatpush.msra.mxu0 0.0
        %2831 = vmatpush.msra.mxu0 0.0
        %2832 = vmatpush.msra.mxu0 0.0
        %2833 = vmatpush.msra.mxu0 0.0
        %2834 = vmatpush.msra.mxu0 0.0
        %2835 = vmatpush.msra.mxu0 0.0
        %2836 = vmatpush.msra.mxu0 0.0
        %2837 = vmatpush.msra.mxu0 0.0
        %2838 = vmatpush.msra.mxu0 0.0
        %2839 = vmatpush.msra.mxu0 0.0
        %2840 = vmatpush.msra.mxu0 0.0
        %2841 = vmatpush.msra.mxu0 0.0
        %2842 = vmatpush.msra.mxu0 %v2825
        %2843 = vmatmul.f32.gmra.mxu0 %v2729
        %v2844 = vpop.f32.mrf.mxu0
        %v2845 = vadd.f32 0.0, %v2844
        %2846 = vmatmul.f32.gmra.mxu0 %v2732
        %v2847 = vpop.f32.mrf.mxu0
        %v2848 = vadd.f32 0.0, %v2847
        %2849 = vmatmul.f32.gmra.mxu0 %v2735
        %v2850 = vpop.f32.mrf.mxu0
        %v2851 = vadd.f32 0.0, %v2850
        %2852 = vmatmul.f32.gmra.mxu0 %v2738
        %v2853 = vpop.f32.mrf.mxu0
        %v2854 = vadd.f32 0.0, %v2853
        %2855 = vmatmul.f32.gmra.mxu0 %v2741
        %v2856 = vpop.f32.mrf.mxu0
        %v2857 = vadd.f32 0.0, %v2856
        %2858 = vmatmul.f32.gmra.mxu0 %v2744
        %v2859 = vpop.f32.mrf.mxu0
        %v2860 = vadd.f32 0.0, %v2859
        %2861 = vmatmul.f32.gmra.mxu0 %v2747
        %v2862 = vpop.f32.mrf.mxu0
        %v2863 = vadd.f32 0.0, %v2862
        %2864 = vmatmul.f32.gmra.mxu0 %v2750
        %v2865 = vpop.f32.mrf.mxu0
        %v2866 = vadd.f32 0.0, %v2865
        %2867 = vmatmul.f32.gmra.mxu0 %v2753
        %v2868 = vpop.f32.mrf.mxu0
        %v2869 = vadd.f32 0.0, %v2868
        %2870 = vmatmul.f32.gmra.mxu0 %v2756
        %v2871 = vpop.f32.mrf.mxu0
        %v2872 = vadd.f32 0.0, %v2871
        %2873 = vmatmul.f32.gmra.mxu0 %v2759
        %v2874 = vpop.f32.mrf.mxu0
        %v2875 = vadd.f32 0.0, %v2874
        %2876 = vmatmul.f32.gmra.mxu0 %v2762
        %v2877 = vpop.f32.mrf.mxu0
        %v2878 = vadd.f32 0.0, %v2877
        %2879 = vmatmul.f32.gmra.mxu0 %v2765
        %v2880 = vpop.f32.mrf.mxu0
        %v2881 = vadd.f32 0.0, %v2880
        %2882 = vmatmul.f32.gmra.mxu0 %v2768
        %v2883 = vpop.f32.mrf.mxu0
        %v2884 = vadd.f32 0.0, %v2883
        %2885 = vmatmul.f32.gmra.mxu0 %v2771
        %v2886 = vpop.f32.mrf.mxu0
        %v2887 = vadd.f32 0.0, %v2886
        %2888 = vmatmul.f32.gmra.mxu0 %v2774
        %v2889 = vpop.f32.mrf.mxu0
        %v2890 = vadd.f32 0.0, %v2889
        %2891 = vmatmul.f32.gmra.mxu0 %v2777
        %v2892 = vpop.f32.mrf.mxu0
        %v2893 = vadd.f32 0.0, %v2892
        %2894 = vmatmul.f32.gmra.mxu0 %v2780
        %v2895 = vpop.f32.mrf.mxu0
        %v2896 = vadd.f32 0.0, %v2895
        %2897 = vmatmul.f32.gmra.mxu0 %v2783
        %v2898 = vpop.f32.mrf.mxu0
        %v2899 = vadd.f32 0.0, %v2898
        %2900 = vmatmul.f32.gmra.mxu0 %v2786
        %v2901 = vpop.f32.mrf.mxu0
        %v2902 = vadd.f32 0.0, %v2901
        %2903 = vmatmul.f32.gmra.mxu0 %v2789
        %v2904 = vpop.f32.mrf.mxu0
        %v2905 = vadd.f32 0.0, %v2904
        %2906 = vmatmul.f32.gmra.mxu0 %v2792
        %v2907 = vpop.f32.mrf.mxu0
        %v2908 = vadd.f32 0.0, %v2907
        %2909 = vmatmul.f32.gmra.mxu0 %v2795
        %v2910 = vpop.f32.mrf.mxu0
        %v2911 = vadd.f32 0.0, %v2910
        %2912 = vmatmul.f32.gmra.mxu0 %v2798
        %v2913 = vpop.f32.mrf.mxu0
        %v2914 = vadd.f32 0.0, %v2913
        %2915 = vmatmul.f32.gmra.mxu0 %v2801
        %v2916 = vpop.f32.mrf.mxu0
        %v2917 = vadd.f32 0.0, %v2916
        %2918 = vmatmul.f32.gmra.mxu0 %v2804
        %v2919 = vpop.f32.mrf.mxu0
        %v2920 = vadd.f32 0.0, %v2919
        %2921 = vmatmul.f32.gmra.mxu0 %v2807
        %v2922 = vpop.f32.mrf.mxu0
        %v2923 = vadd.f32 0.0, %v2922
        %2924 = vmatmul.f32.gmra.mxu0 %v2810
        %v2925 = vpop.f32.mrf.mxu0
        %v2926 = vadd.f32 0.0, %v2925
        %2927 = vmatmul.f32.gmra.mxu0 %v2813
        %v2928 = vpop.f32.mrf.mxu0
        %v2929 = vadd.f32 0.0, %v2928
        %2930 = vmatmul.f32.gmra.mxu0 %v2816
        %v2931 = vpop.f32.mrf.mxu0
        %v2932 = vadd.f32 0.0, %v2931
        %2933 = vmatmul.f32.gmra.mxu0 %v2819
        %v2934 = vpop.f32.mrf.mxu0
        %v2935 = vadd.f32 0.0, %v2934
        %2936 = vmatmul.f32.gmra.mxu0 %v2822
        %v2937 = vpop.f32.mrf.mxu0
        %v2938 = vadd.f32 0.0, %v2937
        %2939 = vdwg.mxu0
        %v2940 = vadd.f32 %v2664, %v2845
        %v2941 = vadd.f32 %v2665, %v2848
        %v2942 = vadd.f32 %v2666, %v2851
        %v2943 = vadd.f32 %v2667, %v2854
        %v2944 = vadd.f32 %v2668, %v2857
        %v2945 = vadd.f32 %v2669, %v2860
        %v2946 = vadd.f32 %v2670, %v2863
        %v2947 = vadd.f32 %v2671, %v2866
        %v2948 = vadd.f32 %v2672, %v2869
        %v2949 = vadd.f32 %v2673, %v2872
        %v2950 = vadd.f32 %v2674, %v2875
        %v2951 = vadd.f32 %v2675, %v2878
        %v2952 = vadd.f32 %v2676, %v2881
        %v2953 = vadd.f32 %v2677, %v2884
        %v2954 = vadd.f32 %v2678, %v2887
        %v2955 = vadd.f32 %v2679, %v2890
        %v2956 = vadd.f32 %v2680, %v2893
        %v2957 = vadd.f32 %v2681, %v2896
        %v2958 = vadd.f32 %v2682, %v2899
        %v2959 = vadd.f32 %v2683, %v2902
        %v2960 = vadd.f32 %v2684, %v2905
        %v2961 = vadd.f32 %v2685, %v2908
        %v2962 = vadd.f32 %v2686, %v2911
        %v2963 = vadd.f32 %v2687, %v2914
        %v2964 = vadd.f32 %v2688, %v2917
        %v2965 = vadd.f32 %v2689, %v2920
        %v2966 = vadd.f32 %v2690, %v2923
        %v2967 = vadd.f32 %v2691, %v2926
        %v2968 = vadd.f32 %v2692, %v2929
        %v2969 = vadd.f32 %v2693, %v2932
        %v2970 = vadd.f32 %v2694, %v2935
        %v2971 = vadd.f32 %v2695, %v2938
        %v2972 = vld [vmem:[%s2419 + $0x2] sm:$0xff]
        %v2973 = vld [vmem:[%s2419 + $0xa] sm:$0xff]
        %v2974 = vld [vmem:[%s2419 + $0x1a] sm:$0xff]
        %v2975 = vld [vmem:[%s2419 + $0x22] sm:$0xff]
        %v2976 = vld [vmem:[%s2419 + $0x32] sm:$0xff]
        %v2977 = vld [vmem:[%s2419 + $0x3a] sm:$0xff]
        %v2978 = vld [vmem:[%s2419 + $0x4a] sm:$0xff]
        %v2979 = vld [vmem:[%s2419 + $0x52] sm:$0xff]
        %v2980 = vld [vmem:[%s2419 + $0x62] sm:$0xff]
        %v2981 = vld [vmem:[%s2419 + $0x6a] sm:$0xff]
        %v2982 = vld [vmem:[%s2419 + $0x7a] sm:$0xff]
        %v2983 = vld [vmem:[%s2419 + $0x82] sm:$0xff]
        %v2984 = vld [vmem:[%s2419 + $0x92] sm:$0xff]
        %v2985 = vld [vmem:[%s2419 + $0x9a] sm:$0xff]
        %v2986 = vld [vmem:[%s2419 + $0xaa] sm:$0xff]
        %v2987 = vld [vmem:[%s2419 + $0xb2] sm:$0xff]
        %v2988 = vld [vmem:[%s2419 + $0xc2] sm:$0xff]
        %v2989 = vld [vmem:[%s2419 + $0xca] sm:$0xff]
        %v2990 = vld [vmem:[%s2419 + $0xda] sm:$0xff]
        %v2991 = vld [vmem:[%s2419 + $0xe2] sm:$0xff]
        %v2992 = vld [vmem:[%s2419 + $0xf2] sm:$0xff]
        %v2993 = vld [vmem:[%s2419 + $0xfa] sm:$0xff]
        %v2994 = vld [vmem:[%s2419 + $0x10a] sm:$0xff]
        %v2995 = vld [vmem:[%s2419 + $0x112] sm:$0xff]
        %v2996 = vld [vmem:[%s2419 + $0x122] sm:$0xff]
        %v2997 = vld [vmem:[%s2419 + $0x12a] sm:$0xff]
        %v2998 = vld [vmem:[%s2419 + $0x13a] sm:$0xff]
        %v2999 = vld [vmem:[%s2419 + $0x142] sm:$0xff]
        %v3000 = vld [vmem:[%s2419 + $0x152] sm:$0xff]
        %v3001 = vld [vmem:[%s2419 + $0x15a] sm:$0xff]
        %v3002 = vld [vmem:[%s2419 + $0x16a] sm:$0xff]
        %v3003 = vld [vmem:[%s2419 + $0x172] sm:$0xff]
        %v3005 = vsel %vm749, %v2972, 0
        %v3008 = vsel %vm749, %v2973, 0
        %v3011 = vsel %vm749, %v2974, 0
        %v3014 = vsel %vm749, %v2975, 0
        %v3017 = vsel %vm749, %v2976, 0
        %v3020 = vsel %vm749, %v2977, 0
        %v3023 = vsel %vm749, %v2978, 0
        %v3026 = vsel %vm749, %v2979, 0
        %v3029 = vsel %vm749, %v2980, 0
        %v3032 = vsel %vm749, %v2981, 0
        %v3035 = vsel %vm749, %v2982, 0
        %v3038 = vsel %vm749, %v2983, 0
        %v3041 = vsel %vm749, %v2984, 0
        %v3044 = vsel %vm749, %v2985, 0
        %v3047 = vsel %vm749, %v2986, 0
        %v3050 = vsel %vm749, %v2987, 0
        %v3053 = vsel %vm749, %v2988, 0
        %v3056 = vsel %vm749, %v2989, 0
        %v3059 = vsel %vm749, %v2990, 0
        %v3062 = vsel %vm749, %v2991, 0
        %v3065 = vsel %vm749, %v2992, 0
        %v3068 = vsel %vm749, %v2993, 0
        %v3071 = vsel %vm749, %v2994, 0
        %v3074 = vsel %vm749, %v2995, 0
        %v3077 = vsel %vm749, %v2996, 0
        %v3080 = vsel %vm749, %v2997, 0
        %v3083 = vsel %vm749, %v2998, 0
        %v3086 = vsel %vm749, %v2999, 0
        %v3089 = vsel %vm749, %v3000, 0
        %v3092 = vsel %vm749, %v3001, 0
        %v3095 = vsel %vm749, %v3002, 0
        %v3098 = vsel %vm749, %v3003, 0
        %v3101 = vsel %vm985, %v813, 0
        %3103 = vmatpush.msra.mxu0 0.0
        %3104 = vmatpush.msra.mxu0 0.0
        %3105 = vmatpush.msra.mxu0 0.0
        %3106 = vmatpush.msra.mxu0 0.0
        %3107 = vmatpush.msra.mxu0 0.0
        %3108 = vmatpush.msra.mxu0 0.0
        %3109 = vmatpush.msra.mxu0 0.0
        %3110 = vmatpush.msra.mxu0 0.0
        %3111 = vmatpush.msra.mxu0 0.0
        %3112 = vmatpush.msra.mxu0 0.0
        %3113 = vmatpush.msra.mxu0 0.0
        %3114 = vmatpush.msra.mxu0 0.0
        %3115 = vmatpush.msra.mxu0 0.0
        %3116 = vmatpush.msra.mxu0 0.0
        %3117 = vmatpush.msra.mxu0 0.0
        %3118 = vmatpush.msra.mxu0 %v3101
        %3119 = vmatmul.f32.gmra.mxu0 %v3005
        %v3120 = vpop.f32.mrf.mxu0
        %v3121 = vadd.f32 0.0, %v3120
        %3122 = vmatmul.f32.gmra.mxu0 %v3008
        %v3123 = vpop.f32.mrf.mxu0
        %v3124 = vadd.f32 0.0, %v3123
        %3125 = vmatmul.f32.gmra.mxu0 %v3011
        %v3126 = vpop.f32.mrf.mxu0
        %v3127 = vadd.f32 0.0, %v3126
        %3128 = vmatmul.f32.gmra.mxu0 %v3014
        %v3129 = vpop.f32.mrf.mxu0
        %v3130 = vadd.f32 0.0, %v3129
        %3131 = vmatmul.f32.gmra.mxu0 %v3017
        %v3132 = vpop.f32.mrf.mxu0
        %v3133 = vadd.f32 0.0, %v3132
        %3134 = vmatmul.f32.gmra.mxu0 %v3020
        %v3135 = vpop.f32.mrf.mxu0
        %v3136 = vadd.f32 0.0, %v3135
        %3137 = vmatmul.f32.gmra.mxu0 %v3023
        %v3138 = vpop.f32.mrf.mxu0
        %v3139 = vadd.f32 0.0, %v3138
        %3140 = vmatmul.f32.gmra.mxu0 %v3026
        %v3141 = vpop.f32.mrf.mxu0
        %v3142 = vadd.f32 0.0, %v3141
        %3143 = vmatmul.f32.gmra.mxu0 %v3029
        %v3144 = vpop.f32.mrf.mxu0
        %v3145 = vadd.f32 0.0, %v3144
        %3146 = vmatmul.f32.gmra.mxu0 %v3032
        %v3147 = vpop.f32.mrf.mxu0
        %v3148 = vadd.f32 0.0, %v3147
        %3149 = vmatmul.f32.gmra.mxu0 %v3035
        %v3150 = vpop.f32.mrf.mxu0
        %v3151 = vadd.f32 0.0, %v3150
        %3152 = vmatmul.f32.gmra.mxu0 %v3038
        %v3153 = vpop.f32.mrf.mxu0
        %v3154 = vadd.f32 0.0, %v3153
        %3155 = vmatmul.f32.gmra.mxu0 %v3041
        %v3156 = vpop.f32.mrf.mxu0
        %v3157 = vadd.f32 0.0, %v3156
        %3158 = vmatmul.f32.gmra.mxu0 %v3044
        %v3159 = vpop.f32.mrf.mxu0
        %v3160 = vadd.f32 0.0, %v3159
        %3161 = vmatmul.f32.gmra.mxu0 %v3047
        %v3162 = vpop.f32.mrf.mxu0
        %v3163 = vadd.f32 0.0, %v3162
        %3164 = vmatmul.f32.gmra.mxu0 %v3050
        %v3165 = vpop.f32.mrf.mxu0
        %v3166 = vadd.f32 0.0, %v3165
        %3167 = vmatmul.f32.gmra.mxu0 %v3053
        %v3168 = vpop.f32.mrf.mxu0
        %v3169 = vadd.f32 0.0, %v3168
        %3170 = vmatmul.f32.gmra.mxu0 %v3056
        %v3171 = vpop.f32.mrf.mxu0
        %v3172 = vadd.f32 0.0, %v3171
        %3173 = vmatmul.f32.gmra.mxu0 %v3059
        %v3174 = vpop.f32.mrf.mxu0
        %v3175 = vadd.f32 0.0, %v3174
        %3176 = vmatmul.f32.gmra.mxu0 %v3062
        %v3177 = vpop.f32.mrf.mxu0
        %v3178 = vadd.f32 0.0, %v3177
        %3179 = vmatmul.f32.gmra.mxu0 %v3065
        %v3180 = vpop.f32.mrf.mxu0
        %v3181 = vadd.f32 0.0, %v3180
        %3182 = vmatmul.f32.gmra.mxu0 %v3068
        %v3183 = vpop.f32.mrf.mxu0
        %v3184 = vadd.f32 0.0, %v3183
        %3185 = vmatmul.f32.gmra.mxu0 %v3071
        %v3186 = vpop.f32.mrf.mxu0
        %v3187 = vadd.f32 0.0, %v3186
        %3188 = vmatmul.f32.gmra.mxu0 %v3074
        %v3189 = vpop.f32.mrf.mxu0
        %v3190 = vadd.f32 0.0, %v3189
        %3191 = vmatmul.f32.gmra.mxu0 %v3077
        %v3192 = vpop.f32.mrf.mxu0
        %v3193 = vadd.f32 0.0, %v3192
        %3194 = vmatmul.f32.gmra.mxu0 %v3080
        %v3195 = vpop.f32.mrf.mxu0
        %v3196 = vadd.f32 0.0, %v3195
        %3197 = vmatmul.f32.gmra.mxu0 %v3083
        %v3198 = vpop.f32.mrf.mxu0
        %v3199 = vadd.f32 0.0, %v3198
        %3200 = vmatmul.f32.gmra.mxu0 %v3086
        %v3201 = vpop.f32.mrf.mxu0
        %v3202 = vadd.f32 0.0, %v3201
        %3203 = vmatmul.f32.gmra.mxu0 %v3089
        %v3204 = vpop.f32.mrf.mxu0
        %v3205 = vadd.f32 0.0, %v3204
        %3206 = vmatmul.f32.gmra.mxu0 %v3092
        %v3207 = vpop.f32.mrf.mxu0
        %v3208 = vadd.f32 0.0, %v3207
        %3209 = vmatmul.f32.gmra.mxu0 %v3095
        %v3210 = vpop.f32.mrf.mxu0
        %v3211 = vadd.f32 0.0, %v3210
        %3212 = vmatmul.f32.gmra.mxu0 %v3098
        %v3213 = vpop.f32.mrf.mxu0
        %v3214 = vadd.f32 0.0, %v3213
        %3215 = vdwg.mxu0
        %v3216 = vadd.f32 %v2940, %v3121
        %v3217 = vadd.f32 %v2941, %v3124
        %v3218 = vadd.f32 %v2942, %v3127
        %v3219 = vadd.f32 %v2943, %v3130
        %v3220 = vadd.f32 %v2944, %v3133
        %v3221 = vadd.f32 %v2945, %v3136
        %v3222 = vadd.f32 %v2946, %v3139
        %v3223 = vadd.f32 %v2947, %v3142
        %v3224 = vadd.f32 %v2948, %v3145
        %v3225 = vadd.f32 %v2949, %v3148
        %v3226 = vadd.f32 %v2950, %v3151
        %v3227 = vadd.f32 %v2951, %v3154
        %v3228 = vadd.f32 %v2952, %v3157
        %v3229 = vadd.f32 %v2953, %v3160
        %v3230 = vadd.f32 %v2954, %v3163
        %v3231 = vadd.f32 %v2955, %v3166
        %v3232 = vadd.f32 %v2956, %v3169
        %v3233 = vadd.f32 %v2957, %v3172
        %v3234 = vadd.f32 %v2958, %v3175
        %v3235 = vadd.f32 %v2959, %v3178
        %v3236 = vadd.f32 %v2960, %v3181
        %v3237 = vadd.f32 %v2961, %v3184
        %v3238 = vadd.f32 %v2962, %v3187
        %v3239 = vadd.f32 %v2963, %v3190
        %v3240 = vadd.f32 %v2964, %v3193
        %v3241 = vadd.f32 %v2965, %v3196
        %v3242 = vadd.f32 %v2966, %v3199
        %v3243 = vadd.f32 %v2967, %v3202
        %v3244 = vadd.f32 %v2968, %v3205
        %v3245 = vadd.f32 %v2969, %v3208
        %v3246 = vadd.f32 %v2970, %v3211
        %v3247 = vadd.f32 %v2971, %v3214
        %v3249 = vperm.slane %v814, 0
        %v3251 = vadd.f32 %v3216, %v3249
        %v3252 = vadd.f32 %v3217, %v3249
        %v3253 = vadd.f32 %v3218, %v3249
        %v3254 = vadd.f32 %v3219, %v3249
        %v3255 = vadd.f32 %v3220, %v3249
        %v3256 = vadd.f32 %v3221, %v3249
        %v3257 = vadd.f32 %v3222, %v3249
        %v3258 = vadd.f32 %v3223, %v3249
        %v3259 = vadd.f32 %v3224, %v3249
        %v3260 = vadd.f32 %v3225, %v3249
        %v3261 = vadd.f32 %v3226, %v3249
        %v3262 = vadd.f32 %v3227, %v3249
        %v3263 = vadd.f32 %v3228, %v3249
        %v3264 = vadd.f32 %v3229, %v3249
        %v3265 = vadd.f32 %v3230, %v3249
        %v3266 = vadd.f32 %v3231, %v3249
        %v3267 = vadd.f32 %v3232, %v3249
        %v3268 = vadd.f32 %v3233, %v3249
        %v3269 = vadd.f32 %v3234, %v3249
        %v3270 = vadd.f32 %v3235, %v3249
        %v3271 = vadd.f32 %v3236, %v3249
        %v3272 = vadd.f32 %v3237, %v3249
        %v3273 = vadd.f32 %v3238, %v3249
        %v3274 = vadd.f32 %v3239, %v3249
        %v3275 = vadd.f32 %v3240, %v3249
        %v3276 = vadd.f32 %v3241, %v3249
        %v3277 = vadd.f32 %v3242, %v3249
        %v3278 = vadd.f32 %v3243, %v3249
        %v3279 = vadd.f32 %v3244, %v3249
        %v3280 = vadd.f32 %v3245, %v3249
        %v3281 = vadd.f32 %v3246, %v3249
        %v3282 = vadd.f32 %v3247, %v3249
        %v3283 = vmax.f32 %v3251, 0.0
        %v3284 = vmax.f32 %v3252, 0.0
        %v3285 = vmax.f32 %v3253, 0.0
        %v3286 = vmax.f32 %v3254, 0.0
        %v3287 = vmax.f32 %v3255, 0.0
        %v3288 = vmax.f32 %v3256, 0.0
        %v3289 = vmax.f32 %v3257, 0.0
        %v3290 = vmax.f32 %v3258, 0.0
        %v3291 = vmax.f32 %v3259, 0.0
        %v3292 = vmax.f32 %v3260, 0.0
        %v3293 = vmax.f32 %v3261, 0.0
        %v3294 = vmax.f32 %v3262, 0.0
        %v3295 = vmax.f32 %v3263, 0.0
        %v3296 = vmax.f32 %v3264, 0.0
        %v3297 = vmax.f32 %v3265, 0.0
        %v3298 = vmax.f32 %v3266, 0.0
        %v3299 = vmax.f32 %v3267, 0.0
        %v3300 = vmax.f32 %v3268, 0.0
        %v3301 = vmax.f32 %v3269, 0.0
        %v3302 = vmax.f32 %v3270, 0.0
        %v3303 = vmax.f32 %v3271, 0.0
        %v3304 = vmax.f32 %v3272, 0.0
        %v3305 = vmax.f32 %v3273, 0.0
        %v3306 = vmax.f32 %v3274, 0.0
        %v3307 = vmax.f32 %v3275, 0.0
        %v3308 = vmax.f32 %v3276, 0.0
        %v3309 = vmax.f32 %v3277, 0.0
        %v3310 = vmax.f32 %v3278, 0.0
        %v3311 = vmax.f32 %v3279, 0.0
        %v3312 = vmax.f32 %v3280, 0.0
        %v3313 = vmax.f32 %v3281, 0.0
        %v3314 = vmax.f32 %v3282, 0.0
        %3315 = vst.msk [vmem:[#allocation3] sm:$0xff] %vm749, 0.0
        %3316 = vst.msk [vmem:[#allocation3 + $0x8] sm:$0xff] %vm749, 0.0
        %3317 = vst.msk [vmem:[#allocation3 + $0x10] sm:$0x3] %vm752, 0.0
        %3318 = vst.msk [vmem:[#allocation3 + $0x18] sm:$0xff] %vm749, 0.0
        %3319 = vst.msk [vmem:[#allocation3 + $0x20] sm:$0xff] %vm749, 0.0
        %3320 = vst.msk [vmem:[#allocation3 + $0x28] sm:$0x3] %vm752, 0.0
        %3321 = vst.msk [vmem:[#allocation3 + $0x30] sm:$0xff] %vm749, 0.0
        %3322 = vst.msk [vmem:[#allocation3 + $0x38] sm:$0xff] %vm749, 0.0
        %3323 = vst.msk [vmem:[#allocation3 + $0x40] sm:$0x3] %vm752, 0.0
        %3324 = vst.msk [vmem:[#allocation3 + $0x48] sm:$0xff] %vm749, 0.0
        %3325 = vst.msk [vmem:[#allocation3 + $0x50] sm:$0xff] %vm749, 0.0
        %3326 = vst.msk [vmem:[#allocation3 + $0x58] sm:$0x3] %vm752, 0.0
        %3327 = vst.msk [vmem:[#allocation3 + $0x60] sm:$0xff] %vm749, 0.0
        %3328 = vst.msk [vmem:[#allocation3 + $0x68] sm:$0xff] %vm749, 0.0
        %3329 = vst.msk [vmem:[#allocation3 + $0x70] sm:$0x3] %vm752, 0.0
        %3330 = vst.msk [vmem:[#allocation3 + $0x78] sm:$0xff] %vm749, 0.0
        %3331 = vst.msk [vmem:[#allocation3 + $0x80] sm:$0xff] %vm749, 0.0
        %3332 = vst.msk [vmem:[#allocation3 + $0x88] sm:$0x3] %vm752, 0.0
        %3333 = vst.msk [vmem:[#allocation3 + $0x90] sm:$0xff] %vm749, 0.0
        %3334 = vst.msk [vmem:[#allocation3 + $0x98] sm:$0xff] %vm749, 0.0
        %3335 = vst.msk [vmem:[#allocation3 + $0xa0] sm:$0x3] %vm752, 0.0
        %3336 = vst.msk [vmem:[#allocation3 + $0xa8] sm:$0xff] %vm749, 0.0
        %3337 = vst.msk [vmem:[#allocation3 + $0xb0] sm:$0xff] %vm749, 0.0
        %3338 = vst.msk [vmem:[#allocation3 + $0xb8] sm:$0x3] %vm752, 0.0
        %3339 = vst.msk [vmem:[#allocation3 + $0xc0] sm:$0xff] %vm749, 0.0
        %3340 = vst.msk [vmem:[#allocation3 + $0xc8] sm:$0xff] %vm749, 0.0
        %3341 = vst.msk [vmem:[#allocation3 + $0xd0] sm:$0x3] %vm752, 0.0
        %3342 = vst.msk [vmem:[#allocation3 + $0xd8] sm:$0xff] %vm749, 0.0
        %3343 = vst.msk [vmem:[#allocation3 + $0xe0] sm:$0xff] %vm749, 0.0
        %3344 = vst.msk [vmem:[#allocation3 + $0xe8] sm:$0x3] %vm752, 0.0
        %3345 = vst.msk [vmem:[#allocation3 + $0xf0] sm:$0xff] %vm749, 0.0
        %3346 = vst.msk [vmem:[#allocation3 + $0xf8] sm:$0xff] %vm749, 0.0
        %3347 = vst.msk [vmem:[#allocation3 + $0x100] sm:$0x3] %vm752, 0.0
        %3348 = vst.msk [vmem:[#allocation3 + $0x108] sm:$0xff] %vm749, 0.0
        %3349 = vst.msk [vmem:[#allocation3 + $0x110] sm:$0xff] %vm749, 0.0
        %3350 = vst.msk [vmem:[#allocation3 + $0x118] sm:$0x3] %vm752, 0.0
        %3351 = vst.msk [vmem:[#allocation3 + $0x120] sm:$0xff] %vm749, 0.0
        %3352 = vst.msk [vmem:[#allocation3 + $0x128] sm:$0xff] %vm749, 0.0
        %3353 = vst.msk [vmem:[#allocation3 + $0x130] sm:$0x3] %vm752, 0.0
        %3354 = vst.msk [vmem:[#allocation3 + $0x138] sm:$0xff] %vm749, 0.0
        %3355 = vst.msk [vmem:[#allocation3 + $0x140] sm:$0xff] %vm749, 0.0
        %3356 = vst.msk [vmem:[#allocation3 + $0x148] sm:$0x3] %vm752, 0.0
        %3357 = vst.msk [vmem:[#allocation3 + $0x150] sm:$0xff] %vm749, 0.0
        %3358 = vst.msk [vmem:[#allocation3 + $0x158] sm:$0xff] %vm749, 0.0
        %3359 = vst.msk [vmem:[#allocation3 + $0x160] sm:$0x3] %vm752, 0.0
        %3360 = vst.msk [vmem:[#allocation3 + $0x168] sm:$0xff] %vm749, 0.0
        %3361 = vst.msk [vmem:[#allocation3 + $0x170] sm:$0xff] %vm749, 0.0
        %3362 = vst.msk [vmem:[#allocation3 + $0x178] sm:$0x3] %vm752, 0.0
        %3363 = vst.msk [vmem:[#allocation3 + $0x180] sm:$0xff] %vm749, 0.0
        %3364 = vst.msk [vmem:[#allocation3 + $0x188] sm:$0xff] %vm749, 0.0
        %3365 = vst.msk [vmem:[#allocation3 + $0x190] sm:$0x3] %vm752, 0.0
        %3366 = vst.msk [vmem:[#allocation3 + $0x198] sm:$0xff] %vm749, 0.0
        %3367 = vst.msk [vmem:[#allocation3 + $0x1a0] sm:$0xff] %vm749, 0.0
        %3368 = vst.msk [vmem:[#allocation3 + $0x1a8] sm:$0x3] %vm752, 0.0
        %s3369 = scalar_lea.vmem [#allocation3], 24
        %3370 = vst.msk [vmem:[%s3369 + $0x1] sm:$0xff] %vm749, %v3283
        %3371 = vst.msk [vmem:[%s3369 + $0x9] sm:$0xff] %vm749, %v3284
        %3372 = vst.msk [vmem:[%s3369 + $0x19] sm:$0xff] %vm749, %v3285
        %3373 = vst.msk [vmem:[%s3369 + $0x21] sm:$0xff] %vm749, %v3286
        %3374 = vst.msk [vmem:[%s3369 + $0x31] sm:$0xff] %vm749, %v3287
        %3375 = vst.msk [vmem:[%s3369 + $0x39] sm:$0xff] %vm749, %v3288
        %3376 = vst.msk [vmem:[%s3369 + $0x49] sm:$0xff] %vm749, %v3289
        %3377 = vst.msk [vmem:[%s3369 + $0x51] sm:$0xff] %vm749, %v3290
        %3378 = vst.msk [vmem:[%s3369 + $0x61] sm:$0xff] %vm749, %v3291
        %3379 = vst.msk [vmem:[%s3369 + $0x69] sm:$0xff] %vm749, %v3292
        %3380 = vst.msk [vmem:[%s3369 + $0x79] sm:$0xff] %vm749, %v3293
        %3381 = vst.msk [vmem:[%s3369 + $0x81] sm:$0xff] %vm749, %v3294
        %3382 = vst.msk [vmem:[%s3369 + $0x91] sm:$0xff] %vm749, %v3295
        %3383 = vst.msk [vmem:[%s3369 + $0x99] sm:$0xff] %vm749, %v3296
        %3384 = vst.msk [vmem:[%s3369 + $0xa9] sm:$0xff] %vm749, %v3297
        %3385 = vst.msk [vmem:[%s3369 + $0xb1] sm:$0xff] %vm749, %v3298
        %3386 = vst.msk [vmem:[%s3369 + $0xc1] sm:$0xff] %vm749, %v3299
        %3387 = vst.msk [vmem:[%s3369 + $0xc9] sm:$0xff] %vm749, %v3300
        %3388 = vst.msk [vmem:[%s3369 + $0xd9] sm:$0xff] %vm749, %v3301
        %3389 = vst.msk [vmem:[%s3369 + $0xe1] sm:$0xff] %vm749, %v3302
        %3390 = vst.msk [vmem:[%s3369 + $0xf1] sm:$0xff] %vm749, %v3303
        %3391 = vst.msk [vmem:[%s3369 + $0xf9] sm:$0xff] %vm749, %v3304
        %3392 = vst.msk [vmem:[%s3369 + $0x109] sm:$0xff] %vm749, %v3305
        %3393 = vst.msk [vmem:[%s3369 + $0x111] sm:$0xff] %vm749, %v3306
        %3394 = vst.msk [vmem:[%s3369 + $0x121] sm:$0xff] %vm749, %v3307
        %3395 = vst.msk [vmem:[%s3369 + $0x129] sm:$0xff] %vm749, %v3308
        %3396 = vst.msk [vmem:[%s3369 + $0x139] sm:$0xff] %vm749, %v3309
        %3397 = vst.msk [vmem:[%s3369 + $0x141] sm:$0xff] %vm749, %v3310
        %3398 = vst.msk [vmem:[%s3369 + $0x151] sm:$0xff] %vm749, %v3311
        %3399 = vst.msk [vmem:[%s3369 + $0x159] sm:$0xff] %vm749, %v3312
        %3400 = vst.msk [vmem:[%s3369 + $0x169] sm:$0xff] %vm749, %v3313
        %3401 = vst.msk [vmem:[%s3369 + $0x171] sm:$0xff] %vm749, %v3314
        %v3402 = vld [vmem:[#allocation3] sm:$0xff]
        %v3403 = vld [vmem:[#allocation3 + $0x8] sm:$0xff]
        %v3404 = vld [vmem:[#allocation3 + $0x18] sm:$0xff]
        %v3405 = vld [vmem:[#allocation3 + $0x20] sm:$0xff]
        %v3406 = vld [vmem:[#allocation3 + $0x30] sm:$0xff]
        %v3407 = vld [vmem:[#allocation3 + $0x38] sm:$0xff]
        %v3408 = vld [vmem:[#allocation3 + $0x48] sm:$0xff]
        %v3409 = vld [vmem:[#allocation3 + $0x50] sm:$0xff]
        %v3410 = vld [vmem:[#allocation3 + $0x60] sm:$0xff]
        %v3411 = vld [vmem:[#allocation3 + $0x68] sm:$0xff]
        %v3412 = vld [vmem:[#allocation3 + $0x78] sm:$0xff]
        %v3413 = vld [vmem:[#allocation3 + $0x80] sm:$0xff]
        %v3414 = vld [vmem:[#allocation3 + $0x90] sm:$0xff]
        %v3415 = vld [vmem:[#allocation3 + $0x98] sm:$0xff]
        %v3416 = vld [vmem:[#allocation3 + $0xa8] sm:$0xff]
        %v3417 = vld [vmem:[#allocation3 + $0xb0] sm:$0xff]
        %v3418 = vld [vmem:[#allocation3 + $0xc0] sm:$0xff]
        %v3419 = vld [vmem:[#allocation3 + $0xc8] sm:$0xff]
        %v3420 = vld [vmem:[#allocation3 + $0xd8] sm:$0xff]
        %v3421 = vld [vmem:[#allocation3 + $0xe0] sm:$0xff]
        %v3422 = vld [vmem:[#allocation3 + $0xf0] sm:$0xff]
        %v3423 = vld [vmem:[#allocation3 + $0xf8] sm:$0xff]
        %v3424 = vld [vmem:[#allocation3 + $0x108] sm:$0xff]
        %v3425 = vld [vmem:[#allocation3 + $0x110] sm:$0xff]
        %v3426 = vld [vmem:[#allocation3 + $0x120] sm:$0xff]
        %v3427 = vld [vmem:[#allocation3 + $0x128] sm:$0xff]
        %v3428 = vld [vmem:[#allocation3 + $0x138] sm:$0xff]
        %v3429 = vld [vmem:[#allocation3 + $0x140] sm:$0xff]
        %v3430 = vld [vmem:[#allocation3 + $0x150] sm:$0xff]
        %v3431 = vld [vmem:[#allocation3 + $0x158] sm:$0xff]
        %v3432 = vld [vmem:[#allocation3 + $0x168] sm:$0xff]
        %v3433 = vld [vmem:[#allocation3 + $0x170] sm:$0xff]
        %v3434 = vld [vmem:[#allocation3 + $0x1] sm:$0xff]
        %v3435 = vld [vmem:[#allocation3 + $0x9] sm:$0xff]
        %v3436 = vld [vmem:[#allocation3 + $0x19] sm:$0xff]
        %v3437 = vld [vmem:[#allocation3 + $0x21] sm:$0xff]
        %v3438 = vld [vmem:[#allocation3 + $0x31] sm:$0xff]
        %v3439 = vld [vmem:[#allocation3 + $0x39] sm:$0xff]
        %v3440 = vld [vmem:[#allocation3 + $0x49] sm:$0xff]
        %v3441 = vld [vmem:[#allocation3 + $0x51] sm:$0xff]
        %v3442 = vld [vmem:[#allocation3 + $0x61] sm:$0xff]
        %v3443 = vld [vmem:[#allocation3 + $0x69] sm:$0xff]
        %v3444 = vld [vmem:[#allocation3 + $0x79] sm:$0xff]
        %v3445 = vld [vmem:[#allocation3 + $0x81] sm:$0xff]
        %v3446 = vld [vmem:[#allocation3 + $0x91] sm:$0xff]
        %v3447 = vld [vmem:[#allocation3 + $0x99] sm:$0xff]
        %v3448 = vld [vmem:[#allocation3 + $0xa9] sm:$0xff]
        %v3449 = vld [vmem:[#allocation3 + $0xb1] sm:$0xff]
        %v3450 = vld [vmem:[#allocation3 + $0xc1] sm:$0xff]
        %v3451 = vld [vmem:[#allocation3 + $0xc9] sm:$0xff]
        %v3452 = vld [vmem:[#allocation3 + $0xd9] sm:$0xff]
        %v3453 = vld [vmem:[#allocation3 + $0xe1] sm:$0xff]
        %v3454 = vld [vmem:[#allocation3 + $0xf1] sm:$0xff]
        %v3455 = vld [vmem:[#allocation3 + $0xf9] sm:$0xff]
        %v3456 = vld [vmem:[#allocation3 + $0x109] sm:$0xff]
        %v3457 = vld [vmem:[#allocation3 + $0x111] sm:$0xff]
        %v3458 = vld [vmem:[#allocation3 + $0x121] sm:$0xff]
        %v3459 = vld [vmem:[#allocation3 + $0x129] sm:$0xff]
        %v3460 = vld [vmem:[#allocation3 + $0x139] sm:$0xff]
        %v3461 = vld [vmem:[#allocation3 + $0x141] sm:$0xff]
        %v3462 = vld [vmem:[#allocation3 + $0x151] sm:$0xff]
        %v3463 = vld [vmem:[#allocation3 + $0x159] sm:$0xff]
        %v3464 = vld [vmem:[#allocation3 + $0x169] sm:$0xff]
        %v3465 = vld [vmem:[#allocation3 + $0x171] sm:$0xff]
        %v3467 = vsel %vm749, %v3434, 0
        %v3470 = vsel %vm749, %v3435, 0
        %v3473 = vsel %vm749, %v3436, 0
        %v3476 = vsel %vm749, %v3437, 0
        %v3479 = vsel %vm749, %v3438, 0
        %v3482 = vsel %vm749, %v3439, 0
        %v3485 = vsel %vm749, %v3440, 0
        %v3488 = vsel %vm749, %v3441, 0
        %v3491 = vsel %vm749, %v3442, 0
        %v3494 = vsel %vm749, %v3443, 0
        %v3497 = vsel %vm749, %v3444, 0
        %v3500 = vsel %vm749, %v3445, 0
        %v3503 = vsel %vm749, %v3446, 0
        %v3506 = vsel %vm749, %v3447, 0
        %v3509 = vsel %vm749, %v3448, 0
        %v3512 = vsel %vm749, %v3449, 0
        %v3515 = vsel %vm749, %v3450, 0
        %v3518 = vsel %vm749, %v3451, 0
        %v3521 = vsel %vm749, %v3452, 0
        %v3524 = vsel %vm749, %v3453, 0
        %v3527 = vsel %vm749, %v3454, 0
        %v3530 = vsel %vm749, %v3455, 0
        %v3533 = vsel %vm749, %v3456, 0
        %v3536 = vsel %vm749, %v3457, 0
        %v3539 = vsel %vm749, %v3458, 0
        %v3542 = vsel %vm749, %v3459, 0
        %v3545 = vsel %vm749, %v3460, 0
        %v3548 = vsel %vm749, %v3461, 0
        %v3551 = vsel %vm749, %v3462, 0
        %v3554 = vsel %vm749, %v3463, 0
        %v3557 = vsel %vm749, %v3464, 0
        %v3560 = vsel %vm749, %v3465, 0
        %v3563 = vsel %vm985, %v816, 0
        %3565 = vmatpush.msra.mxu0 0.0
        %3566 = vmatpush.msra.mxu0 0.0
        %3567 = vmatpush.msra.mxu0 0.0
        %3568 = vmatpush.msra.mxu0 0.0
        %3569 = vmatpush.msra.mxu0 0.0
        %3570 = vmatpush.msra.mxu0 0.0
        %3571 = vmatpush.msra.mxu0 0.0
        %3572 = vmatpush.msra.mxu0 0.0
        %3573 = vmatpush.msra.mxu0 0.0
        %3574 = vmatpush.msra.mxu0 0.0
        %3575 = vmatpush.msra.mxu0 0.0
        %3576 = vmatpush.msra.mxu0 0.0
        %3577 = vmatpush.msra.mxu0 0.0
        %3578 = vmatpush.msra.mxu0 0.0
        %3579 = vmatpush.msra.mxu0 0.0
        %3580 = vmatpush.msra.mxu0 %v3563
        %3581 = vmatmul.f32.gmra.mxu0 %v3467
        %v3582 = vpop.f32.mrf.mxu0
        %v3583 = vadd.f32 0.0, %v3582
        %3584 = vmatmul.f32.gmra.mxu0 %v3470
        %v3585 = vpop.f32.mrf.mxu0
        %v3586 = vadd.f32 0.0, %v3585
        %3587 = vmatmul.f32.gmra.mxu0 %v3473
        %v3588 = vpop.f32.mrf.mxu0
        %v3589 = vadd.f32 0.0, %v3588
        %3590 = vmatmul.f32.gmra.mxu0 %v3476
        %v3591 = vpop.f32.mrf.mxu0
        %v3592 = vadd.f32 0.0, %v3591
        %3593 = vmatmul.f32.gmra.mxu0 %v3479
        %v3594 = vpop.f32.mrf.mxu0
        %v3595 = vadd.f32 0.0, %v3594
        %3596 = vmatmul.f32.gmra.mxu0 %v3482
        %v3597 = vpop.f32.mrf.mxu0
        %v3598 = vadd.f32 0.0, %v3597
        %3599 = vmatmul.f32.gmra.mxu0 %v3485
        %v3600 = vpop.f32.mrf.mxu0
        %v3601 = vadd.f32 0.0, %v3600
        %3602 = vmatmul.f32.gmra.mxu0 %v3488
        %v3603 = vpop.f32.mrf.mxu0
        %v3604 = vadd.f32 0.0, %v3603
        %3605 = vmatmul.f32.gmra.mxu0 %v3491
        %v3606 = vpop.f32.mrf.mxu0
        %v3607 = vadd.f32 0.0, %v3606
        %3608 = vmatmul.f32.gmra.mxu0 %v3494
        %v3609 = vpop.f32.mrf.mxu0
        %v3610 = vadd.f32 0.0, %v3609
        %3611 = vmatmul.f32.gmra.mxu0 %v3497
        %v3612 = vpop.f32.mrf.mxu0
        %v3613 = vadd.f32 0.0, %v3612
        %3614 = vmatmul.f32.gmra.mxu0 %v3500
        %v3615 = vpop.f32.mrf.mxu0
        %v3616 = vadd.f32 0.0, %v3615
        %3617 = vmatmul.f32.gmra.mxu0 %v3503
        %v3618 = vpop.f32.mrf.mxu0
        %v3619 = vadd.f32 0.0, %v3618
        %3620 = vmatmul.f32.gmra.mxu0 %v3506
        %v3621 = vpop.f32.mrf.mxu0
        %v3622 = vadd.f32 0.0, %v3621
        %3623 = vmatmul.f32.gmra.mxu0 %v3509
        %v3624 = vpop.f32.mrf.mxu0
        %v3625 = vadd.f32 0.0, %v3624
        %3626 = vmatmul.f32.gmra.mxu0 %v3512
        %v3627 = vpop.f32.mrf.mxu0
        %v3628 = vadd.f32 0.0, %v3627
        %3629 = vmatmul.f32.gmra.mxu0 %v3515
        %v3630 = vpop.f32.mrf.mxu0
        %v3631 = vadd.f32 0.0, %v3630
        %3632 = vmatmul.f32.gmra.mxu0 %v3518
        %v3633 = vpop.f32.mrf.mxu0
        %v3634 = vadd.f32 0.0, %v3633
        %3635 = vmatmul.f32.gmra.mxu0 %v3521
        %v3636 = vpop.f32.mrf.mxu0
        %v3637 = vadd.f32 0.0, %v3636
        %3638 = vmatmul.f32.gmra.mxu0 %v3524
        %v3639 = vpop.f32.mrf.mxu0
        %v3640 = vadd.f32 0.0, %v3639
        %3641 = vmatmul.f32.gmra.mxu0 %v3527
        %v3642 = vpop.f32.mrf.mxu0
        %v3643 = vadd.f32 0.0, %v3642
        %3644 = vmatmul.f32.gmra.mxu0 %v3530
        %v3645 = vpop.f32.mrf.mxu0
        %v3646 = vadd.f32 0.0, %v3645
        %3647 = vmatmul.f32.gmra.mxu0 %v3533
        %v3648 = vpop.f32.mrf.mxu0
        %v3649 = vadd.f32 0.0, %v3648
        %3650 = vmatmul.f32.gmra.mxu0 %v3536
        %v3651 = vpop.f32.mrf.mxu0
        %v3652 = vadd.f32 0.0, %v3651
        %3653 = vmatmul.f32.gmra.mxu0 %v3539
        %v3654 = vpop.f32.mrf.mxu0
        %v3655 = vadd.f32 0.0, %v3654
        %3656 = vmatmul.f32.gmra.mxu0 %v3542
        %v3657 = vpop.f32.mrf.mxu0
        %v3658 = vadd.f32 0.0, %v3657
        %3659 = vmatmul.f32.gmra.mxu0 %v3545
        %v3660 = vpop.f32.mrf.mxu0
        %v3661 = vadd.f32 0.0, %v3660
        %3662 = vmatmul.f32.gmra.mxu0 %v3548
        %v3663 = vpop.f32.mrf.mxu0
        %v3664 = vadd.f32 0.0, %v3663
        %3665 = vmatmul.f32.gmra.mxu0 %v3551
        %v3666 = vpop.f32.mrf.mxu0
        %v3667 = vadd.f32 0.0, %v3666
        %3668 = vmatmul.f32.gmra.mxu0 %v3554
        %v3669 = vpop.f32.mrf.mxu0
        %v3670 = vadd.f32 0.0, %v3669
        %3671 = vmatmul.f32.gmra.mxu0 %v3557
        %v3672 = vpop.f32.mrf.mxu0
        %v3673 = vadd.f32 0.0, %v3672
        %3674 = vmatmul.f32.gmra.mxu0 %v3560
        %v3675 = vpop.f32.mrf.mxu0
        %v3676 = vadd.f32 0.0, %v3675
        %3677 = vdwg.mxu0
        %v3679 = vsel %vm749, %v3402, 0
        %v3682 = vsel %vm749, %v3403, 0
        %v3685 = vsel %vm749, %v3404, 0
        %v3688 = vsel %vm749, %v3405, 0
        %v3691 = vsel %vm749, %v3406, 0
        %v3694 = vsel %vm749, %v3407, 0
        %v3697 = vsel %vm749, %v3408, 0
        %v3700 = vsel %vm749, %v3409, 0
        %v3703 = vsel %vm749, %v3410, 0
        %v3706 = vsel %vm749, %v3411, 0
        %v3709 = vsel %vm749, %v3412, 0
        %v3712 = vsel %vm749, %v3413, 0
        %v3715 = vsel %vm749, %v3414, 0
        %v3718 = vsel %vm749, %v3415, 0
        %v3721 = vsel %vm749, %v3416, 0
        %v3724 = vsel %vm749, %v3417, 0
        %v3727 = vsel %vm749, %v3418, 0
        %v3730 = vsel %vm749, %v3419, 0
        %v3733 = vsel %vm749, %v3420, 0
        %v3736 = vsel %vm749, %v3421, 0
        %v3739 = vsel %vm749, %v3422, 0
        %v3742 = vsel %vm749, %v3423, 0
        %v3745 = vsel %vm749, %v3424, 0
        %v3748 = vsel %vm749, %v3425, 0
        %v3751 = vsel %vm749, %v3426, 0
        %v3754 = vsel %vm749, %v3427, 0
        %v3757 = vsel %vm749, %v3428, 0
        %v3760 = vsel %vm749, %v3429, 0
        %v3763 = vsel %vm749, %v3430, 0
        %v3766 = vsel %vm749, %v3431, 0
        %v3769 = vsel %vm749, %v3432, 0
        %v3772 = vsel %vm749, %v3433, 0
        %v3775 = vsel %vm985, %v815, 0
        %3777 = vmatpush.msra.mxu0 0.0
        %3778 = vmatpush.msra.mxu0 0.0
        %3779 = vmatpush.msra.mxu0 0.0
        %3780 = vmatpush.msra.mxu0 0.0
        %3781 = vmatpush.msra.mxu0 0.0
        %3782 = vmatpush.msra.mxu0 0.0
        %3783 = vmatpush.msra.mxu0 0.0
        %3784 = vmatpush.msra.mxu0 0.0
        %3785 = vmatpush.msra.mxu0 0.0
        %3786 = vmatpush.msra.mxu0 0.0
        %3787 = vmatpush.msra.mxu0 0.0
        %3788 = vmatpush.msra.mxu0 0.0
        %3789 = vmatpush.msra.mxu0 0.0
        %3790 = vmatpush.msra.mxu0 0.0
        %3791 = vmatpush.msra.mxu0 0.0
        %3792 = vmatpush.msra.mxu0 %v3775
        %3793 = vmatmul.f32.gmra.mxu0 %v3679
        %v3794 = vpop.f32.mrf.mxu0
        %v3795 = vadd.f32 %v3583, %v3794
        %3796 = vmatmul.f32.gmra.mxu0 %v3682
        %v3797 = vpop.f32.mrf.mxu0
        %v3798 = vadd.f32 %v3586, %v3797
        %3799 = vmatmul.f32.gmra.mxu0 %v3685
        %v3800 = vpop.f32.mrf.mxu0
        %v3801 = vadd.f32 %v3589, %v3800
        %3802 = vmatmul.f32.gmra.mxu0 %v3688
        %v3803 = vpop.f32.mrf.mxu0
        %v3804 = vadd.f32 %v3592, %v3803
        %3805 = vmatmul.f32.gmra.mxu0 %v3691
        %v3806 = vpop.f32.mrf.mxu0
        %v3807 = vadd.f32 %v3595, %v3806
        %3808 = vmatmul.f32.gmra.mxu0 %v3694
        %v3809 = vpop.f32.mrf.mxu0
        %v3810 = vadd.f32 %v3598, %v3809
        %3811 = vmatmul.f32.gmra.mxu0 %v3697
        %v3812 = vpop.f32.mrf.mxu0
        %v3813 = vadd.f32 %v3601, %v3812
        %3814 = vmatmul.f32.gmra.mxu0 %v3700
        %v3815 = vpop.f32.mrf.mxu0
        %v3816 = vadd.f32 %v3604, %v3815
        %3817 = vmatmul.f32.gmra.mxu0 %v3703
        %v3818 = vpop.f32.mrf.mxu0
        %v3819 = vadd.f32 %v3607, %v3818
        %3820 = vmatmul.f32.gmra.mxu0 %v3706
        %v3821 = vpop.f32.mrf.mxu0
        %v3822 = vadd.f32 %v3610, %v3821
        %3823 = vmatmul.f32.gmra.mxu0 %v3709
        %v3824 = vpop.f32.mrf.mxu0
        %v3825 = vadd.f32 %v3613, %v3824
        %3826 = vmatmul.f32.gmra.mxu0 %v3712
        %v3827 = vpop.f32.mrf.mxu0
        %v3828 = vadd.f32 %v3616, %v3827
        %3829 = vmatmul.f32.gmra.mxu0 %v3715
        %v3830 = vpop.f32.mrf.mxu0
        %v3831 = vadd.f32 %v3619, %v3830
        %3832 = vmatmul.f32.gmra.mxu0 %v3718
        %v3833 = vpop.f32.mrf.mxu0
        %v3834 = vadd.f32 %v3622, %v3833
        %3835 = vmatmul.f32.gmra.mxu0 %v3721
        %v3836 = vpop.f32.mrf.mxu0
        %v3837 = vadd.f32 %v3625, %v3836
        %3838 = vmatmul.f32.gmra.mxu0 %v3724
        %v3839 = vpop.f32.mrf.mxu0
        %v3840 = vadd.f32 %v3628, %v3839
        %3841 = vmatmul.f32.gmra.mxu0 %v3727
        %v3842 = vpop.f32.mrf.mxu0
        %v3843 = vadd.f32 %v3631, %v3842
        %3844 = vmatmul.f32.gmra.mxu0 %v3730
        %v3845 = vpop.f32.mrf.mxu0
        %v3846 = vadd.f32 %v3634, %v3845
        %3847 = vmatmul.f32.gmra.mxu0 %v3733
        %v3848 = vpop.f32.mrf.mxu0
        %v3849 = vadd.f32 %v3637, %v3848
        %3850 = vmatmul.f32.gmra.mxu0 %v3736
        %v3851 = vpop.f32.mrf.mxu0
        %v3852 = vadd.f32 %v3640, %v3851
        %3853 = vmatmul.f32.gmra.mxu0 %v3739
        %v3854 = vpop.f32.mrf.mxu0
        %v3855 = vadd.f32 %v3643, %v3854
        %3856 = vmatmul.f32.gmra.mxu0 %v3742
        %v3857 = vpop.f32.mrf.mxu0
        %v3858 = vadd.f32 %v3646, %v3857
        %3859 = vmatmul.f32.gmra.mxu0 %v3745
        %v3860 = vpop.f32.mrf.mxu0
        %v3861 = vadd.f32 %v3649, %v3860
        %3862 = vmatmul.f32.gmra.mxu0 %v3748
        %v3863 = vpop.f32.mrf.mxu0
        %v3864 = vadd.f32 %v3652, %v3863
        %3865 = vmatmul.f32.gmra.mxu0 %v3751
        %v3866 = vpop.f32.mrf.mxu0
        %v3867 = vadd.f32 %v3655, %v3866
        %3868 = vmatmul.f32.gmra.mxu0 %v3754
        %v3869 = vpop.f32.mrf.mxu0
        %v3870 = vadd.f32 %v3658, %v3869
        %3871 = vmatmul.f32.gmra.mxu0 %v3757
        %v3872 = vpop.f32.mrf.mxu0
        %v3873 = vadd.f32 %v3661, %v3872
        %3874 = vmatmul.f32.gmra.mxu0 %v3760
        %v3875 = vpop.f32.mrf.mxu0
        %v3876 = vadd.f32 %v3664, %v3875
        %3877 = vmatmul.f32.gmra.mxu0 %v3763
        %v3878 = vpop.f32.mrf.mxu0
        %v3879 = vadd.f32 %v3667, %v3878
        %3880 = vmatmul.f32.gmra.mxu0 %v3766
        %v3881 = vpop.f32.mrf.mxu0
        %v3882 = vadd.f32 %v3670, %v3881
        %3883 = vmatmul.f32.gmra.mxu0 %v3769
        %v3884 = vpop.f32.mrf.mxu0
        %v3885 = vadd.f32 %v3673, %v3884
        %3886 = vmatmul.f32.gmra.mxu0 %v3772
        %v3887 = vpop.f32.mrf.mxu0
        %v3888 = vadd.f32 %v3676, %v3887
        %3889 = vdwg.mxu0
        %v3890 = vld [vmem:[#allocation3 + $0x2] sm:$0xff]
        %v3891 = vld [vmem:[#allocation3 + $0xa] sm:$0xff]
        %v3892 = vld [vmem:[#allocation3 + $0x1a] sm:$0xff]
        %v3893 = vld [vmem:[#allocation3 + $0x22] sm:$0xff]
        %v3894 = vld [vmem:[#allocation3 + $0x32] sm:$0xff]
        %v3895 = vld [vmem:[#allocation3 + $0x3a] sm:$0xff]
        %v3896 = vld [vmem:[#allocation3 + $0x4a] sm:$0xff]
        %v3897 = vld [vmem:[#allocation3 + $0x52] sm:$0xff]
        %v3898 = vld [vmem:[#allocation3 + $0x62] sm:$0xff]
        %v3899 = vld [vmem:[#allocation3 + $0x6a] sm:$0xff]
        %v3900 = vld [vmem:[#allocation3 + $0x7a] sm:$0xff]
        %v3901 = vld [vmem:[#allocation3 + $0x82] sm:$0xff]
        %v3902 = vld [vmem:[#allocation3 + $0x92] sm:$0xff]
        %v3903 = vld [vmem:[#allocation3 + $0x9a] sm:$0xff]
        %v3904 = vld [vmem:[#allocation3 + $0xaa] sm:$0xff]
        %v3905 = vld [vmem:[#allocation3 + $0xb2] sm:$0xff]
        %v3906 = vld [vmem:[#allocation3 + $0xc2] sm:$0xff]
        %v3907 = vld [vmem:[#allocation3 + $0xca] sm:$0xff]
        %v3908 = vld [vmem:[#allocation3 + $0xda] sm:$0xff]
        %v3909 = vld [vmem:[#allocation3 + $0xe2] sm:$0xff]
        %v3910 = vld [vmem:[#allocation3 + $0xf2] sm:$0xff]
        %v3911 = vld [vmem:[#allocation3 + $0xfa] sm:$0xff]
        %v3912 = vld [vmem:[#allocation3 + $0x10a] sm:$0xff]
        %v3913 = vld [vmem:[#allocation3 + $0x112] sm:$0xff]
        %v3914 = vld [vmem:[#allocation3 + $0x122] sm:$0xff]
        %v3915 = vld [vmem:[#allocation3 + $0x12a] sm:$0xff]
        %v3916 = vld [vmem:[#allocation3 + $0x13a] sm:$0xff]
        %v3917 = vld [vmem:[#allocation3 + $0x142] sm:$0xff]
        %v3918 = vld [vmem:[#allocation3 + $0x152] sm:$0xff]
        %v3919 = vld [vmem:[#allocation3 + $0x15a] sm:$0xff]
        %v3920 = vld [vmem:[#allocation3 + $0x16a] sm:$0xff]
        %v3921 = vld [vmem:[#allocation3 + $0x172] sm:$0xff]
        %v3923 = vsel %vm749, %v3890, 0
        %v3926 = vsel %vm749, %v3891, 0
        %v3929 = vsel %vm749, %v3892, 0
        %v3932 = vsel %vm749, %v3893, 0
        %v3935 = vsel %vm749, %v3894, 0
        %v3938 = vsel %vm749, %v3895, 0
        %v3941 = vsel %vm749, %v3896, 0
        %v3944 = vsel %vm749, %v3897, 0
        %v3947 = vsel %vm749, %v3898, 0
        %v3950 = vsel %vm749, %v3899, 0
        %v3953 = vsel %vm749, %v3900, 0
        %v3956 = vsel %vm749, %v3901, 0
        %v3959 = vsel %vm749, %v3902, 0
        %v3962 = vsel %vm749, %v3903, 0
        %v3965 = vsel %vm749, %v3904, 0
        %v3968 = vsel %vm749, %v3905, 0
        %v3971 = vsel %vm749, %v3906, 0
        %v3974 = vsel %vm749, %v3907, 0
        %v3977 = vsel %vm749, %v3908, 0
        %v3980 = vsel %vm749, %v3909, 0
        %v3983 = vsel %vm749, %v3910, 0
        %v3986 = vsel %vm749, %v3911, 0
        %v3989 = vsel %vm749, %v3912, 0
        %v3992 = vsel %vm749, %v3913, 0
        %v3995 = vsel %vm749, %v3914, 0
        %v3998 = vsel %vm749, %v3915, 0
        %v4001 = vsel %vm749, %v3916, 0
        %v4004 = vsel %vm749, %v3917, 0
        %v4007 = vsel %vm749, %v3918, 0
        %v4010 = vsel %vm749, %v3919, 0
        %v4013 = vsel %vm749, %v3920, 0
        %v4016 = vsel %vm749, %v3921, 0
        %v4019 = vsel %vm985, %v817, 0
        %4021 = vmatpush.msra.mxu0 0.0
        %4022 = vmatpush.msra.mxu0 0.0
        %4023 = vmatpush.msra.mxu0 0.0
        %4024 = vmatpush.msra.mxu0 0.0
        %4025 = vmatpush.msra.mxu0 0.0
        %4026 = vmatpush.msra.mxu0 0.0
        %4027 = vmatpush.msra.mxu0 0.0
        %4028 = vmatpush.msra.mxu0 0.0
        %4029 = vmatpush.msra.mxu0 0.0
        %4030 = vmatpush.msra.mxu0 0.0
        %4031 = vmatpush.msra.mxu0 0.0
        %4032 = vmatpush.msra.mxu0 0.0
        %4033 = vmatpush.msra.mxu0 0.0
        %4034 = vmatpush.msra.mxu0 0.0
        %4035 = vmatpush.msra.mxu0 0.0
        %4036 = vmatpush.msra.mxu0 %v4019
        %4037 = vmatmul.f32.gmra.mxu0 %v3923
        %v4038 = vpop.f32.mrf.mxu0
        %v4039 = vadd.f32 0.0, %v4038
        %4040 = vmatmul.f32.gmra.mxu0 %v3926
        %v4041 = vpop.f32.mrf.mxu0
        %v4042 = vadd.f32 0.0, %v4041
        %4043 = vmatmul.f32.gmra.mxu0 %v3929
        %v4044 = vpop.f32.mrf.mxu0
        %v4045 = vadd.f32 0.0, %v4044
        %4046 = vmatmul.f32.gmra.mxu0 %v3932
        %v4047 = vpop.f32.mrf.mxu0
        %v4048 = vadd.f32 0.0, %v4047
        %4049 = vmatmul.f32.gmra.mxu0 %v3935
        %v4050 = vpop.f32.mrf.mxu0
        %v4051 = vadd.f32 0.0, %v4050
        %4052 = vmatmul.f32.gmra.mxu0 %v3938
        %v4053 = vpop.f32.mrf.mxu0
        %v4054 = vadd.f32 0.0, %v4053
        %4055 = vmatmul.f32.gmra.mxu0 %v3941
        %v4056 = vpop.f32.mrf.mxu0
        %v4057 = vadd.f32 0.0, %v4056
        %4058 = vmatmul.f32.gmra.mxu0 %v3944
        %v4059 = vpop.f32.mrf.mxu0
        %v4060 = vadd.f32 0.0, %v4059
        %4061 = vmatmul.f32.gmra.mxu0 %v3947
        %v4062 = vpop.f32.mrf.mxu0
        %v4063 = vadd.f32 0.0, %v4062
        %4064 = vmatmul.f32.gmra.mxu0 %v3950
        %v4065 = vpop.f32.mrf.mxu0
        %v4066 = vadd.f32 0.0, %v4065
        %4067 = vmatmul.f32.gmra.mxu0 %v3953
        %v4068 = vpop.f32.mrf.mxu0
        %v4069 = vadd.f32 0.0, %v4068
        %4070 = vmatmul.f32.gmra.mxu0 %v3956
        %v4071 = vpop.f32.mrf.mxu0
        %v4072 = vadd.f32 0.0, %v4071
        %4073 = vmatmul.f32.gmra.mxu0 %v3959
        %v4074 = vpop.f32.mrf.mxu0
        %v4075 = vadd.f32 0.0, %v4074
        %4076 = vmatmul.f32.gmra.mxu0 %v3962
        %v4077 = vpop.f32.mrf.mxu0
        %v4078 = vadd.f32 0.0, %v4077
        %4079 = vmatmul.f32.gmra.mxu0 %v3965
        %v4080 = vpop.f32.mrf.mxu0
        %v4081 = vadd.f32 0.0, %v4080
        %4082 = vmatmul.f32.gmra.mxu0 %v3968
        %v4083 = vpop.f32.mrf.mxu0
        %v4084 = vadd.f32 0.0, %v4083
        %4085 = vmatmul.f32.gmra.mxu0 %v3971
        %v4086 = vpop.f32.mrf.mxu0
        %v4087 = vadd.f32 0.0, %v4086
        %4088 = vmatmul.f32.gmra.mxu0 %v3974
        %v4089 = vpop.f32.mrf.mxu0
        %v4090 = vadd.f32 0.0, %v4089
        %4091 = vmatmul.f32.gmra.mxu0 %v3977
        %v4092 = vpop.f32.mrf.mxu0
        %v4093 = vadd.f32 0.0, %v4092
        %4094 = vmatmul.f32.gmra.mxu0 %v3980
        %v4095 = vpop.f32.mrf.mxu0
        %v4096 = vadd.f32 0.0, %v4095
        %4097 = vmatmul.f32.gmra.mxu0 %v3983
        %v4098 = vpop.f32.mrf.mxu0
        %v4099 = vadd.f32 0.0, %v4098
        %4100 = vmatmul.f32.gmra.mxu0 %v3986
        %v4101 = vpop.f32.mrf.mxu0
        %v4102 = vadd.f32 0.0, %v4101
        %4103 = vmatmul.f32.gmra.mxu0 %v3989
        %v4104 = vpop.f32.mrf.mxu0
        %v4105 = vadd.f32 0.0, %v4104
        %4106 = vmatmul.f32.gmra.mxu0 %v3992
        %v4107 = vpop.f32.mrf.mxu0
        %v4108 = vadd.f32 0.0, %v4107
        %4109 = vmatmul.f32.gmra.mxu0 %v3995
        %v4110 = vpop.f32.mrf.mxu0
        %v4111 = vadd.f32 0.0, %v4110
        %4112 = vmatmul.f32.gmra.mxu0 %v3998
        %v4113 = vpop.f32.mrf.mxu0
        %v4114 = vadd.f32 0.0, %v4113
        %4115 = vmatmul.f32.gmra.mxu0 %v4001
        %v4116 = vpop.f32.mrf.mxu0
        %v4117 = vadd.f32 0.0, %v4116
        %4118 = vmatmul.f32.gmra.mxu0 %v4004
        %v4119 = vpop.f32.mrf.mxu0
        %v4120 = vadd.f32 0.0, %v4119
        %4121 = vmatmul.f32.gmra.mxu0 %v4007
        %v4122 = vpop.f32.mrf.mxu0
        %v4123 = vadd.f32 0.0, %v4122
        %4124 = vmatmul.f32.gmra.mxu0 %v4010
        %v4125 = vpop.f32.mrf.mxu0
        %v4126 = vadd.f32 0.0, %v4125
        %4127 = vmatmul.f32.gmra.mxu0 %v4013
        %v4128 = vpop.f32.mrf.mxu0
        %v4129 = vadd.f32 0.0, %v4128
        %4130 = vmatmul.f32.gmra.mxu0 %v4016
        %v4131 = vpop.f32.mrf.mxu0
        %v4132 = vadd.f32 0.0, %v4131
        %4133 = vdwg.mxu0
        %v4134 = vadd.f32 %v3795, %v4039
        %v4135 = vadd.f32 %v3798, %v4042
        %v4136 = vadd.f32 %v3801, %v4045
        %v4137 = vadd.f32 %v3804, %v4048
        %v4138 = vadd.f32 %v3807, %v4051
        %v4139 = vadd.f32 %v3810, %v4054
        %v4140 = vadd.f32 %v3813, %v4057
        %v4141 = vadd.f32 %v3816, %v4060
        %v4142 = vadd.f32 %v3819, %v4063
        %v4143 = vadd.f32 %v3822, %v4066
        %v4144 = vadd.f32 %v3825, %v4069
        %v4145 = vadd.f32 %v3828, %v4072
        %v4146 = vadd.f32 %v3831, %v4075
        %v4147 = vadd.f32 %v3834, %v4078
        %v4148 = vadd.f32 %v3837, %v4081
        %v4149 = vadd.f32 %v3840, %v4084
        %v4150 = vadd.f32 %v3843, %v4087
        %v4151 = vadd.f32 %v3846, %v4090
        %v4152 = vadd.f32 %v3849, %v4093
        %v4153 = vadd.f32 %v3852, %v4096
        %v4154 = vadd.f32 %v3855, %v4099
        %v4155 = vadd.f32 %v3858, %v4102
        %v4156 = vadd.f32 %v3861, %v4105
        %v4157 = vadd.f32 %v3864, %v4108
        %v4158 = vadd.f32 %v3867, %v4111
        %v4159 = vadd.f32 %v3870, %v4114
        %v4160 = vadd.f32 %v3873, %v4117
        %v4161 = vadd.f32 %v3876, %v4120
        %v4162 = vadd.f32 %v3879, %v4123
        %v4163 = vadd.f32 %v3882, %v4126
        %v4164 = vadd.f32 %v3885, %v4129
        %v4165 = vadd.f32 %v3888, %v4132
        %v4166 = vld [vmem:[%s3369] sm:$0xff]
        %v4167 = vld [vmem:[%s3369 + $0x8] sm:$0xff]
        %v4168 = vld [vmem:[%s3369 + $0x18] sm:$0xff]
        %v4169 = vld [vmem:[%s3369 + $0x20] sm:$0xff]
        %v4170 = vld [vmem:[%s3369 + $0x30] sm:$0xff]
        %v4171 = vld [vmem:[%s3369 + $0x38] sm:$0xff]
        %v4172 = vld [vmem:[%s3369 + $0x48] sm:$0xff]
        %v4173 = vld [vmem:[%s3369 + $0x50] sm:$0xff]
        %v4174 = vld [vmem:[%s3369 + $0x60] sm:$0xff]
        %v4175 = vld [vmem:[%s3369 + $0x68] sm:$0xff]
        %v4176 = vld [vmem:[%s3369 + $0x78] sm:$0xff]
        %v4177 = vld [vmem:[%s3369 + $0x80] sm:$0xff]
        %v4178 = vld [vmem:[%s3369 + $0x90] sm:$0xff]
        %v4179 = vld [vmem:[%s3369 + $0x98] sm:$0xff]
        %v4180 = vld [vmem:[%s3369 + $0xa8] sm:$0xff]
        %v4181 = vld [vmem:[%s3369 + $0xb0] sm:$0xff]
        %v4182 = vld [vmem:[%s3369 + $0xc0] sm:$0xff]
        %v4183 = vld [vmem:[%s3369 + $0xc8] sm:$0xff]
        %v4184 = vld [vmem:[%s3369 + $0xd8] sm:$0xff]
        %v4185 = vld [vmem:[%s3369 + $0xe0] sm:$0xff]
        %v4186 = vld [vmem:[%s3369 + $0xf0] sm:$0xff]
        %v4187 = vld [vmem:[%s3369 + $0xf8] sm:$0xff]
        %v4188 = vld [vmem:[%s3369 + $0x108] sm:$0xff]
        %v4189 = vld [vmem:[%s3369 + $0x110] sm:$0xff]
        %v4190 = vld [vmem:[%s3369 + $0x120] sm:$0xff]
        %v4191 = vld [vmem:[%s3369 + $0x128] sm:$0xff]
        %v4192 = vld [vmem:[%s3369 + $0x138] sm:$0xff]
        %v4193 = vld [vmem:[%s3369 + $0x140] sm:$0xff]
        %v4194 = vld [vmem:[%s3369 + $0x150] sm:$0xff]
        %v4195 = vld [vmem:[%s3369 + $0x158] sm:$0xff]
        %v4196 = vld [vmem:[%s3369 + $0x168] sm:$0xff]
        %v4197 = vld [vmem:[%s3369 + $0x170] sm:$0xff]
        %v4199 = vsel %vm749, %v4166, 0
        %v4202 = vsel %vm749, %v4167, 0
        %v4205 = vsel %vm749, %v4168, 0
        %v4208 = vsel %vm749, %v4169, 0
        %v4211 = vsel %vm749, %v4170, 0
        %v4214 = vsel %vm749, %v4171, 0
        %v4217 = vsel %vm749, %v4172, 0
        %v4220 = vsel %vm749, %v4173, 0
        %v4223 = vsel %vm749, %v4174, 0
        %v4226 = vsel %vm749, %v4175, 0
        %v4229 = vsel %vm749, %v4176, 0
        %v4232 = vsel %vm749, %v4177, 0
        %v4235 = vsel %vm749, %v4178, 0
        %v4238 = vsel %vm749, %v4179, 0
        %v4241 = vsel %vm749, %v4180, 0
        %v4244 = vsel %vm749, %v4181, 0
        %v4247 = vsel %vm749, %v4182, 0
        %v4250 = vsel %vm749, %v4183, 0
        %v4253 = vsel %vm749, %v4184, 0
        %v4256 = vsel %vm749, %v4185, 0
        %v4259 = vsel %vm749, %v4186, 0
        %v4262 = vsel %vm749, %v4187, 0
        %v4265 = vsel %vm749, %v4188, 0
        %v4268 = vsel %vm749, %v4189, 0
        %v4271 = vsel %vm749, %v4190, 0
        %v4274 = vsel %vm749, %v4191, 0
        %v4277 = vsel %vm749, %v4192, 0
        %v4280 = vsel %vm749, %v4193, 0
        %v4283 = vsel %vm749, %v4194, 0
        %v4286 = vsel %vm749, %v4195, 0
        %v4289 = vsel %vm749, %v4196, 0
        %v4292 = vsel %vm749, %v4197, 0
        %v4295 = vsel %vm985, %v818, 0
        %4297 = vmatpush.msra.mxu0 0.0
        %4298 = vmatpush.msra.mxu0 0.0
        %4299 = vmatpush.msra.mxu0 0.0
        %4300 = vmatpush.msra.mxu0 0.0
        %4301 = vmatpush.msra.mxu0 0.0
        %4302 = vmatpush.msra.mxu0 0.0
        %4303 = vmatpush.msra.mxu0 0.0
        %4304 = vmatpush.msra.mxu0 0.0
        %4305 = vmatpush.msra.mxu0 0.0
        %4306 = vmatpush.msra.mxu0 0.0
        %4307 = vmatpush.msra.mxu0 0.0
        %4308 = vmatpush.msra.mxu0 0.0
        %4309 = vmatpush.msra.mxu0 0.0
        %4310 = vmatpush.msra.mxu0 0.0
        %4311 = vmatpush.msra.mxu0 0.0
        %4312 = vmatpush.msra.mxu0 %v4295
        %4313 = vmatmul.f32.gmra.mxu0 %v4199
        %v4314 = vpop.f32.mrf.mxu0
        %v4315 = vadd.f32 0.0, %v4314
        %4316 = vmatmul.f32.gmra.mxu0 %v4202
        %v4317 = vpop.f32.mrf.mxu0
        %v4318 = vadd.f32 0.0, %v4317
        %4319 = vmatmul.f32.gmra.mxu0 %v4205
        %v4320 = vpop.f32.mrf.mxu0
        %v4321 = vadd.f32 0.0, %v4320
        %4322 = vmatmul.f32.gmra.mxu0 %v4208
        %v4323 = vpop.f32.mrf.mxu0
        %v4324 = vadd.f32 0.0, %v4323
        %4325 = vmatmul.f32.gmra.mxu0 %v4211
        %v4326 = vpop.f32.mrf.mxu0
        %v4327 = vadd.f32 0.0, %v4326
        %4328 = vmatmul.f32.gmra.mxu0 %v4214
        %v4329 = vpop.f32.mrf.mxu0
        %v4330 = vadd.f32 0.0, %v4329
        %4331 = vmatmul.f32.gmra.mxu0 %v4217
        %v4332 = vpop.f32.mrf.mxu0
        %v4333 = vadd.f32 0.0, %v4332
        %4334 = vmatmul.f32.gmra.mxu0 %v4220
        %v4335 = vpop.f32.mrf.mxu0
        %v4336 = vadd.f32 0.0, %v4335
        %4337 = vmatmul.f32.gmra.mxu0 %v4223
        %v4338 = vpop.f32.mrf.mxu0
        %v4339 = vadd.f32 0.0, %v4338
        %4340 = vmatmul.f32.gmra.mxu0 %v4226
        %v4341 = vpop.f32.mrf.mxu0
        %v4342 = vadd.f32 0.0, %v4341
        %4343 = vmatmul.f32.gmra.mxu0 %v4229
        %v4344 = vpop.f32.mrf.mxu0
        %v4345 = vadd.f32 0.0, %v4344
        %4346 = vmatmul.f32.gmra.mxu0 %v4232
        %v4347 = vpop.f32.mrf.mxu0
        %v4348 = vadd.f32 0.0, %v4347
        %4349 = vmatmul.f32.gmra.mxu0 %v4235
        %v4350 = vpop.f32.mrf.mxu0
        %v4351 = vadd.f32 0.0, %v4350
        %4352 = vmatmul.f32.gmra.mxu0 %v4238
        %v4353 = vpop.f32.mrf.mxu0
        %v4354 = vadd.f32 0.0, %v4353
        %4355 = vmatmul.f32.gmra.mxu0 %v4241
        %v4356 = vpop.f32.mrf.mxu0
        %v4357 = vadd.f32 0.0, %v4356
        %4358 = vmatmul.f32.gmra.mxu0 %v4244
        %v4359 = vpop.f32.mrf.mxu0
        %v4360 = vadd.f32 0.0, %v4359
        %4361 = vmatmul.f32.gmra.mxu0 %v4247
        %v4362 = vpop.f32.mrf.mxu0
        %v4363 = vadd.f32 0.0, %v4362
        %4364 = vmatmul.f32.gmra.mxu0 %v4250
        %v4365 = vpop.f32.mrf.mxu0
        %v4366 = vadd.f32 0.0, %v4365
        %4367 = vmatmul.f32.gmra.mxu0 %v4253
        %v4368 = vpop.f32.mrf.mxu0
        %v4369 = vadd.f32 0.0, %v4368
        %4370 = vmatmul.f32.gmra.mxu0 %v4256
        %v4371 = vpop.f32.mrf.mxu0
        %v4372 = vadd.f32 0.0, %v4371
        %4373 = vmatmul.f32.gmra.mxu0 %v4259
        %v4374 = vpop.f32.mrf.mxu0
        %v4375 = vadd.f32 0.0, %v4374
        %4376 = vmatmul.f32.gmra.mxu0 %v4262
        %v4377 = vpop.f32.mrf.mxu0
        %v4378 = vadd.f32 0.0, %v4377
        %4379 = vmatmul.f32.gmra.mxu0 %v4265
        %v4380 = vpop.f32.mrf.mxu0
        %v4381 = vadd.f32 0.0, %v4380
        %4382 = vmatmul.f32.gmra.mxu0 %v4268
        %v4383 = vpop.f32.mrf.mxu0
        %v4384 = vadd.f32 0.0, %v4383
        %4385 = vmatmul.f32.gmra.mxu0 %v4271
        %v4386 = vpop.f32.mrf.mxu0
        %v4387 = vadd.f32 0.0, %v4386
        %4388 = vmatmul.f32.gmra.mxu0 %v4274
        %v4389 = vpop.f32.mrf.mxu0
        %v4390 = vadd.f32 0.0, %v4389
        %4391 = vmatmul.f32.gmra.mxu0 %v4277
        %v4392 = vpop.f32.mrf.mxu0
        %v4393 = vadd.f32 0.0, %v4392
        %4394 = vmatmul.f32.gmra.mxu0 %v4280
        %v4395 = vpop.f32.mrf.mxu0
        %v4396 = vadd.f32 0.0, %v4395
        %4397 = vmatmul.f32.gmra.mxu0 %v4283
        %v4398 = vpop.f32.mrf.mxu0
        %v4399 = vadd.f32 0.0, %v4398
        %4400 = vmatmul.f32.gmra.mxu0 %v4286
        %v4401 = vpop.f32.mrf.mxu0
        %v4402 = vadd.f32 0.0, %v4401
        %4403 = vmatmul.f32.gmra.mxu0 %v4289
        %v4404 = vpop.f32.mrf.mxu0
        %v4405 = vadd.f32 0.0, %v4404
        %4406 = vmatmul.f32.gmra.mxu0 %v4292
        %v4407 = vpop.f32.mrf.mxu0
        %v4408 = vadd.f32 0.0, %v4407
        %4409 = vdwg.mxu0
        %v4410 = vadd.f32 %v4134, %v4315
        %v4411 = vadd.f32 %v4135, %v4318
        %v4412 = vadd.f32 %v4136, %v4321
        %v4413 = vadd.f32 %v4137, %v4324
        %v4414 = vadd.f32 %v4138, %v4327
        %v4415 = vadd.f32 %v4139, %v4330
        %v4416 = vadd.f32 %v4140, %v4333
        %v4417 = vadd.f32 %v4141, %v4336
        %v4418 = vadd.f32 %v4142, %v4339
        %v4419 = vadd.f32 %v4143, %v4342
        %v4420 = vadd.f32 %v4144, %v4345
        %v4421 = vadd.f32 %v4145, %v4348
        %v4422 = vadd.f32 %v4146, %v4351
        %v4423 = vadd.f32 %v4147, %v4354
        %v4424 = vadd.f32 %v4148, %v4357
        %v4425 = vadd.f32 %v4149, %v4360
        %v4426 = vadd.f32 %v4150, %v4363
        %v4427 = vadd.f32 %v4151, %v4366
        %v4428 = vadd.f32 %v4152, %v4369
        %v4429 = vadd.f32 %v4153, %v4372
        %v4430 = vadd.f32 %v4154, %v4375
        %v4431 = vadd.f32 %v4155, %v4378
        %v4432 = vadd.f32 %v4156, %v4381
        %v4433 = vadd.f32 %v4157, %v4384
        %v4434 = vadd.f32 %v4158, %v4387
        %v4435 = vadd.f32 %v4159, %v4390
        %v4436 = vadd.f32 %v4160, %v4393
        %v4437 = vadd.f32 %v4161, %v4396
        %v4438 = vadd.f32 %v4162, %v4399
        %v4439 = vadd.f32 %v4163, %v4402
        %v4440 = vadd.f32 %v4164, %v4405
        %v4441 = vadd.f32 %v4165, %v4408
        %v4442 = vld [vmem:[%s3369 + $0x1] sm:$0xff]
        %v4443 = vld [vmem:[%s3369 + $0x9] sm:$0xff]
        %v4444 = vld [vmem:[%s3369 + $0x19] sm:$0xff]
        %v4445 = vld [vmem:[%s3369 + $0x21] sm:$0xff]
        %v4446 = vld [vmem:[%s3369 + $0x31] sm:$0xff]
        %v4447 = vld [vmem:[%s3369 + $0x39] sm:$0xff]
        %v4448 = vld [vmem:[%s3369 + $0x49] sm:$0xff]
        %v4449 = vld [vmem:[%s3369 + $0x51] sm:$0xff]
        %v4450 = vld [vmem:[%s3369 + $0x61] sm:$0xff]
        %v4451 = vld [vmem:[%s3369 + $0x69] sm:$0xff]
        %v4452 = vld [vmem:[%s3369 + $0x79] sm:$0xff]
        %v4453 = vld [vmem:[%s3369 + $0x81] sm:$0xff]
        %v4454 = vld [vmem:[%s3369 + $0x91] sm:$0xff]
        %v4455 = vld [vmem:[%s3369 + $0x99] sm:$0xff]
        %v4456 = vld [vmem:[%s3369 + $0xa9] sm:$0xff]
        %v4457 = vld [vmem:[%s3369 + $0xb1] sm:$0xff]
        %v4458 = vld [vmem:[%s3369 + $0xc1] sm:$0xff]
        %v4459 = vld [vmem:[%s3369 + $0xc9] sm:$0xff]
        %v4460 = vld [vmem:[%s3369 + $0xd9] sm:$0xff]
        %v4461 = vld [vmem:[%s3369 + $0xe1] sm:$0xff]
        %v4462 = vld [vmem:[%s3369 + $0xf1] sm:$0xff]
        %v4463 = vld [vmem:[%s3369 + $0xf9] sm:$0xff]
        %v4464 = vld [vmem:[%s3369 + $0x109] sm:$0xff]
        %v4465 = vld [vmem:[%s3369 + $0x111] sm:$0xff]
        %v4466 = vld [vmem:[%s3369 + $0x121] sm:$0xff]
        %v4467 = vld [vmem:[%s3369 + $0x129] sm:$0xff]
        %v4468 = vld [vmem:[%s3369 + $0x139] sm:$0xff]
        %v4469 = vld [vmem:[%s3369 + $0x141] sm:$0xff]
        %v4470 = vld [vmem:[%s3369 + $0x151] sm:$0xff]
        %v4471 = vld [vmem:[%s3369 + $0x159] sm:$0xff]
        %v4472 = vld [vmem:[%s3369 + $0x169] sm:$0xff]
        %v4473 = vld [vmem:[%s3369 + $0x171] sm:$0xff]
        %v4475 = vsel %vm749, %v4442, 0
        %v4478 = vsel %vm749, %v4443, 0
        %v4481 = vsel %vm749, %v4444, 0
        %v4484 = vsel %vm749, %v4445, 0
        %v4487 = vsel %vm749, %v4446, 0
        %v4490 = vsel %vm749, %v4447, 0
        %v4493 = vsel %vm749, %v4448, 0
        %v4496 = vsel %vm749, %v4449, 0
        %v4499 = vsel %vm749, %v4450, 0
        %v4502 = vsel %vm749, %v4451, 0
        %v4505 = vsel %vm749, %v4452, 0
        %v4508 = vsel %vm749, %v4453, 0
        %v4511 = vsel %vm749, %v4454, 0
        %v4514 = vsel %vm749, %v4455, 0
        %v4517 = vsel %vm749, %v4456, 0
        %v4520 = vsel %vm749, %v4457, 0
        %v4523 = vsel %vm749, %v4458, 0
        %v4526 = vsel %vm749, %v4459, 0
        %v4529 = vsel %vm749, %v4460, 0
        %v4532 = vsel %vm749, %v4461, 0
        %v4535 = vsel %vm749, %v4462, 0
        %v4538 = vsel %vm749, %v4463, 0
        %v4541 = vsel %vm749, %v4464, 0
        %v4544 = vsel %vm749, %v4465, 0
        %v4547 = vsel %vm749, %v4466, 0
        %v4550 = vsel %vm749, %v4467, 0
        %v4553 = vsel %vm749, %v4468, 0
        %v4556 = vsel %vm749, %v4469, 0
        %v4559 = vsel %vm749, %v4470, 0
        %v4562 = vsel %vm749, %v4471, 0
        %v4565 = vsel %vm749, %v4472, 0
        %v4568 = vsel %vm749, %v4473, 0
        %v4571 = vsel %vm985, %v819, 0
        %4573 = vmatpush.msra.mxu0 0.0
        %4574 = vmatpush.msra.mxu0 0.0
        %4575 = vmatpush.msra.mxu0 0.0
        %4576 = vmatpush.msra.mxu0 0.0
        %4577 = vmatpush.msra.mxu0 0.0
        %4578 = vmatpush.msra.mxu0 0.0
        %4579 = vmatpush.msra.mxu0 0.0
        %4580 = vmatpush.msra.mxu0 0.0
        %4581 = vmatpush.msra.mxu0 0.0
        %4582 = vmatpush.msra.mxu0 0.0
        %4583 = vmatpush.msra.mxu0 0.0
        %4584 = vmatpush.msra.mxu0 0.0
        %4585 = vmatpush.msra.mxu0 0.0
        %4586 = vmatpush.msra.mxu0 0.0
        %4587 = vmatpush.msra.mxu0 0.0
        %4588 = vmatpush.msra.mxu0 %v4571
        %4589 = vmatmul.f32.gmra.mxu0 %v4475
        %v4590 = vpop.f32.mrf.mxu0
        %v4591 = vadd.f32 0.0, %v4590
        %4592 = vmatmul.f32.gmra.mxu0 %v4478
        %v4593 = vpop.f32.mrf.mxu0
        %v4594 = vadd.f32 0.0, %v4593
        %4595 = vmatmul.f32.gmra.mxu0 %v4481
        %v4596 = vpop.f32.mrf.mxu0
        %v4597 = vadd.f32 0.0, %v4596
        %4598 = vmatmul.f32.gmra.mxu0 %v4484
        %v4599 = vpop.f32.mrf.mxu0
        %v4600 = vadd.f32 0.0, %v4599
        %4601 = vmatmul.f32.gmra.mxu0 %v4487
        %v4602 = vpop.f32.mrf.mxu0
        %v4603 = vadd.f32 0.0, %v4602
        %4604 = vmatmul.f32.gmra.mxu0 %v4490
        %v4605 = vpop.f32.mrf.mxu0
        %v4606 = vadd.f32 0.0, %v4605
        %4607 = vmatmul.f32.gmra.mxu0 %v4493
        %v4608 = vpop.f32.mrf.mxu0
        %v4609 = vadd.f32 0.0, %v4608
        %4610 = vmatmul.f32.gmra.mxu0 %v4496
        %v4611 = vpop.f32.mrf.mxu0
        %v4612 = vadd.f32 0.0, %v4611
        %4613 = vmatmul.f32.gmra.mxu0 %v4499
        %v4614 = vpop.f32.mrf.mxu0
        %v4615 = vadd.f32 0.0, %v4614
        %4616 = vmatmul.f32.gmra.mxu0 %v4502
        %v4617 = vpop.f32.mrf.mxu0
        %v4618 = vadd.f32 0.0, %v4617
        %4619 = vmatmul.f32.gmra.mxu0 %v4505
        %v4620 = vpop.f32.mrf.mxu0
        %v4621 = vadd.f32 0.0, %v4620
        %4622 = vmatmul.f32.gmra.mxu0 %v4508
        %v4623 = vpop.f32.mrf.mxu0
        %v4624 = vadd.f32 0.0, %v4623
        %4625 = vmatmul.f32.gmra.mxu0 %v4511
        %v4626 = vpop.f32.mrf.mxu0
        %v4627 = vadd.f32 0.0, %v4626
        %4628 = vmatmul.f32.gmra.mxu0 %v4514
        %v4629 = vpop.f32.mrf.mxu0
        %v4630 = vadd.f32 0.0, %v4629
        %4631 = vmatmul.f32.gmra.mxu0 %v4517
        %v4632 = vpop.f32.mrf.mxu0
        %v4633 = vadd.f32 0.0, %v4632
        %4634 = vmatmul.f32.gmra.mxu0 %v4520
        %v4635 = vpop.f32.mrf.mxu0
        %v4636 = vadd.f32 0.0, %v4635
        %4637 = vmatmul.f32.gmra.mxu0 %v4523
        %v4638 = vpop.f32.mrf.mxu0
        %v4639 = vadd.f32 0.0, %v4638
        %4640 = vmatmul.f32.gmra.mxu0 %v4526
        %v4641 = vpop.f32.mrf.mxu0
        %v4642 = vadd.f32 0.0, %v4641
        %4643 = vmatmul.f32.gmra.mxu0 %v4529
        %v4644 = vpop.f32.mrf.mxu0
        %v4645 = vadd.f32 0.0, %v4644
        %4646 = vmatmul.f32.gmra.mxu0 %v4532
        %v4647 = vpop.f32.mrf.mxu0
        %v4648 = vadd.f32 0.0, %v4647
        %4649 = vmatmul.f32.gmra.mxu0 %v4535
        %v4650 = vpop.f32.mrf.mxu0
        %v4651 = vadd.f32 0.0, %v4650
        %4652 = vmatmul.f32.gmra.mxu0 %v4538
        %v4653 = vpop.f32.mrf.mxu0
        %v4654 = vadd.f32 0.0, %v4653
        %4655 = vmatmul.f32.gmra.mxu0 %v4541
        %v4656 = vpop.f32.mrf.mxu0
        %v4657 = vadd.f32 0.0, %v4656
        %4658 = vmatmul.f32.gmra.mxu0 %v4544
        %v4659 = vpop.f32.mrf.mxu0
        %v4660 = vadd.f32 0.0, %v4659
        %4661 = vmatmul.f32.gmra.mxu0 %v4547
        %v4662 = vpop.f32.mrf.mxu0
        %v4663 = vadd.f32 0.0, %v4662
        %4664 = vmatmul.f32.gmra.mxu0 %v4550
        %v4665 = vpop.f32.mrf.mxu0
        %v4666 = vadd.f32 0.0, %v4665
        %4667 = vmatmul.f32.gmra.mxu0 %v4553
        %v4668 = vpop.f32.mrf.mxu0
        %v4669 = vadd.f32 0.0, %v4668
        %4670 = vmatmul.f32.gmra.mxu0 %v4556
        %v4671 = vpop.f32.mrf.mxu0
        %v4672 = vadd.f32 0.0, %v4671
        %4673 = vmatmul.f32.gmra.mxu0 %v4559
        %v4674 = vpop.f32.mrf.mxu0
        %v4675 = vadd.f32 0.0, %v4674
        %4676 = vmatmul.f32.gmra.mxu0 %v4562
        %v4677 = vpop.f32.mrf.mxu0
        %v4678 = vadd.f32 0.0, %v4677
        %4679 = vmatmul.f32.gmra.mxu0 %v4565
        %v4680 = vpop.f32.mrf.mxu0
        %v4681 = vadd.f32 0.0, %v4680
        %4682 = vmatmul.f32.gmra.mxu0 %v4568
        %v4683 = vpop.f32.mrf.mxu0
        %v4684 = vadd.f32 0.0, %v4683
        %4685 = vdwg.mxu0
        %v4686 = vadd.f32 %v4410, %v4591
        %v4687 = vadd.f32 %v4411, %v4594
        %v4688 = vadd.f32 %v4412, %v4597
        %v4689 = vadd.f32 %v4413, %v4600
        %v4690 = vadd.f32 %v4414, %v4603
        %v4691 = vadd.f32 %v4415, %v4606
        %v4692 = vadd.f32 %v4416, %v4609
        %v4693 = vadd.f32 %v4417, %v4612
        %v4694 = vadd.f32 %v4418, %v4615
        %v4695 = vadd.f32 %v4419, %v4618
        %v4696 = vadd.f32 %v4420, %v4621
        %v4697 = vadd.f32 %v4421, %v4624
        %v4698 = vadd.f32 %v4422, %v4627
        %v4699 = vadd.f32 %v4423, %v4630
        %v4700 = vadd.f32 %v4424, %v4633
        %v4701 = vadd.f32 %v4425, %v4636
        %v4702 = vadd.f32 %v4426, %v4639
        %v4703 = vadd.f32 %v4427, %v4642
        %v4704 = vadd.f32 %v4428, %v4645
        %v4705 = vadd.f32 %v4429, %v4648
        %v4706 = vadd.f32 %v4430, %v4651
        %v4707 = vadd.f32 %v4431, %v4654
        %v4708 = vadd.f32 %v4432, %v4657
        %v4709 = vadd.f32 %v4433, %v4660
        %v4710 = vadd.f32 %v4434, %v4663
        %v4711 = vadd.f32 %v4435, %v4666
        %v4712 = vadd.f32 %v4436, %v4669
        %v4713 = vadd.f32 %v4437, %v4672
        %v4714 = vadd.f32 %v4438, %v4675
        %v4715 = vadd.f32 %v4439, %v4678
        %v4716 = vadd.f32 %v4440, %v4681
        %v4717 = vadd.f32 %v4441, %v4684
        %v4718 = vld [vmem:[%s3369 + $0x2] sm:$0xff]
        %v4719 = vld [vmem:[%s3369 + $0xa] sm:$0xff]
        %v4720 = vld [vmem:[%s3369 + $0x1a] sm:$0xff]
        %v4721 = vld [vmem:[%s3369 + $0x22] sm:$0xff]
        %v4722 = vld [vmem:[%s3369 + $0x32] sm:$0xff]
        %v4723 = vld [vmem:[%s3369 + $0x3a] sm:$0xff]
        %v4724 = vld [vmem:[%s3369 + $0x4a] sm:$0xff]
        %v4725 = vld [vmem:[%s3369 + $0x52] sm:$0xff]
        %v4726 = vld [vmem:[%s3369 + $0x62] sm:$0xff]
        %v4727 = vld [vmem:[%s3369 + $0x6a] sm:$0xff]
        %v4728 = vld [vmem:[%s3369 + $0x7a] sm:$0xff]
        %v4729 = vld [vmem:[%s3369 + $0x82] sm:$0xff]
        %v4730 = vld [vmem:[%s3369 + $0x92] sm:$0xff]
        %v4731 = vld [vmem:[%s3369 + $0x9a] sm:$0xff]
        %v4732 = vld [vmem:[%s3369 + $0xaa] sm:$0xff]
        %v4733 = vld [vmem:[%s3369 + $0xb2] sm:$0xff]
        %v4734 = vld [vmem:[%s3369 + $0xc2] sm:$0xff]
        %v4735 = vld [vmem:[%s3369 + $0xca] sm:$0xff]
        %v4736 = vld [vmem:[%s3369 + $0xda] sm:$0xff]
        %v4737 = vld [vmem:[%s3369 + $0xe2] sm:$0xff]
        %v4738 = vld [vmem:[%s3369 + $0xf2] sm:$0xff]
        %v4739 = vld [vmem:[%s3369 + $0xfa] sm:$0xff]
        %v4740 = vld [vmem:[%s3369 + $0x10a] sm:$0xff]
        %v4741 = vld [vmem:[%s3369 + $0x112] sm:$0xff]
        %v4742 = vld [vmem:[%s3369 + $0x122] sm:$0xff]
        %v4743 = vld [vmem:[%s3369 + $0x12a] sm:$0xff]
        %v4744 = vld [vmem:[%s3369 + $0x13a] sm:$0xff]
        %v4745 = vld [vmem:[%s3369 + $0x142] sm:$0xff]
        %v4746 = vld [vmem:[%s3369 + $0x152] sm:$0xff]
        %v4747 = vld [vmem:[%s3369 + $0x15a] sm:$0xff]
        %v4748 = vld [vmem:[%s3369 + $0x16a] sm:$0xff]
        %v4749 = vld [vmem:[%s3369 + $0x172] sm:$0xff]
        %v4751 = vsel %vm749, %v4718, 0
        %v4754 = vsel %vm749, %v4719, 0
        %v4757 = vsel %vm749, %v4720, 0
        %v4760 = vsel %vm749, %v4721, 0
        %v4763 = vsel %vm749, %v4722, 0
        %v4766 = vsel %vm749, %v4723, 0
        %v4769 = vsel %vm749, %v4724, 0
        %v4772 = vsel %vm749, %v4725, 0
        %v4775 = vsel %vm749, %v4726, 0
        %v4778 = vsel %vm749, %v4727, 0
        %v4781 = vsel %vm749, %v4728, 0
        %v4784 = vsel %vm749, %v4729, 0
        %v4787 = vsel %vm749, %v4730, 0
        %v4790 = vsel %vm749, %v4731, 0
        %v4793 = vsel %vm749, %v4732, 0
        %v4796 = vsel %vm749, %v4733, 0
        %v4799 = vsel %vm749, %v4734, 0
        %v4802 = vsel %vm749, %v4735, 0
        %v4805 = vsel %vm749, %v4736, 0
        %v4808 = vsel %vm749, %v4737, 0
        %v4811 = vsel %vm749, %v4738, 0
        %v4814 = vsel %vm749, %v4739, 0
        %v4817 = vsel %vm749, %v4740, 0
        %v4820 = vsel %vm749, %v4741, 0
        %v4823 = vsel %vm749, %v4742, 0
        %v4826 = vsel %vm749, %v4743, 0
        %v4829 = vsel %vm749, %v4744, 0
        %v4832 = vsel %vm749, %v4745, 0
        %v4835 = vsel %vm749, %v4746, 0
        %v4838 = vsel %vm749, %v4747, 0
        %v4841 = vsel %vm749, %v4748, 0
        %v4844 = vsel %vm749, %v4749, 0
        %v4847 = vsel %vm985, %v820, 0
        %4849 = vmatpush.msra.mxu0 0.0
        %4850 = vmatpush.msra.mxu0 0.0
        %4851 = vmatpush.msra.mxu0 0.0
        %4852 = vmatpush.msra.mxu0 0.0
        %4853 = vmatpush.msra.mxu0 0.0
        %4854 = vmatpush.msra.mxu0 0.0
        %4855 = vmatpush.msra.mxu0 0.0
        %4856 = vmatpush.msra.mxu0 0.0
        %4857 = vmatpush.msra.mxu0 0.0
        %4858 = vmatpush.msra.mxu0 0.0
        %4859 = vmatpush.msra.mxu0 0.0
        %4860 = vmatpush.msra.mxu0 0.0
        %4861 = vmatpush.msra.mxu0 0.0
        %4862 = vmatpush.msra.mxu0 0.0
        %4863 = vmatpush.msra.mxu0 0.0
        %4864 = vmatpush.msra.mxu0 %v4847
        %4865 = vmatmul.f32.gmra.mxu0 %v4751
        %v4866 = vpop.f32.mrf.mxu0
        %v4867 = vadd.f32 0.0, %v4866
        %4868 = vmatmul.f32.gmra.mxu0 %v4754
        %v4869 = vpop.f32.mrf.mxu0
        %v4870 = vadd.f32 0.0, %v4869
        %4871 = vmatmul.f32.gmra.mxu0 %v4757
        %v4872 = vpop.f32.mrf.mxu0
        %v4873 = vadd.f32 0.0, %v4872
        %4874 = vmatmul.f32.gmra.mxu0 %v4760
        %v4875 = vpop.f32.mrf.mxu0
        %v4876 = vadd.f32 0.0, %v4875
        %4877 = vmatmul.f32.gmra.mxu0 %v4763
        %v4878 = vpop.f32.mrf.mxu0
        %v4879 = vadd.f32 0.0, %v4878
        %4880 = vmatmul.f32.gmra.mxu0 %v4766
        %v4881 = vpop.f32.mrf.mxu0
        %v4882 = vadd.f32 0.0, %v4881
        %4883 = vmatmul.f32.gmra.mxu0 %v4769
        %v4884 = vpop.f32.mrf.mxu0
        %v4885 = vadd.f32 0.0, %v4884
        %4886 = vmatmul.f32.gmra.mxu0 %v4772
        %v4887 = vpop.f32.mrf.mxu0
        %v4888 = vadd.f32 0.0, %v4887
        %4889 = vmatmul.f32.gmra.mxu0 %v4775
        %v4890 = vpop.f32.mrf.mxu0
        %v4891 = vadd.f32 0.0, %v4890
        %4892 = vmatmul.f32.gmra.mxu0 %v4778
        %v4893 = vpop.f32.mrf.mxu0
        %v4894 = vadd.f32 0.0, %v4893
        %4895 = vmatmul.f32.gmra.mxu0 %v4781
        %v4896 = vpop.f32.mrf.mxu0
        %v4897 = vadd.f32 0.0, %v4896
        %4898 = vmatmul.f32.gmra.mxu0 %v4784
        %v4899 = vpop.f32.mrf.mxu0
        %v4900 = vadd.f32 0.0, %v4899
        %4901 = vmatmul.f32.gmra.mxu0 %v4787
        %v4902 = vpop.f32.mrf.mxu0
        %v4903 = vadd.f32 0.0, %v4902
        %4904 = vmatmul.f32.gmra.mxu0 %v4790
        %v4905 = vpop.f32.mrf.mxu0
        %v4906 = vadd.f32 0.0, %v4905
        %4907 = vmatmul.f32.gmra.mxu0 %v4793
        %v4908 = vpop.f32.mrf.mxu0
        %v4909 = vadd.f32 0.0, %v4908
        %4910 = vmatmul.f32.gmra.mxu0 %v4796
        %v4911 = vpop.f32.mrf.mxu0
        %v4912 = vadd.f32 0.0, %v4911
        %4913 = vmatmul.f32.gmra.mxu0 %v4799
        %v4914 = vpop.f32.mrf.mxu0
        %v4915 = vadd.f32 0.0, %v4914
        %4916 = vmatmul.f32.gmra.mxu0 %v4802
        %v4917 = vpop.f32.mrf.mxu0
        %v4918 = vadd.f32 0.0, %v4917
        %4919 = vmatmul.f32.gmra.mxu0 %v4805
        %v4920 = vpop.f32.mrf.mxu0
        %v4921 = vadd.f32 0.0, %v4920
        %4922 = vmatmul.f32.gmra.mxu0 %v4808
        %v4923 = vpop.f32.mrf.mxu0
        %v4924 = vadd.f32 0.0, %v4923
        %4925 = vmatmul.f32.gmra.mxu0 %v4811
        %v4926 = vpop.f32.mrf.mxu0
        %v4927 = vadd.f32 0.0, %v4926
        %4928 = vmatmul.f32.gmra.mxu0 %v4814
        %v4929 = vpop.f32.mrf.mxu0
        %v4930 = vadd.f32 0.0, %v4929
        %4931 = vmatmul.f32.gmra.mxu0 %v4817
        %v4932 = vpop.f32.mrf.mxu0
        %v4933 = vadd.f32 0.0, %v4932
        %4934 = vmatmul.f32.gmra.mxu0 %v4820
        %v4935 = vpop.f32.mrf.mxu0
        %v4936 = vadd.f32 0.0, %v4935
        %4937 = vmatmul.f32.gmra.mxu0 %v4823
        %v4938 = vpop.f32.mrf.mxu0
        %v4939 = vadd.f32 0.0, %v4938
        %4940 = vmatmul.f32.gmra.mxu0 %v4826
        %v4941 = vpop.f32.mrf.mxu0
        %v4942 = vadd.f32 0.0, %v4941
        %4943 = vmatmul.f32.gmra.mxu0 %v4829
        %v4944 = vpop.f32.mrf.mxu0
        %v4945 = vadd.f32 0.0, %v4944
        %4946 = vmatmul.f32.gmra.mxu0 %v4832
        %v4947 = vpop.f32.mrf.mxu0
        %v4948 = vadd.f32 0.0, %v4947
        %4949 = vmatmul.f32.gmra.mxu0 %v4835
        %v4950 = vpop.f32.mrf.mxu0
        %v4951 = vadd.f32 0.0, %v4950
        %4952 = vmatmul.f32.gmra.mxu0 %v4838
        %v4953 = vpop.f32.mrf.mxu0
        %v4954 = vadd.f32 0.0, %v4953
        %4955 = vmatmul.f32.gmra.mxu0 %v4841
        %v4956 = vpop.f32.mrf.mxu0
        %v4957 = vadd.f32 0.0, %v4956
        %4958 = vmatmul.f32.gmra.mxu0 %v4844
        %v4959 = vpop.f32.mrf.mxu0
        %v4960 = vadd.f32 0.0, %v4959
        %4961 = vdwg.mxu0
        %v4962 = vadd.f32 %v4686, %v4867
        %v4963 = vadd.f32 %v4687, %v4870
        %v4964 = vadd.f32 %v4688, %v4873
        %v4965 = vadd.f32 %v4689, %v4876
        %v4966 = vadd.f32 %v4690, %v4879
        %v4967 = vadd.f32 %v4691, %v4882
        %v4968 = vadd.f32 %v4692, %v4885
        %v4969 = vadd.f32 %v4693, %v4888
        %v4970 = vadd.f32 %v4694, %v4891
        %v4971 = vadd.f32 %v4695, %v4894
        %v4972 = vadd.f32 %v4696, %v4897
        %v4973 = vadd.f32 %v4697, %v4900
        %v4974 = vadd.f32 %v4698, %v4903
        %v4975 = vadd.f32 %v4699, %v4906
        %v4976 = vadd.f32 %v4700, %v4909
        %v4977 = vadd.f32 %v4701, %v4912
        %v4978 = vadd.f32 %v4702, %v4915
        %v4979 = vadd.f32 %v4703, %v4918
        %v4980 = vadd.f32 %v4704, %v4921
        %v4981 = vadd.f32 %v4705, %v4924
        %v4982 = vadd.f32 %v4706, %v4927
        %v4983 = vadd.f32 %v4707, %v4930
        %v4984 = vadd.f32 %v4708, %v4933
        %v4985 = vadd.f32 %v4709, %v4936
        %v4986 = vadd.f32 %v4710, %v4939
        %v4987 = vadd.f32 %v4711, %v4942
        %v4988 = vadd.f32 %v4712, %v4945
        %v4989 = vadd.f32 %v4713, %v4948
        %v4990 = vadd.f32 %v4714, %v4951
        %v4991 = vadd.f32 %v4715, %v4954
        %v4992 = vadd.f32 %v4716, %v4957
        %v4993 = vadd.f32 %v4717, %v4960
        %s4994 = scalar_lea.vmem [#allocation3], 48
        %v4995 = vld [vmem:[%s4994] sm:$0xff]
        %v4996 = vld [vmem:[%s4994 + $0x8] sm:$0xff]
        %v4997 = vld [vmem:[%s4994 + $0x18] sm:$0xff]
        %v4998 = vld [vmem:[%s4994 + $0x20] sm:$0xff]
        %v4999 = vld [vmem:[%s4994 + $0x30] sm:$0xff]
        %v5000 = vld [vmem:[%s4994 + $0x38] sm:$0xff]
        %v5001 = vld [vmem:[%s4994 + $0x48] sm:$0xff]
        %v5002 = vld [vmem:[%s4994 + $0x50] sm:$0xff]
        %v5003 = vld [vmem:[%s4994 + $0x60] sm:$0xff]
        %v5004 = vld [vmem:[%s4994 + $0x68] sm:$0xff]
        %v5005 = vld [vmem:[%s4994 + $0x78] sm:$0xff]
        %v5006 = vld [vmem:[%s4994 + $0x80] sm:$0xff]
        %v5007 = vld [vmem:[%s4994 + $0x90] sm:$0xff]
        %v5008 = vld [vmem:[%s4994 + $0x98] sm:$0xff]
        %v5009 = vld [vmem:[%s4994 + $0xa8] sm:$0xff]
        %v5010 = vld [vmem:[%s4994 + $0xb0] sm:$0xff]
        %v5011 = vld [vmem:[%s4994 + $0xc0] sm:$0xff]
        %v5012 = vld [vmem:[%s4994 + $0xc8] sm:$0xff]
        %v5013 = vld [vmem:[%s4994 + $0xd8] sm:$0xff]
        %v5014 = vld [vmem:[%s4994 + $0xe0] sm:$0xff]
        %v5015 = vld [vmem:[%s4994 + $0xf0] sm:$0xff]
        %v5016 = vld [vmem:[%s4994 + $0xf8] sm:$0xff]
        %v5017 = vld [vmem:[%s4994 + $0x108] sm:$0xff]
        %v5018 = vld [vmem:[%s4994 + $0x110] sm:$0xff]
        %v5019 = vld [vmem:[%s4994 + $0x120] sm:$0xff]
        %v5020 = vld [vmem:[%s4994 + $0x128] sm:$0xff]
        %v5021 = vld [vmem:[%s4994 + $0x138] sm:$0xff]
        %v5022 = vld [vmem:[%s4994 + $0x140] sm:$0xff]
        %v5023 = vld [vmem:[%s4994 + $0x150] sm:$0xff]
        %v5024 = vld [vmem:[%s4994 + $0x158] sm:$0xff]
        %v5025 = vld [vmem:[%s4994 + $0x168] sm:$0xff]
        %v5026 = vld [vmem:[%s4994 + $0x170] sm:$0xff]
        %v5028 = vsel %vm749, %v4995, 0
        %v5031 = vsel %vm749, %v4996, 0
        %v5034 = vsel %vm749, %v4997, 0
        %v5037 = vsel %vm749, %v4998, 0
        %v5040 = vsel %vm749, %v4999, 0
        %v5043 = vsel %vm749, %v5000, 0
        %v5046 = vsel %vm749, %v5001, 0
        %v5049 = vsel %vm749, %v5002, 0
        %v5052 = vsel %vm749, %v5003, 0
        %v5055 = vsel %vm749, %v5004, 0
        %v5058 = vsel %vm749, %v5005, 0
        %v5061 = vsel %vm749, %v5006, 0
        %v5064 = vsel %vm749, %v5007, 0
        %v5067 = vsel %vm749, %v5008, 0
        %v5070 = vsel %vm749, %v5009, 0
        %v5073 = vsel %vm749, %v5010, 0
        %v5076 = vsel %vm749, %v5011, 0
        %v5079 = vsel %vm749, %v5012, 0
        %v5082 = vsel %vm749, %v5013, 0
        %v5085 = vsel %vm749, %v5014, 0
        %v5088 = vsel %vm749, %v5015, 0
        %v5091 = vsel %vm749, %v5016, 0
        %v5094 = vsel %vm749, %v5017, 0
        %v5097 = vsel %vm749, %v5018, 0
        %v5100 = vsel %vm749, %v5019, 0
        %v5103 = vsel %vm749, %v5020, 0
        %v5106 = vsel %vm749, %v5021, 0
        %v5109 = vsel %vm749, %v5022, 0
        %v5112 = vsel %vm749, %v5023, 0
        %v5115 = vsel %vm749, %v5024, 0
        %v5118 = vsel %vm749, %v5025, 0
        %v5121 = vsel %vm749, %v5026, 0
        %v5124 = vsel %vm985, %v821, 0
        %5126 = vmatpush.msra.mxu0 0.0
        %5127 = vmatpush.msra.mxu0 0.0
        %5128 = vmatpush.msra.mxu0 0.0
        %5129 = vmatpush.msra.mxu0 0.0
        %5130 = vmatpush.msra.mxu0 0.0
        %5131 = vmatpush.msra.mxu0 0.0
        %5132 = vmatpush.msra.mxu0 0.0
        %5133 = vmatpush.msra.mxu0 0.0
        %5134 = vmatpush.msra.mxu0 0.0
        %5135 = vmatpush.msra.mxu0 0.0
        %5136 = vmatpush.msra.mxu0 0.0
        %5137 = vmatpush.msra.mxu0 0.0
        %5138 = vmatpush.msra.mxu0 0.0
        %5139 = vmatpush.msra.mxu0 0.0
        %5140 = vmatpush.msra.mxu0 0.0
        %5141 = vmatpush.msra.mxu0 %v5124
        %5142 = vmatmul.f32.gmra.mxu0 %v5028
        %v5143 = vpop.f32.mrf.mxu0
        %v5144 = vadd.f32 0.0, %v5143
        %5145 = vmatmul.f32.gmra.mxu0 %v5031
        %v5146 = vpop.f32.mrf.mxu0
        %v5147 = vadd.f32 0.0, %v5146
        %5148 = vmatmul.f32.gmra.mxu0 %v5034
        %v5149 = vpop.f32.mrf.mxu0
        %v5150 = vadd.f32 0.0, %v5149
        %5151 = vmatmul.f32.gmra.mxu0 %v5037
        %v5152 = vpop.f32.mrf.mxu0
        %v5153 = vadd.f32 0.0, %v5152
        %5154 = vmatmul.f32.gmra.mxu0 %v5040
        %v5155 = vpop.f32.mrf.mxu0
        %v5156 = vadd.f32 0.0, %v5155
        %5157 = vmatmul.f32.gmra.mxu0 %v5043
        %v5158 = vpop.f32.mrf.mxu0
        %v5159 = vadd.f32 0.0, %v5158
        %5160 = vmatmul.f32.gmra.mxu0 %v5046
        %v5161 = vpop.f32.mrf.mxu0
        %v5162 = vadd.f32 0.0, %v5161
        %5163 = vmatmul.f32.gmra.mxu0 %v5049
        %v5164 = vpop.f32.mrf.mxu0
        %v5165 = vadd.f32 0.0, %v5164
        %5166 = vmatmul.f32.gmra.mxu0 %v5052
        %v5167 = vpop.f32.mrf.mxu0
        %v5168 = vadd.f32 0.0, %v5167
        %5169 = vmatmul.f32.gmra.mxu0 %v5055
        %v5170 = vpop.f32.mrf.mxu0
        %v5171 = vadd.f32 0.0, %v5170
        %5172 = vmatmul.f32.gmra.mxu0 %v5058
        %v5173 = vpop.f32.mrf.mxu0
        %v5174 = vadd.f32 0.0, %v5173
        %5175 = vmatmul.f32.gmra.mxu0 %v5061
        %v5176 = vpop.f32.mrf.mxu0
        %v5177 = vadd.f32 0.0, %v5176
        %5178 = vmatmul.f32.gmra.mxu0 %v5064
        %v5179 = vpop.f32.mrf.mxu0
        %v5180 = vadd.f32 0.0, %v5179
        %5181 = vmatmul.f32.gmra.mxu0 %v5067
        %v5182 = vpop.f32.mrf.mxu0
        %v5183 = vadd.f32 0.0, %v5182
        %5184 = vmatmul.f32.gmra.mxu0 %v5070
        %v5185 = vpop.f32.mrf.mxu0
        %v5186 = vadd.f32 0.0, %v5185
        %5187 = vmatmul.f32.gmra.mxu0 %v5073
        %v5188 = vpop.f32.mrf.mxu0
        %v5189 = vadd.f32 0.0, %v5188
        %5190 = vmatmul.f32.gmra.mxu0 %v5076
        %v5191 = vpop.f32.mrf.mxu0
        %v5192 = vadd.f32 0.0, %v5191
        %5193 = vmatmul.f32.gmra.mxu0 %v5079
        %v5194 = vpop.f32.mrf.mxu0
        %v5195 = vadd.f32 0.0, %v5194
        %5196 = vmatmul.f32.gmra.mxu0 %v5082
        %v5197 = vpop.f32.mrf.mxu0
        %v5198 = vadd.f32 0.0, %v5197
        %5199 = vmatmul.f32.gmra.mxu0 %v5085
        %v5200 = vpop.f32.mrf.mxu0
        %v5201 = vadd.f32 0.0, %v5200
        %5202 = vmatmul.f32.gmra.mxu0 %v5088
        %v5203 = vpop.f32.mrf.mxu0
        %v5204 = vadd.f32 0.0, %v5203
        %5205 = vmatmul.f32.gmra.mxu0 %v5091
        %v5206 = vpop.f32.mrf.mxu0
        %v5207 = vadd.f32 0.0, %v5206
        %5208 = vmatmul.f32.gmra.mxu0 %v5094
        %v5209 = vpop.f32.mrf.mxu0
        %v5210 = vadd.f32 0.0, %v5209
        %5211 = vmatmul.f32.gmra.mxu0 %v5097
        %v5212 = vpop.f32.mrf.mxu0
        %v5213 = vadd.f32 0.0, %v5212
        %5214 = vmatmul.f32.gmra.mxu0 %v5100
        %v5215 = vpop.f32.mrf.mxu0
        %v5216 = vadd.f32 0.0, %v5215
        %5217 = vmatmul.f32.gmra.mxu0 %v5103
        %v5218 = vpop.f32.mrf.mxu0
        %v5219 = vadd.f32 0.0, %v5218
        %5220 = vmatmul.f32.gmra.mxu0 %v5106
        %v5221 = vpop.f32.mrf.mxu0
        %v5222 = vadd.f32 0.0, %v5221
        %5223 = vmatmul.f32.gmra.mxu0 %v5109
        %v5224 = vpop.f32.mrf.mxu0
        %v5225 = vadd.f32 0.0, %v5224
        %5226 = vmatmul.f32.gmra.mxu0 %v5112
        %v5227 = vpop.f32.mrf.mxu0
        %v5228 = vadd.f32 0.0, %v5227
        %5229 = vmatmul.f32.gmra.mxu0 %v5115
        %v5230 = vpop.f32.mrf.mxu0
        %v5231 = vadd.f32 0.0, %v5230
        %5232 = vmatmul.f32.gmra.mxu0 %v5118
        %v5233 = vpop.f32.mrf.mxu0
        %v5234 = vadd.f32 0.0, %v5233
        %5235 = vmatmul.f32.gmra.mxu0 %v5121
        %v5236 = vpop.f32.mrf.mxu0
        %v5237 = vadd.f32 0.0, %v5236
        %5238 = vdwg.mxu0
        %v5239 = vadd.f32 %v4962, %v5144
        %v5240 = vadd.f32 %v4963, %v5147
        %v5241 = vadd.f32 %v4964, %v5150
        %v5242 = vadd.f32 %v4965, %v5153
        %v5243 = vadd.f32 %v4966, %v5156
        %v5244 = vadd.f32 %v4967, %v5159
        %v5245 = vadd.f32 %v4968, %v5162
        %v5246 = vadd.f32 %v4969, %v5165
        %v5247 = vadd.f32 %v4970, %v5168
        %v5248 = vadd.f32 %v4971, %v5171
        %v5249 = vadd.f32 %v4972, %v5174
        %v5250 = vadd.f32 %v4973, %v5177
        %v5251 = vadd.f32 %v4974, %v5180
        %v5252 = vadd.f32 %v4975, %v5183
        %v5253 = vadd.f32 %v4976, %v5186
        %v5254 = vadd.f32 %v4977, %v5189
        %v5255 = vadd.f32 %v4978, %v5192
        %v5256 = vadd.f32 %v4979, %v5195
        %v5257 = vadd.f32 %v4980, %v5198
        %v5258 = vadd.f32 %v4981, %v5201
        %v5259 = vadd.f32 %v4982, %v5204
        %v5260 = vadd.f32 %v4983, %v5207
        %v5261 = vadd.f32 %v4984, %v5210
        %v5262 = vadd.f32 %v4985, %v5213
        %v5263 = vadd.f32 %v4986, %v5216
        %v5264 = vadd.f32 %v4987, %v5219
        %v5265 = vadd.f32 %v4988, %v5222
        %v5266 = vadd.f32 %v4989, %v5225
        %v5267 = vadd.f32 %v4990, %v5228
        %v5268 = vadd.f32 %v4991, %v5231
        %v5269 = vadd.f32 %v4992, %v5234
        %v5270 = vadd.f32 %v4993, %v5237
        %v5271 = vld [vmem:[%s4994 + $0x1] sm:$0xff]
        %v5272 = vld [vmem:[%s4994 + $0x9] sm:$0xff]
        %v5273 = vld [vmem:[%s4994 + $0x19] sm:$0xff]
        %v5274 = vld [vmem:[%s4994 + $0x21] sm:$0xff]
        %v5275 = vld [vmem:[%s4994 + $0x31] sm:$0xff]
        %v5276 = vld [vmem:[%s4994 + $0x39] sm:$0xff]
        %v5277 = vld [vmem:[%s4994 + $0x49] sm:$0xff]
        %v5278 = vld [vmem:[%s4994 + $0x51] sm:$0xff]
        %v5279 = vld [vmem:[%s4994 + $0x61] sm:$0xff]
        %v5280 = vld [vmem:[%s4994 + $0x69] sm:$0xff]
        %v5281 = vld [vmem:[%s4994 + $0x79] sm:$0xff]
        %v5282 = vld [vmem:[%s4994 + $0x81] sm:$0xff]
        %v5283 = vld [vmem:[%s4994 + $0x91] sm:$0xff]
        %v5284 = vld [vmem:[%s4994 + $0x99] sm:$0xff]
        %v5285 = vld [vmem:[%s4994 + $0xa9] sm:$0xff]
        %v5286 = vld [vmem:[%s4994 + $0xb1] sm:$0xff]
        %v5287 = vld [vmem:[%s4994 + $0xc1] sm:$0xff]
        %v5288 = vld [vmem:[%s4994 + $0xc9] sm:$0xff]
        %v5289 = vld [vmem:[%s4994 + $0xd9] sm:$0xff]
        %v5290 = vld [vmem:[%s4994 + $0xe1] sm:$0xff]
        %v5291 = vld [vmem:[%s4994 + $0xf1] sm:$0xff]
        %v5292 = vld [vmem:[%s4994 + $0xf9] sm:$0xff]
        %v5293 = vld [vmem:[%s4994 + $0x109] sm:$0xff]
        %v5294 = vld [vmem:[%s4994 + $0x111] sm:$0xff]
        %v5295 = vld [vmem:[%s4994 + $0x121] sm:$0xff]
        %v5296 = vld [vmem:[%s4994 + $0x129] sm:$0xff]
        %v5297 = vld [vmem:[%s4994 + $0x139] sm:$0xff]
        %v5298 = vld [vmem:[%s4994 + $0x141] sm:$0xff]
        %v5299 = vld [vmem:[%s4994 + $0x151] sm:$0xff]
        %v5300 = vld [vmem:[%s4994 + $0x159] sm:$0xff]
        %v5301 = vld [vmem:[%s4994 + $0x169] sm:$0xff]
        %v5302 = vld [vmem:[%s4994 + $0x171] sm:$0xff]
        %v5304 = vsel %vm749, %v5271, 0
        %v5307 = vsel %vm749, %v5272, 0
        %v5310 = vsel %vm749, %v5273, 0
        %v5313 = vsel %vm749, %v5274, 0
        %v5316 = vsel %vm749, %v5275, 0
        %v5319 = vsel %vm749, %v5276, 0
        %v5322 = vsel %vm749, %v5277, 0
        %v5325 = vsel %vm749, %v5278, 0
        %v5328 = vsel %vm749, %v5279, 0
        %v5331 = vsel %vm749, %v5280, 0
        %v5334 = vsel %vm749, %v5281, 0
        %v5337 = vsel %vm749, %v5282, 0
        %v5340 = vsel %vm749, %v5283, 0
        %v5343 = vsel %vm749, %v5284, 0
        %v5346 = vsel %vm749, %v5285, 0
        %v5349 = vsel %vm749, %v5286, 0
        %v5352 = vsel %vm749, %v5287, 0
        %v5355 = vsel %vm749, %v5288, 0
        %v5358 = vsel %vm749, %v5289, 0
        %v5361 = vsel %vm749, %v5290, 0
        %v5364 = vsel %vm749, %v5291, 0
        %v5367 = vsel %vm749, %v5292, 0
        %v5370 = vsel %vm749, %v5293, 0
        %v5373 = vsel %vm749, %v5294, 0
        %v5376 = vsel %vm749, %v5295, 0
        %v5379 = vsel %vm749, %v5296, 0
        %v5382 = vsel %vm749, %v5297, 0
        %v5385 = vsel %vm749, %v5298, 0
        %v5388 = vsel %vm749, %v5299, 0
        %v5391 = vsel %vm749, %v5300, 0
        %v5394 = vsel %vm749, %v5301, 0
        %v5397 = vsel %vm749, %v5302, 0
        %v5400 = vsel %vm985, %v822, 0
        %5402 = vmatpush.msra.mxu0 0.0
        %5403 = vmatpush.msra.mxu0 0.0
        %5404 = vmatpush.msra.mxu0 0.0
        %5405 = vmatpush.msra.mxu0 0.0
        %5406 = vmatpush.msra.mxu0 0.0
        %5407 = vmatpush.msra.mxu0 0.0
        %5408 = vmatpush.msra.mxu0 0.0
        %5409 = vmatpush.msra.mxu0 0.0
        %5410 = vmatpush.msra.mxu0 0.0
        %5411 = vmatpush.msra.mxu0 0.0
        %5412 = vmatpush.msra.mxu0 0.0
        %5413 = vmatpush.msra.mxu0 0.0
        %5414 = vmatpush.msra.mxu0 0.0
        %5415 = vmatpush.msra.mxu0 0.0
        %5416 = vmatpush.msra.mxu0 0.0
        %5417 = vmatpush.msra.mxu0 %v5400
        %5418 = vmatmul.f32.gmra.mxu0 %v5304
        %v5419 = vpop.f32.mrf.mxu0
        %v5420 = vadd.f32 0.0, %v5419
        %5421 = vmatmul.f32.gmra.mxu0 %v5307
        %v5422 = vpop.f32.mrf.mxu0
        %v5423 = vadd.f32 0.0, %v5422
        %5424 = vmatmul.f32.gmra.mxu0 %v5310
        %v5425 = vpop.f32.mrf.mxu0
        %v5426 = vadd.f32 0.0, %v5425
        %5427 = vmatmul.f32.gmra.mxu0 %v5313
        %v5428 = vpop.f32.mrf.mxu0
        %v5429 = vadd.f32 0.0, %v5428
        %5430 = vmatmul.f32.gmra.mxu0 %v5316
        %v5431 = vpop.f32.mrf.mxu0
        %v5432 = vadd.f32 0.0, %v5431
        %5433 = vmatmul.f32.gmra.mxu0 %v5319
        %v5434 = vpop.f32.mrf.mxu0
        %v5435 = vadd.f32 0.0, %v5434
        %5436 = vmatmul.f32.gmra.mxu0 %v5322
        %v5437 = vpop.f32.mrf.mxu0
        %v5438 = vadd.f32 0.0, %v5437
        %5439 = vmatmul.f32.gmra.mxu0 %v5325
        %v5440 = vpop.f32.mrf.mxu0
        %v5441 = vadd.f32 0.0, %v5440
        %5442 = vmatmul.f32.gmra.mxu0 %v5328
        %v5443 = vpop.f32.mrf.mxu0
        %v5444 = vadd.f32 0.0, %v5443
        %5445 = vmatmul.f32.gmra.mxu0 %v5331
        %v5446 = vpop.f32.mrf.mxu0
        %v5447 = vadd.f32 0.0, %v5446
        %5448 = vmatmul.f32.gmra.mxu0 %v5334
        %v5449 = vpop.f32.mrf.mxu0
        %v5450 = vadd.f32 0.0, %v5449
        %5451 = vmatmul.f32.gmra.mxu0 %v5337
        %v5452 = vpop.f32.mrf.mxu0
        %v5453 = vadd.f32 0.0, %v5452
        %5454 = vmatmul.f32.gmra.mxu0 %v5340
        %v5455 = vpop.f32.mrf.mxu0
        %v5456 = vadd.f32 0.0, %v5455
        %5457 = vmatmul.f32.gmra.mxu0 %v5343
        %v5458 = vpop.f32.mrf.mxu0
        %v5459 = vadd.f32 0.0, %v5458
        %5460 = vmatmul.f32.gmra.mxu0 %v5346
        %v5461 = vpop.f32.mrf.mxu0
        %v5462 = vadd.f32 0.0, %v5461
        %5463 = vmatmul.f32.gmra.mxu0 %v5349
        %v5464 = vpop.f32.mrf.mxu0
        %v5465 = vadd.f32 0.0, %v5464
        %5466 = vmatmul.f32.gmra.mxu0 %v5352
        %v5467 = vpop.f32.mrf.mxu0
        %v5468 = vadd.f32 0.0, %v5467
        %5469 = vmatmul.f32.gmra.mxu0 %v5355
        %v5470 = vpop.f32.mrf.mxu0
        %v5471 = vadd.f32 0.0, %v5470
        %5472 = vmatmul.f32.gmra.mxu0 %v5358
        %v5473 = vpop.f32.mrf.mxu0
        %v5474 = vadd.f32 0.0, %v5473
        %5475 = vmatmul.f32.gmra.mxu0 %v5361
        %v5476 = vpop.f32.mrf.mxu0
        %v5477 = vadd.f32 0.0, %v5476
        %5478 = vmatmul.f32.gmra.mxu0 %v5364
        %v5479 = vpop.f32.mrf.mxu0
        %v5480 = vadd.f32 0.0, %v5479
        %5481 = vmatmul.f32.gmra.mxu0 %v5367
        %v5482 = vpop.f32.mrf.mxu0
        %v5483 = vadd.f32 0.0, %v5482
        %5484 = vmatmul.f32.gmra.mxu0 %v5370
        %v5485 = vpop.f32.mrf.mxu0
        %v5486 = vadd.f32 0.0, %v5485
        %5487 = vmatmul.f32.gmra.mxu0 %v5373
        %v5488 = vpop.f32.mrf.mxu0
        %v5489 = vadd.f32 0.0, %v5488
        %5490 = vmatmul.f32.gmra.mxu0 %v5376
        %v5491 = vpop.f32.mrf.mxu0
        %v5492 = vadd.f32 0.0, %v5491
        %5493 = vmatmul.f32.gmra.mxu0 %v5379
        %v5494 = vpop.f32.mrf.mxu0
        %v5495 = vadd.f32 0.0, %v5494
        %5496 = vmatmul.f32.gmra.mxu0 %v5382
        %v5497 = vpop.f32.mrf.mxu0
        %v5498 = vadd.f32 0.0, %v5497
        %5499 = vmatmul.f32.gmra.mxu0 %v5385
        %v5500 = vpop.f32.mrf.mxu0
        %v5501 = vadd.f32 0.0, %v5500
        %5502 = vmatmul.f32.gmra.mxu0 %v5388
        %v5503 = vpop.f32.mrf.mxu0
        %v5504 = vadd.f32 0.0, %v5503
        %5505 = vmatmul.f32.gmra.mxu0 %v5391
        %v5506 = vpop.f32.mrf.mxu0
        %v5507 = vadd.f32 0.0, %v5506
        %5508 = vmatmul.f32.gmra.mxu0 %v5394
        %v5509 = vpop.f32.mrf.mxu0
        %v5510 = vadd.f32 0.0, %v5509
        %5511 = vmatmul.f32.gmra.mxu0 %v5397
        %v5512 = vpop.f32.mrf.mxu0
        %v5513 = vadd.f32 0.0, %v5512
        %5514 = vdwg.mxu0
        %v5515 = vadd.f32 %v5239, %v5420
        %v5516 = vadd.f32 %v5240, %v5423
        %v5517 = vadd.f32 %v5241, %v5426
        %v5518 = vadd.f32 %v5242, %v5429
        %v5519 = vadd.f32 %v5243, %v5432
        %v5520 = vadd.f32 %v5244, %v5435
        %v5521 = vadd.f32 %v5245, %v5438
        %v5522 = vadd.f32 %v5246, %v5441
        %v5523 = vadd.f32 %v5247, %v5444
        %v5524 = vadd.f32 %v5248, %v5447
        %v5525 = vadd.f32 %v5249, %v5450
        %v5526 = vadd.f32 %v5250, %v5453
        %v5527 = vadd.f32 %v5251, %v5456
        %v5528 = vadd.f32 %v5252, %v5459
        %v5529 = vadd.f32 %v5253, %v5462
        %v5530 = vadd.f32 %v5254, %v5465
        %v5531 = vadd.f32 %v5255, %v5468
        %v5532 = vadd.f32 %v5256, %v5471
        %v5533 = vadd.f32 %v5257, %v5474
        %v5534 = vadd.f32 %v5258, %v5477
        %v5535 = vadd.f32 %v5259, %v5480
        %v5536 = vadd.f32 %v5260, %v5483
        %v5537 = vadd.f32 %v5261, %v5486
        %v5538 = vadd.f32 %v5262, %v5489
        %v5539 = vadd.f32 %v5263, %v5492
        %v5540 = vadd.f32 %v5264, %v5495
        %v5541 = vadd.f32 %v5265, %v5498
        %v5542 = vadd.f32 %v5266, %v5501
        %v5543 = vadd.f32 %v5267, %v5504
        %v5544 = vadd.f32 %v5268, %v5507
        %v5545 = vadd.f32 %v5269, %v5510
        %v5546 = vadd.f32 %v5270, %v5513
        %v5547 = vld [vmem:[%s4994 + $0x2] sm:$0xff]
        %v5548 = vld [vmem:[%s4994 + $0xa] sm:$0xff]
        %v5549 = vld [vmem:[%s4994 + $0x1a] sm:$0xff]
        %v5550 = vld [vmem:[%s4994 + $0x22] sm:$0xff]
        %v5551 = vld [vmem:[%s4994 + $0x32] sm:$0xff]
        %v5552 = vld [vmem:[%s4994 + $0x3a] sm:$0xff]
        %v5553 = vld [vmem:[%s4994 + $0x4a] sm:$0xff]
        %v5554 = vld [vmem:[%s4994 + $0x52] sm:$0xff]
        %v5555 = vld [vmem:[%s4994 + $0x62] sm:$0xff]
        %v5556 = vld [vmem:[%s4994 + $0x6a] sm:$0xff]
        %v5557 = vld [vmem:[%s4994 + $0x7a] sm:$0xff]
        %v5558 = vld [vmem:[%s4994 + $0x82] sm:$0xff]
        %v5559 = vld [vmem:[%s4994 + $0x92] sm:$0xff]
        %v5560 = vld [vmem:[%s4994 + $0x9a] sm:$0xff]
        %v5561 = vld [vmem:[%s4994 + $0xaa] sm:$0xff]
        %v5562 = vld [vmem:[%s4994 + $0xb2] sm:$0xff]
        %v5563 = vld [vmem:[%s4994 + $0xc2] sm:$0xff]
        %v5564 = vld [vmem:[%s4994 + $0xca] sm:$0xff]
        %v5565 = vld [vmem:[%s4994 + $0xda] sm:$0xff]
        %v5566 = vld [vmem:[%s4994 + $0xe2] sm:$0xff]
        %v5567 = vld [vmem:[%s4994 + $0xf2] sm:$0xff]
        %v5568 = vld [vmem:[%s4994 + $0xfa] sm:$0xff]
        %v5569 = vld [vmem:[%s4994 + $0x10a] sm:$0xff]
        %v5570 = vld [vmem:[%s4994 + $0x112] sm:$0xff]
        %v5571 = vld [vmem:[%s4994 + $0x122] sm:$0xff]
        %v5572 = vld [vmem:[%s4994 + $0x12a] sm:$0xff]
        %v5573 = vld [vmem:[%s4994 + $0x13a] sm:$0xff]
        %v5574 = vld [vmem:[%s4994 + $0x142] sm:$0xff]
        %v5575 = vld [vmem:[%s4994 + $0x152] sm:$0xff]
        %v5576 = vld [vmem:[%s4994 + $0x15a] sm:$0xff]
        %v5577 = vld [vmem:[%s4994 + $0x16a] sm:$0xff]
        %v5578 = vld [vmem:[%s4994 + $0x172] sm:$0xff]
        %v5580 = vsel %vm749, %v5547, 0
        %v5583 = vsel %vm749, %v5548, 0
        %v5586 = vsel %vm749, %v5549, 0
        %v5589 = vsel %vm749, %v5550, 0
        %v5592 = vsel %vm749, %v5551, 0
        %v5595 = vsel %vm749, %v5552, 0
        %v5598 = vsel %vm749, %v5553, 0
        %v5601 = vsel %vm749, %v5554, 0
        %v5604 = vsel %vm749, %v5555, 0
        %v5607 = vsel %vm749, %v5556, 0
        %v5610 = vsel %vm749, %v5557, 0
        %v5613 = vsel %vm749, %v5558, 0
        %v5616 = vsel %vm749, %v5559, 0
        %v5619 = vsel %vm749, %v5560, 0
        %v5622 = vsel %vm749, %v5561, 0
        %v5625 = vsel %vm749, %v5562, 0
        %v5628 = vsel %vm749, %v5563, 0
        %v5631 = vsel %vm749, %v5564, 0
        %v5634 = vsel %vm749, %v5565, 0
        %v5637 = vsel %vm749, %v5566, 0
        %v5640 = vsel %vm749, %v5567, 0
        %v5643 = vsel %vm749, %v5568, 0
        %v5646 = vsel %vm749, %v5569, 0
        %v5649 = vsel %vm749, %v5570, 0
        %v5652 = vsel %vm749, %v5571, 0
        %v5655 = vsel %vm749, %v5572, 0
        %v5658 = vsel %vm749, %v5573, 0
        %v5661 = vsel %vm749, %v5574, 0
        %v5664 = vsel %vm749, %v5575, 0
        %v5667 = vsel %vm749, %v5576, 0
        %v5670 = vsel %vm749, %v5577, 0
        %v5673 = vsel %vm749, %v5578, 0
        %v5676 = vsel %vm985, %v823, 0
        %5678 = vmatpush.msra.mxu0 0.0
        %5679 = vmatpush.msra.mxu0 0.0
        %5680 = vmatpush.msra.mxu0 0.0
        %5681 = vmatpush.msra.mxu0 0.0
        %5682 = vmatpush.msra.mxu0 0.0
        %5683 = vmatpush.msra.mxu0 0.0
        %5684 = vmatpush.msra.mxu0 0.0
        %5685 = vmatpush.msra.mxu0 0.0
        %5686 = vmatpush.msra.mxu0 0.0
        %5687 = vmatpush.msra.mxu0 0.0
        %5688 = vmatpush.msra.mxu0 0.0
        %5689 = vmatpush.msra.mxu0 0.0
        %5690 = vmatpush.msra.mxu0 0.0
        %5691 = vmatpush.msra.mxu0 0.0
        %5692 = vmatpush.msra.mxu0 0.0
        %5693 = vmatpush.msra.mxu0 %v5676
        %5694 = vmatmul.f32.gmra.mxu0 %v5580
        %v5695 = vpop.f32.mrf.mxu0
        %v5696 = vadd.f32 0.0, %v5695
        %5697 = vmatmul.f32.gmra.mxu0 %v5583
        %v5698 = vpop.f32.mrf.mxu0
        %v5699 = vadd.f32 0.0, %v5698
        %5700 = vmatmul.f32.gmra.mxu0 %v5586
        %v5701 = vpop.f32.mrf.mxu0
        %v5702 = vadd.f32 0.0, %v5701
        %5703 = vmatmul.f32.gmra.mxu0 %v5589
        %v5704 = vpop.f32.mrf.mxu0
        %v5705 = vadd.f32 0.0, %v5704
        %5706 = vmatmul.f32.gmra.mxu0 %v5592
        %v5707 = vpop.f32.mrf.mxu0
        %v5708 = vadd.f32 0.0, %v5707
        %5709 = vmatmul.f32.gmra.mxu0 %v5595
        %v5710 = vpop.f32.mrf.mxu0
        %v5711 = vadd.f32 0.0, %v5710
        %5712 = vmatmul.f32.gmra.mxu0 %v5598
        %v5713 = vpop.f32.mrf.mxu0
        %v5714 = vadd.f32 0.0, %v5713
        %5715 = vmatmul.f32.gmra.mxu0 %v5601
        %v5716 = vpop.f32.mrf.mxu0
        %v5717 = vadd.f32 0.0, %v5716
        %5718 = vmatmul.f32.gmra.mxu0 %v5604
        %v5719 = vpop.f32.mrf.mxu0
        %v5720 = vadd.f32 0.0, %v5719
        %5721 = vmatmul.f32.gmra.mxu0 %v5607
        %v5722 = vpop.f32.mrf.mxu0
        %v5723 = vadd.f32 0.0, %v5722
        %5724 = vmatmul.f32.gmra.mxu0 %v5610
        %v5725 = vpop.f32.mrf.mxu0
        %v5726 = vadd.f32 0.0, %v5725
        %5727 = vmatmul.f32.gmra.mxu0 %v5613
        %v5728 = vpop.f32.mrf.mxu0
        %v5729 = vadd.f32 0.0, %v5728
        %5730 = vmatmul.f32.gmra.mxu0 %v5616
        %v5731 = vpop.f32.mrf.mxu0
        %v5732 = vadd.f32 0.0, %v5731
        %5733 = vmatmul.f32.gmra.mxu0 %v5619
        %v5734 = vpop.f32.mrf.mxu0
        %v5735 = vadd.f32 0.0, %v5734
        %5736 = vmatmul.f32.gmra.mxu0 %v5622
        %v5737 = vpop.f32.mrf.mxu0
        %v5738 = vadd.f32 0.0, %v5737
        %5739 = vmatmul.f32.gmra.mxu0 %v5625
        %v5740 = vpop.f32.mrf.mxu0
        %v5741 = vadd.f32 0.0, %v5740
        %5742 = vmatmul.f32.gmra.mxu0 %v5628
        %v5743 = vpop.f32.mrf.mxu0
        %v5744 = vadd.f32 0.0, %v5743
        %5745 = vmatmul.f32.gmra.mxu0 %v5631
        %v5746 = vpop.f32.mrf.mxu0
        %v5747 = vadd.f32 0.0, %v5746
        %5748 = vmatmul.f32.gmra.mxu0 %v5634
        %v5749 = vpop.f32.mrf.mxu0
        %v5750 = vadd.f32 0.0, %v5749
        %5751 = vmatmul.f32.gmra.mxu0 %v5637
        %v5752 = vpop.f32.mrf.mxu0
        %v5753 = vadd.f32 0.0, %v5752
        %5754 = vmatmul.f32.gmra.mxu0 %v5640
        %v5755 = vpop.f32.mrf.mxu0
        %v5756 = vadd.f32 0.0, %v5755
        %5757 = vmatmul.f32.gmra.mxu0 %v5643
        %v5758 = vpop.f32.mrf.mxu0
        %v5759 = vadd.f32 0.0, %v5758
        %5760 = vmatmul.f32.gmra.mxu0 %v5646
        %v5761 = vpop.f32.mrf.mxu0
        %v5762 = vadd.f32 0.0, %v5761
        %5763 = vmatmul.f32.gmra.mxu0 %v5649
        %v5764 = vpop.f32.mrf.mxu0
        %v5765 = vadd.f32 0.0, %v5764
        %5766 = vmatmul.f32.gmra.mxu0 %v5652
        %v5767 = vpop.f32.mrf.mxu0
        %v5768 = vadd.f32 0.0, %v5767
        %5769 = vmatmul.f32.gmra.mxu0 %v5655
        %v5770 = vpop.f32.mrf.mxu0
        %v5771 = vadd.f32 0.0, %v5770
        %5772 = vmatmul.f32.gmra.mxu0 %v5658
        %v5773 = vpop.f32.mrf.mxu0
        %v5774 = vadd.f32 0.0, %v5773
        %5775 = vmatmul.f32.gmra.mxu0 %v5661
        %v5776 = vpop.f32.mrf.mxu0
        %v5777 = vadd.f32 0.0, %v5776
        %5778 = vmatmul.f32.gmra.mxu0 %v5664
        %v5779 = vpop.f32.mrf.mxu0
        %v5780 = vadd.f32 0.0, %v5779
        %5781 = vmatmul.f32.gmra.mxu0 %v5667
        %v5782 = vpop.f32.mrf.mxu0
        %v5783 = vadd.f32 0.0, %v5782
        %5784 = vmatmul.f32.gmra.mxu0 %v5670
        %v5785 = vpop.f32.mrf.mxu0
        %v5786 = vadd.f32 0.0, %v5785
        %5787 = vmatmul.f32.gmra.mxu0 %v5673
        %v5788 = vpop.f32.mrf.mxu0
        %v5789 = vadd.f32 0.0, %v5788
        %5790 = vdwg.mxu0
        %v5791 = vadd.f32 %v5515, %v5696
        %v5792 = vadd.f32 %v5516, %v5699
        %v5793 = vadd.f32 %v5517, %v5702
        %v5794 = vadd.f32 %v5518, %v5705
        %v5795 = vadd.f32 %v5519, %v5708
        %v5796 = vadd.f32 %v5520, %v5711
        %v5797 = vadd.f32 %v5521, %v5714
        %v5798 = vadd.f32 %v5522, %v5717
        %v5799 = vadd.f32 %v5523, %v5720
        %v5800 = vadd.f32 %v5524, %v5723
        %v5801 = vadd.f32 %v5525, %v5726
        %v5802 = vadd.f32 %v5526, %v5729
        %v5803 = vadd.f32 %v5527, %v5732
        %v5804 = vadd.f32 %v5528, %v5735
        %v5805 = vadd.f32 %v5529, %v5738
        %v5806 = vadd.f32 %v5530, %v5741
        %v5807 = vadd.f32 %v5531, %v5744
        %v5808 = vadd.f32 %v5532, %v5747
        %v5809 = vadd.f32 %v5533, %v5750
        %v5810 = vadd.f32 %v5534, %v5753
        %v5811 = vadd.f32 %v5535, %v5756
        %v5812 = vadd.f32 %v5536, %v5759
        %v5813 = vadd.f32 %v5537, %v5762
        %v5814 = vadd.f32 %v5538, %v5765
        %v5815 = vadd.f32 %v5539, %v5768
        %v5816 = vadd.f32 %v5540, %v5771
        %v5817 = vadd.f32 %v5541, %v5774
        %v5818 = vadd.f32 %v5542, %v5777
        %v5819 = vadd.f32 %v5543, %v5780
        %v5820 = vadd.f32 %v5544, %v5783
        %v5821 = vadd.f32 %v5545, %v5786
        %v5822 = vadd.f32 %v5546, %v5789
        %v5824 = vperm.slane %v824, 0
        %v5826 = vadd.f32 %v5791, %v5824
        %v5827 = vadd.f32 %v5792, %v5824
        %v5828 = vadd.f32 %v5793, %v5824
        %v5829 = vadd.f32 %v5794, %v5824
        %v5830 = vadd.f32 %v5795, %v5824
        %v5831 = vadd.f32 %v5796, %v5824
        %v5832 = vadd.f32 %v5797, %v5824
        %v5833 = vadd.f32 %v5798, %v5824
        %v5834 = vadd.f32 %v5799, %v5824
        %v5835 = vadd.f32 %v5800, %v5824
        %v5836 = vadd.f32 %v5801, %v5824
        %v5837 = vadd.f32 %v5802, %v5824
        %v5838 = vadd.f32 %v5803, %v5824
        %v5839 = vadd.f32 %v5804, %v5824
        %v5840 = vadd.f32 %v5805, %v5824
        %v5841 = vadd.f32 %v5806, %v5824
        %v5842 = vadd.f32 %v5807, %v5824
        %v5843 = vadd.f32 %v5808, %v5824
        %v5844 = vadd.f32 %v5809, %v5824
        %v5845 = vadd.f32 %v5810, %v5824
        %v5846 = vadd.f32 %v5811, %v5824
        %v5847 = vadd.f32 %v5812, %v5824
        %v5848 = vadd.f32 %v5813, %v5824
        %v5849 = vadd.f32 %v5814, %v5824
        %v5850 = vadd.f32 %v5815, %v5824
        %v5851 = vadd.f32 %v5816, %v5824
        %v5852 = vadd.f32 %v5817, %v5824
        %v5853 = vadd.f32 %v5818, %v5824
        %v5854 = vadd.f32 %v5819, %v5824
        %v5855 = vadd.f32 %v5820, %v5824
        %v5856 = vadd.f32 %v5821, %v5824
        %v5857 = vadd.f32 %v5822, %v5824
        %v5858 = vld [vmem:[%s316] sm:$0xff]
        %v5859 = vld [vmem:[%s316 + $0x8] sm:$0xff]
        %v5860 = vld [vmem:[%s316 + $0x10] sm:$0xff]
        %v5861 = vld [vmem:[%s316 + $0x18] sm:$0xff]
        %v5862 = vld [vmem:[%s316 + $0x20] sm:$0xff]
        %v5863 = vld [vmem:[%s316 + $0x28] sm:$0xff]
        %v5864 = vld [vmem:[%s316 + $0x30] sm:$0xff]
        %v5865 = vld [vmem:[%s316 + $0x38] sm:$0xff]
        %v5866 = vld [vmem:[%s316 + $0x40] sm:$0xff]
        %v5867 = vld [vmem:[%s316 + $0x48] sm:$0xff]
        %v5868 = vld [vmem:[%s316 + $0x50] sm:$0xff]
        %v5869 = vld [vmem:[%s316 + $0x58] sm:$0xff]
        %v5870 = vld [vmem:[%s316 + $0x60] sm:$0xff]
        %v5871 = vld [vmem:[%s316 + $0x68] sm:$0xff]
        %v5872 = vld [vmem:[%s316 + $0x70] sm:$0xff]
        %v5873 = vld [vmem:[%s316 + $0x78] sm:$0xff]
        %v5874 = vld [vmem:[%s316 + $0x80] sm:$0xff]
        %v5875 = vld [vmem:[%s316 + $0x88] sm:$0xff]
        %v5876 = vld [vmem:[%s316 + $0x90] sm:$0xff]
        %v5877 = vld [vmem:[%s316 + $0x98] sm:$0xff]
        %v5878 = vld [vmem:[%s316 + $0xa0] sm:$0xff]
        %v5879 = vld [vmem:[%s316 + $0xa8] sm:$0xff]
        %v5880 = vld [vmem:[%s316 + $0xb0] sm:$0xff]
        %v5881 = vld [vmem:[%s316 + $0xb8] sm:$0xff]
        %v5882 = vld [vmem:[%s316 + $0xc0] sm:$0xff]
        %v5883 = vld [vmem:[%s316 + $0xc8] sm:$0xff]
        %v5884 = vld [vmem:[%s316 + $0xd0] sm:$0xff]
        %v5885 = vld [vmem:[%s316 + $0xd8] sm:$0xff]
        %v5886 = vld [vmem:[%s316 + $0xe0] sm:$0xff]
        %v5887 = vld [vmem:[%s316 + $0xe8] sm:$0xff]
        %v5888 = vld [vmem:[%s316 + $0xf0] sm:$0xff]
        %v5889 = vld [vmem:[%s316 + $0xf8] sm:$0xff]
        %v5890 = vsub.f32 %v5826, %v5858
        %v5891 = vsub.f32 %v5827, %v5859
        %v5892 = vsub.f32 %v5828, %v5860
        %v5893 = vsub.f32 %v5829, %v5861
        %v5894 = vsub.f32 %v5830, %v5862
        %v5895 = vsub.f32 %v5831, %v5863
        %v5896 = vsub.f32 %v5832, %v5864
        %v5897 = vsub.f32 %v5833, %v5865
        %v5898 = vsub.f32 %v5834, %v5866
        %v5899 = vsub.f32 %v5835, %v5867
        %v5900 = vsub.f32 %v5836, %v5868
        %v5901 = vsub.f32 %v5837, %v5869
        %v5902 = vsub.f32 %v5838, %v5870
        %v5903 = vsub.f32 %v5839, %v5871
        %v5904 = vsub.f32 %v5840, %v5872
        %v5905 = vsub.f32 %v5841, %v5873
        %v5906 = vsub.f32 %v5842, %v5874
        %v5907 = vsub.f32 %v5843, %v5875
        %v5908 = vsub.f32 %v5844, %v5876
        %v5909 = vsub.f32 %v5845, %v5877
        %v5910 = vsub.f32 %v5846, %v5878
        %v5911 = vsub.f32 %v5847, %v5879
        %v5912 = vsub.f32 %v5848, %v5880
        %v5913 = vsub.f32 %v5849, %v5881
        %v5914 = vsub.f32 %v5850, %v5882
        %v5915 = vsub.f32 %v5851, %v5883
        %v5916 = vsub.f32 %v5852, %v5884
        %v5917 = vsub.f32 %v5853, %v5885
        %v5918 = vsub.f32 %v5854, %v5886
        %v5919 = vsub.f32 %v5855, %v5887
        %v5920 = vsub.f32 %v5856, %v5888
        %v5921 = vsub.f32 %v5857, %v5889
        %v5922 = vmul.f32 %v5890, %v5890
        %v5923 = vmul.f32 %v5891, %v5891
        %v5924 = vmul.f32 %v5892, %v5892
        %v5925 = vmul.f32 %v5893, %v5893
        %v5926 = vmul.f32 %v5894, %v5894
        %v5927 = vmul.f32 %v5895, %v5895
        %v5928 = vmul.f32 %v5896, %v5896
        %v5929 = vmul.f32 %v5897, %v5897
        %v5930 = vmul.f32 %v5898, %v5898
        %v5931 = vmul.f32 %v5899, %v5899
        %v5932 = vmul.f32 %v5900, %v5900
        %v5933 = vmul.f32 %v5901, %v5901
        %v5934 = vmul.f32 %v5902, %v5902
        %v5935 = vmul.f32 %v5903, %v5903
        %v5936 = vmul.f32 %v5904, %v5904
        %v5937 = vmul.f32 %v5905, %v5905
        %v5938 = vmul.f32 %v5906, %v5906
        %v5939 = vmul.f32 %v5907, %v5907
        %v5940 = vmul.f32 %v5908, %v5908
        %v5941 = vmul.f32 %v5909, %v5909
        %v5942 = vmul.f32 %v5910, %v5910
        %v5943 = vmul.f32 %v5911, %v5911
        %v5944 = vmul.f32 %v5912, %v5912
        %v5945 = vmul.f32 %v5913, %v5913
        %v5946 = vmul.f32 %v5914, %v5914
        %v5947 = vmul.f32 %v5915, %v5915
        %v5948 = vmul.f32 %v5916, %v5916
        %v5949 = vmul.f32 %v5917, %v5917
        %v5950 = vmul.f32 %v5918, %v5918
        %v5951 = vmul.f32 %v5919, %v5919
        %v5952 = vmul.f32 %v5920, %v5920
        %v5953 = vmul.f32 %v5921, %v5921
        %v5954 = vsel %vm749, %v5922, 0.0
        %v5955 = vsel %vm749, %v5923, 0.0
        %v5956 = vadd.f32 %v5954, %v5955
        %v5957 = vsel %vm749, %v5924, 0.0
        %v5958 = vadd.f32 %v5956, %v5957
        %v5959 = vsel %vm749, %v5925, 0.0
        %v5960 = vadd.f32 %v5958, %v5959
        %v5961 = vsel %vm749, %v5926, 0.0
        %v5962 = vadd.f32 %v5960, %v5961
        %v5963 = vsel %vm749, %v5927, 0.0
        %v5964 = vadd.f32 %v5962, %v5963
        %v5965 = vsel %vm749, %v5928, 0.0
        %v5966 = vadd.f32 %v5964, %v5965
        %v5967 = vsel %vm749, %v5929, 0.0
        %v5968 = vadd.f32 %v5966, %v5967
        %v5969 = vsel %vm749, %v5930, 0.0
        %v5970 = vadd.f32 %v5968, %v5969
        %v5971 = vsel %vm749, %v5931, 0.0
        %v5972 = vadd.f32 %v5970, %v5971
        %v5973 = vsel %vm749, %v5932, 0.0
        %v5974 = vadd.f32 %v5972, %v5973
        %v5975 = vsel %vm749, %v5933, 0.0
        %v5976 = vadd.f32 %v5974, %v5975
        %v5977 = vsel %vm749, %v5934, 0.0
        %v5978 = vadd.f32 %v5976, %v5977
        %v5979 = vsel %vm749, %v5935, 0.0
        %v5980 = vadd.f32 %v5978, %v5979
        %v5981 = vsel %vm749, %v5936, 0.0
        %v5982 = vadd.f32 %v5980, %v5981
        %v5983 = vsel %vm749, %v5937, 0.0
        %v5984 = vadd.f32 %v5982, %v5983
        %v5985 = vsel %vm749, %v5938, 0.0
        %v5986 = vadd.f32 %v5984, %v5985
        %v5987 = vsel %vm749, %v5939, 0.0
        %v5988 = vadd.f32 %v5986, %v5987
        %v5989 = vsel %vm749, %v5940, 0.0
        %v5990 = vadd.f32 %v5988, %v5989
        %v5991 = vsel %vm749, %v5941, 0.0
        %v5992 = vadd.f32 %v5990, %v5991
        %v5993 = vsel %vm749, %v5942, 0.0
        %v5994 = vadd.f32 %v5992, %v5993
        %v5995 = vsel %vm749, %v5943, 0.0
        %v5996 = vadd.f32 %v5994, %v5995
        %v5997 = vsel %vm749, %v5944, 0.0
        %v5998 = vadd.f32 %v5996, %v5997
        %v5999 = vsel %vm749, %v5945, 0.0
        %v6000 = vadd.f32 %v5998, %v5999
        %v6001 = vsel %vm749, %v5946, 0.0
        %v6002 = vadd.f32 %v6000, %v6001
        %v6003 = vsel %vm749, %v5947, 0.0
        %v6004 = vadd.f32 %v6002, %v6003
        %v6005 = vsel %vm749, %v5948, 0.0
        %v6006 = vadd.f32 %v6004, %v6005
        %v6007 = vsel %vm749, %v5949, 0.0
        %v6008 = vadd.f32 %v6006, %v6007
        %v6009 = vsel %vm749, %v5950, 0.0
        %v6010 = vadd.f32 %v6008, %v6009
        %v6011 = vsel %vm749, %v5951, 0.0
        %v6012 = vadd.f32 %v6010, %v6011
        %v6013 = vsel %vm749, %v5952, 0.0
        %v6014 = vadd.f32 %v6012, %v6013
        %v6015 = vsel %vm749, %v5953, 0.0
        %v6016 = vadd.f32 %v6014, %v6015
        %6017 = vadd.xlane.f32.xlu0 %v6016
        %v6018 = vpop.xlane.xlu0 %6017
        %v6019 = vrot.slane %v6018, 4
        %v6020 = vadd.f32 %v6018, %v6019
        %v6021 = vrot.slane %v6020, 2
        %v6022 = vadd.f32 %v6020, %v6021
        %v6023 = vrot.slane %v6022, 1
        %v6024 = vadd.f32 %v6022, %v6023
        %s6025 = vtos %v6024
        %v6026 = vstv %s6025
        %6027 = vst [vmem:[%s301] sm:$0xff] %v6026
        %s6028 = sand.u32 %s191, 1
        %s6029 = scalar_lea.sflag [#allocation5], %s6028
        %s6030 = sand.u32 %s191, 1
        %s6031 = smul.addr %s6030, 8
        %s6032 = scalar_lea.vmem [#allocation4], %s6031
        // Predicated region
        $region49: #{tpu_custom_call.1} parent=47 // pred_check
          %p6033 = pneg %p201
        $region50: #{tpu_custom_call.1} parent=47 // pred_check_branch
          %6035 = sbr.rel (%p6033) target = $region52
        $region51: #{tpu_custom_call.1} parent=47 // pred_region
          %6037 = vsyncadd %s6029, 0
          %s6038 = smul.addr %s21, 8
          %s6039 = scalar_lea.hbm %s7, %s6038
          %s6041 = sshll.u32 %s6032, 4
          %s6042 = int_to_ptr.vmem [resolvable:$true] %s6041
          %s6043 = sshll.u32 %s6039, 4
          %s6044 = int_to_ptr.hbm [resolvable:$true] %s6043
          %6046 = dma.vmem_to_hbm [thread:$0]  %s6042, 128, %s6044, %s6029
        $region52: #{tpu_custom_call.1} parent=47 // pred_fallthru
          _
      $region48: #{tpu_custom_call.1} parent=5 // pred_fallthru
        _
      %p6047 = scmp.le.s32.totalorder 2, %s16
      // Predicated region
      $region53: #{tpu_custom_call.1} parent=5 // pred_check
        %p6048 = pneg %p6047
      $region54: #{tpu_custom_call.1} parent=5 // pred_check_branch
        %6050 = sbr.rel (%p6048) target = $region56
      $region55: #{tpu_custom_call.1} parent=5 // pred_region
        %s6051 = ssub.s32 %s16, 2
        // Predicated region
        $region57: #{tpu_custom_call.1} parent=55 // pred_check
          %p6052 = pneg %p207
        $region58: #{tpu_custom_call.1} parent=55 // pred_check_branch
          %6054 = sbr.rel (%p6052) target = $region60
        $region59: #{tpu_custom_call.1} parent=55 // pred_region
          %s6055 = sand.u32 %s192, 1
          %s6056 = scalar_lea.sflag [#allocation5], %s6055
          %s6057 = sand.u32 %s192, 1
          %s6058 = smul.addr %s6057, 8
          %s6059 = scalar_lea.vmem [#allocation4], %s6058
          %6061 = dma.done %s6056, 128
        $region60: #{tpu_custom_call.1} parent=55 // pred_fallthru
          _
      $region56: #{tpu_custom_call.1} parent=5 // pred_fallthru
        _
    $region6: #{tpu_custom_call.1} parent=1 // loop_footer
      %s20 = sadd.s32 1, %s16
    $region7: #{tpu_custom_call.1} parent=1 // loop_footer_branch
      %15 = sbr.rel target = $region3
    $region8: #{tpu_custom_call.1} parent=1 // loop_exit
      _
    %6062 = vsyncpa [#allocation5], 1
    %s6063 = scalar_lea.sflag [#allocation5], 1
    %6064 = vsyncpa %s6063, 1

</llo_original>
